<compile_context>
chip_gen: v7x
topology: tpu7x:2x2x1
jax: 0.10.0
libtpu: 0.0.40
codegen_flags: <defaults>
</compile_context>

<pallas_src>
import functools
import math

import jax
import jax.numpy as jnp
from jax import lax
from jax.experimental import pallas as pl
from jax.experimental.pallas import tpu as pltpu

EPS = 1e-5  # RMSNorm epsilon (matches mamba reference)


def _softplus(x):
    # numerically safe softplus (matches torch.nn.functional.softplus default)
    return jnp.where(x > 20.0, x, jnp.log1p(jnp.exp(jnp.minimum(x, 20.0))))


def _silu(x):
    return x * jax.nn.sigmoid(x)


def _round_up(n, m):
    return ((n + m - 1) // m) * m


def _choose_block(n, target):
    """Largest multiple-of-8 block <= target that divides n (or n itself)."""
    if n <= target:
        return n
    b = (target // 8) * 8
    while b > 8 and n % b:
        b -= 8
    return b if (b > 0 and n % b == 0) else n


# --------------------------------------------------------------------------
# Per-layer kernel: residual block (RMSNorm + Mamba mixer + residual add)
# grid = (batch, num_L_blocks); scan state / previous-block conv input carried
# across L blocks in VMEM scratch (reset via pl.when at L-block 0).
# --------------------------------------------------------------------------
def _mamba_layer_kernel(x_ref, norm_w_ref, in_w_ref, conv_w_ref, conv_b_ref,
                        xproj_w_ref, dt_w_ref, dt_b_ref, a_neg_ref, d_ref,
                        out_w_ref,
                        o_ref,
                        prev_scr, state_scr, delta_scr, u_scr,
                        b_scr, c_scr, y_scr,
                        *, tl, d_inner, dtr, d_state, d_conv, scan_chunk):
    l_idx = pl.program_id(1)

    # ---- reset sequential carries at the first L-block of every batch row --
    @pl.when(l_idx == 0)
    def _():
        prev_scr[...] = jnp.zeros_like(prev_scr)
        state_scr[...] = jnp.zeros_like(state_scr)

    h = x_ref[0].astype(jnp.float32)                        # (tl, D) residual

    # ---- RMSNorm -----------------------------------------------------------
    ms = jnp.mean(h * h, axis=-1, keepdims=True)
    xn = (h * lax.rsqrt(ms + EPS) * norm_w_ref[0]).astype(jnp.bfloat16)

    # ---- fused in_proj (one MXU matmul, sliced into x / z halves) ----------
    xz = jnp.dot(xn, in_w_ref[...], preferred_element_type=jnp.float32)
    x_in = xz[:, :d_inner]                                  # (tl, d_inner) f32
    z = xz[:, d_inner:]                                     # (tl, d_inner) f32

    # ---- depthwise causal conv1d: XLU rolls + carry fix-up -----------------
    # prev_scr holds the full previous block's x_in; rows tl-j..tl-1 supply
    # the history needed for shift-j taps.
    prev_x = prev_scr[...]
    row = lax.broadcasted_iota(jnp.int32, (tl, 1), 0)
    conv = x_in * conv_w_ref[d_conv - 1] + conv_b_ref[0]
    for j in range(1, d_conv):                              # taps looking back j
        cur_r = pltpu.roll(x_in, shift=j, axis=0)
        prev_r = pltpu.roll(prev_x, shift=j, axis=0)
        shifted = jnp.where(row < j, prev_r, cur_r)
        conv = conv + shifted * conv_w_ref[d_conv - 1 - j]
    prev_scr[...] = x_in                                    # carry for next block
    u = _silu(conv)                                         # (tl, d_inner) f32

    # ---- fused x_proj: single MXU matmul producing [dt | B | C] ------------
    dbc = jnp.dot(u.astype(jnp.bfloat16), xproj_w_ref[...],
                  preferred_element_type=jnp.float32)

    # ---- dt_proj on the MXU + softplus -------------------------------------
    delta = _softplus(
        jnp.dot(dbc[:, :dtr].astype(jnp.bfloat16), dt_w_ref[...],
                preferred_element_type=jnp.float32) + dt_b_ref[0])

    # ---- stage scan operands in VMEM for chunked dynamic slicing -----------
    delta_scr[...] = delta
    u_scr[...] = u
    b_scr[...] = dbc[:, dtr:dtr + d_state]
    c_scr[...] = dbc[:, dtr + d_state:dtr + 2 * d_state]

    A_t = a_neg_ref[...]          # (d_state, d_inner) == (-exp(A_log)).T, f32

    # ---- selective scan: lane-major (d_inner on lanes, d_state on sublanes) -
    # TODO(synk): v6e/v7x could run the dA exp in bf16 (EUP) if it binds.
    def chunk_body(ci, state):
        off = pl.multiple_of(ci * scan_chunk, scan_chunk)
        d_c = delta_scr[pl.ds(off, scan_chunk), :]          # (c, d_inner)
        u_c = u_scr[pl.ds(off, scan_chunk), :]              # (c, d_inner)
        b_c = b_scr[pl.ds(off, scan_chunk), :]              # (c, d_state)
        c_c = c_scr[pl.ds(off, scan_chunk), :]              # (c, d_state)
        dA_c = jnp.exp(d_c[:, None, :] * A_t[None, :, :])   # (c, d_state, d_inner)
        dBu_c = (d_c * u_c)[:, None, :] * b_c[:, :, None]   # (c, d_state, d_inner)
        cb = c_c[:, :, None]                                # (c, d_state, 1)
        ys = []
        for t in range(scan_chunk):                         # sequential recurrence
            state = dA_c[t] * state + dBu_c[t]              # (d_state, d_inner)
            ys.append(jnp.sum(state * cb[t], axis=0, keepdims=True))
        y_scr[pl.ds(off, scan_chunk), :] = jnp.concatenate(ys, axis=0)
        return state

    state = lax.fori_loop(0, tl // scan_chunk, chunk_body, state_scr[...])
    state_scr[...] = state                                  # carry to next block

    # ---- skip term, gate, out_proj, residual -------------------------------
    y = y_scr[...] + d_ref[0] * u
    y = y * _silu(z)
    out = jnp.dot(y.astype(jnp.bfloat16), out_w_ref[...],
                  preferred_element_type=jnp.float32)
    o_ref[0] = h + out


def _apply_layer(x, p, *, d_inner, dtr, d_state, d_conv, seq_block, scan_chunk,
                 vmem_limit_bytes, single_buffer_weights=True):
    B, L, D = x.shape
    tl = seq_block
    nl = L // tl
    kernel = functools.partial(
        _mamba_layer_kernel, tl=tl, d_inner=d_inner, dtr=dtr,
        d_state=d_state, d_conv=d_conv, scan_chunk=scan_chunk)

    weights = (p['norm_w'], p['in_w'], p['conv_w'], p['conv_b'],
               p['xproj_w'], p['dt_w'], p['dt_b'], p['a_neg_t'], p['d'],
               p['out_w'])

    def build(single_buffer):
        def wspec(w):
            nd = w.ndim
            idx = lambda b, l, _nd=nd: (0,) * _nd
            if single_buffer:
                # constant-index weight blocks: single-buffer (halves weight VMEM)
                return pl.BlockSpec(w.shape, idx, pipeline_mode=pl.Buffered(1))
            return pl.BlockSpec(w.shape, idx)

        return pl.pallas_call(
            kernel,
            out_shape=jax.ShapeDtypeStruct((B, L, D), jnp.float32),
            grid=(B, nl),
            in_specs=[pl.BlockSpec((1, tl, D), lambda b, l: (b, l, 0))]
                     + [wspec(w) for w in weights],
            out_specs=pl.BlockSpec((1, tl, D), lambda b, l: (b, l, 0)),
            scratch_shapes=[
                pltpu.VMEM((tl, d_inner), jnp.float32),       # prev block x_in (conv)
                pltpu.VMEM((d_state, d_inner), jnp.float32),  # scan state carry
                pltpu.VMEM((tl, d_inner), jnp.float32),       # delta
                pltpu.VMEM((tl, d_inner), jnp.float32),       # u
                pltpu.VMEM((tl, d_state), jnp.float32),       # B
                pltpu.VMEM((tl, d_state), jnp.float32),       # C
                pltpu.VMEM((tl, d_inner), jnp.float32),       # y
            ],
            compiler_params=pltpu.CompilerParams(
                # L axis must stay 'arbitrary' (sequential): scan/conv carries.
                dimension_semantics=("parallel", "arbitrary"),
                vmem_limit_bytes=vmem_limit_bytes),
        )

    if single_buffer_weights:
        try:
            return build(True)(x, *weights)
        except Exception:
            # pl.Buffered(1) unsupported on this Pallas build -> default buffering
            pass
    return build(False)(x, *weights)


# --------------------------------------------------------------------------
# Final kernel: RMSNorm + lm_head matmul, tiled over (batch, L, vocab).
# RMSNorm result cached in VMEM at vocab-block 0 and reused for all blocks.
# --------------------------------------------------------------------------
def _head_kernel(x_ref, norm_w_ref, lm_w_ref, o_ref, xn_scr):
    @pl.when(pl.program_id(2) == 0)
    def _():
        h = x_ref[0].astype(jnp.float32)
        ms = jnp.mean(h * h, axis=-1, keepdims=True)
        xn_scr[...] = (h * lax.rsqrt(ms + EPS) * norm_w_ref[0]).astype(jnp.bfloat16)
    o_ref[0] = jnp.dot(xn_scr[...], lm_w_ref[...],
                       preferred_element_type=jnp.float32)


def _apply_head(x, norm_w, lm_w, *, seq_block, vocab_block=512,
                vmem_limit_bytes=64 * 1024 * 1024):
    B, L, D = x.shape
    V = lm_w.shape[1]
    tv = min(vocab_block, _round_up(V, 128))     # lane-dense vocab tile
    Vp = _round_up(V, tv)
    if Vp != V:
        lm_w = jnp.pad(lm_w, ((0, 0), (0, Vp - V)))
    tl = seq_block if (seq_block > 0 and L % seq_block == 0) else L
    out = pl.pallas_call(
        _head_kernel,
        out_shape=jax.ShapeDtypeStruct((B, L, Vp), jnp.float32),
        grid=(B, L // tl, Vp // tv),
        in_specs=[
            pl.BlockSpec((1, tl, D), lambda b, l, v: (b, l, 0)),
            pl.BlockSpec(norm_w.shape, lambda b, l, v: (0, 0)),
            pl.BlockSpec((D, tv), lambda b, l, v: (0, v)),
        ],
        out_specs=pl.BlockSpec((1, tl, tv), lambda b, l, v: (b, l, v)),
        scratch_shapes=[pltpu.VMEM((tl, D), jnp.bfloat16)],   # cached RMSNorm(x)
        compiler_params=pltpu.CompilerParams(
            # vocab axis 'arbitrary': the xn cache is written at v==0 only.
            dimension_semantics=("parallel", "parallel", "arbitrary"),
            vmem_limit_bytes=vmem_limit_bytes),
    )(x, norm_w, lm_w)
    return out if Vp == V else out[:, :, :V]


# --------------------------------------------------------------------------
# Full model forward
# --------------------------------------------------------------------------
def mamba_forward(input_ids, params, *, d_inner, dtr, d_state, d_conv,
                  num_last_tokens=0, seq_block=256, scan_chunk=8,
                  vocab_block=512, vmem_limit_mb=64):
    # TODO(synk): inference_params (incremental-decoding cache) not implemented;
    #             this is the full-sequence (prefill) forward only.
    # Note: raise vmem_limit_mb toward ~100 on v5e/v6e (128 MiB VMEM); keep
    #       <= 64 on v7x.
    x = jnp.take(params['embedding'], input_ids, axis=0)   # (B, L, D) glue gather
    B, L, D = x.shape
    tl = _choose_block(L, seq_block)
    sc = scan_chunk if (tl % scan_chunk == 0) else tl
    vb = vmem_limit_mb * 1024 * 1024
    for layer in params['layers']:
        x = _apply_layer(x, layer, d_inner=d_inner, dtr=dtr,
                         d_state=d_state, d_conv=d_conv,
                         seq_block=tl, scan_chunk=sc, vmem_limit_bytes=vb)
    if num_last_tokens > 0:
        x = x[:, -num_last_tokens:]
    return _apply_head(x, params['norm_f'], params['lm_w'],
                       seq_block=_choose_block(x.shape[1], seq_block),
                       vocab_block=vocab_block, vmem_limit_bytes=vb)


# --------------------------------------------------------------------------
# Deterministic parameter construction (matches the torch module's semantics;
# linear weights pre-transposed, in_proj / x_proj fused, dt_rank zero-padded,
# A pre-negated/exponentiated/transposed for the lane-major scan layout).
# --------------------------------------------------------------------------
def init_params(key, dim, n_layers, vocab_size, pad_vocab_size_multiple=1,
                d_state=16, d_conv=4, expand=2):
    if vocab_size % pad_vocab_size_multiple != 0:
        vocab_size += pad_vocab_size_multiple - vocab_size % pad_vocab_size_multiple
    d_inner = expand * dim
    dt_rank = math.ceil(dim / 16)
    dtr = ((dt_rank + 7) // 8) * 8               # zero-padded dt rank

    keys = jax.random.split(key, 2 + n_layers)

    def nrm(k, shape, scale=0.02, dtype=jnp.float32):
        return (scale * jax.random.normal(k, shape)).astype(dtype)

    a_log = jnp.log(jnp.broadcast_to(
        jnp.arange(1, d_state + 1, dtype=jnp.float32), (d_inner, d_state)))
    a_neg_t = (-jnp.exp(a_log)).T                # (d_state, d_inner), precomputed

    params = {
        'embedding': nrm(keys[0], (vocab_size, dim)),
        'lm_w': nrm(keys[1], (dim, vocab_size), dtype=jnp.bfloat16),  # lm_head.weight^T
        'norm_f': jnp.ones((1, dim), jnp.float32),
        'layers': [],
    }
    for i in range(n_layers):
        lk = jax.random.split(keys[2 + i], 10)
        # fused in_proj weight: [x half | z half], transposed
        in_w = jnp.concatenate([nrm(lk[0], (dim, d_inner)),
                                nrm(lk[1], (dim, d_inner))],
                               axis=1).astype(jnp.bfloat16)
        # fused x_proj weight: [dt (zero-padded to dtr) | B | C], transposed
        xdt = jnp.pad(nrm(lk[4], (d_inner, dt_rank)), ((0, 0), (0, dtr - dt_rank)))
        xB = nrm(lk[5], (d_inner, d_state))
        xC = nrm(lk[6], (d_inner, d_state))
        xproj = jnp.concatenate([xdt, xB, xC], axis=1).astype(jnp.bfloat16)
        dt_w = jnp.pad(nrm(lk[7], (dt_rank, d_inner), 0.5),
                       ((0, dtr - dt_rank), (0, 0))).astype(jnp.bfloat16)
        params['layers'].append({
            'norm_w': jnp.ones((1, dim), jnp.float32),
            'in_w': in_w,                                              # in_proj^T fused
            'conv_w': nrm(lk[2], (d_conv, d_inner), 0.2),              # depthwise taps
            'conv_b': nrm(lk[3], (1, d_inner), 0.1),
            'xproj_w': xproj,
            'dt_w': dt_w,
            'dt_b': nrm(lk[8], (1, d_inner), 0.1),
            'a_neg_t': a_neg_t,                                        # == -exp(A_log)^T
            'd': jnp.ones((1, d_inner), jnp.float32),
            'out_w': nrm(lk[9], (d_inner, dim), dtype=jnp.bfloat16),   # out_proj^T
        })
    return params, vocab_size, d_inner, dtr


if __name__ == "__main__":
    # Small deterministic configuration consistent with the module's __init__.
    dim, n_layers, vocab_size, pad_mult = 32, 2, 100, 8
    d_state, d_conv = 16, 4
    batch, seqlen = 2, 32          # seq_block=16 -> 2 L-blocks, 2 scan chunks each

    key = jax.random.PRNGKey(0)
    pkey, ikey = jax.random.split(key)
    params, v_pad, d_inner, dtr = init_params(
        pkey, dim, n_layers, vocab_size, pad_mult, d_state, d_conv)

    input_ids = jax.random.randint(ikey, (batch, seqlen), 0, vocab_size,
                                   dtype=jnp.int32)

    logits = mamba_forward(input_ids, params, d_inner=d_inner, dtr=dtr,
                           d_state=d_state, d_conv=d_conv,
                           seq_block=16, scan_chunk=8)
    logits = jax.block_until_ready(logits)

    assert logits.shape == (batch, seqlen, v_pad), logits.shape
    assert bool(jnp.all(jnp.isfinite(logits)))
    print("KERNEL_OK")
</pallas_src>

<mosaic_0001>
module attributes {stable_mosaic.version = 11 : i64} {
  func.func @_mamba_layer_kernel(%arg0: i32, %arg1: i32, %arg2: memref<1x16x32xf32, #tpu.memory_space<vmem>>, %arg3: memref<1x32xf32, #tpu.memory_space<vmem>>, %arg4: memref<32x128xbf16, #tpu.memory_space<vmem>>, %arg5: memref<4x64xf32, #tpu.memory_space<vmem>>, %arg6: memref<1x64xf32, #tpu.memory_space<vmem>>, %arg7: memref<64x40xbf16, #tpu.memory_space<vmem>>, %arg8: memref<8x64xbf16, #tpu.memory_space<vmem>>, %arg9: memref<1x64xf32, #tpu.memory_space<vmem>>, %arg10: memref<16x64xf32, #tpu.memory_space<vmem>>, %arg11: memref<1x64xf32, #tpu.memory_space<vmem>>, %arg12: memref<64x32xbf16, #tpu.memory_space<vmem>>, %arg13: memref<1x16x32xf32, #tpu.memory_space<vmem>>, %arg14: memref<16x64xf32, #tpu.memory_space<vmem>>, %arg15: memref<16x64xf32, #tpu.memory_space<vmem>>, %arg16: memref<16x64xf32, #tpu.memory_space<vmem>>, %arg17: memref<16x64xf32, #tpu.memory_space<vmem>>, %arg18: memref<16x16xf32, #tpu.memory_space<vmem>>, %arg19: memref<16x16xf32, #tpu.memory_space<vmem>>, %arg20: memref<16x64xf32, #tpu.memory_space<vmem>>) attributes {dimension_semantics = [#tpu.dimension_semantics<parallel>, #tpu.dimension_semantics<arbitrary>], iteration_bounds = array<i64: 2, 2>, scalar_prefetch = 0 : i64, scratch_operands = 7 : i64, tpu.core_type = #tpu.core_type<tc>, window_params = [{transform_indices = @transform_0, window_bounds = array<i64: 1, 16, 32>}, {pipeline_mode = #tpu.pipeline_mode<synchronous>, transform_indices = @transform_1, window_bounds = array<i64: 1, 32>}, {pipeline_mode = #tpu.pipeline_mode<synchronous>, transform_indices = @transform_2, window_bounds = array<i64: 32, 128>}, {pipeline_mode = #tpu.pipeline_mode<synchronous>, transform_indices = @transform_3, window_bounds = array<i64: 4, 64>}, {pipeline_mode = #tpu.pipeline_mode<synchronous>, transform_indices = @transform_4, window_bounds = array<i64: 1, 64>}, {pipeline_mode = #tpu.pipeline_mode<synchronous>, transform_indices = @transform_5, window_bounds = array<i64: 64, 40>}, {pipeline_mode = #tpu.pipeline_mode<synchronous>, transform_indices = @transform_6, window_bounds = array<i64: 8, 64>}, {pipeline_mode = #tpu.pipeline_mode<synchronous>, transform_indices = @transform_7, window_bounds = array<i64: 1, 64>}, {pipeline_mode = #tpu.pipeline_mode<synchronous>, transform_indices = @transform_8, window_bounds = array<i64: 16, 64>}, {pipeline_mode = #tpu.pipeline_mode<synchronous>, transform_indices = @transform_9, window_bounds = array<i64: 1, 64>}, {pipeline_mode = #tpu.pipeline_mode<synchronous>, transform_indices = @transform_10, window_bounds = array<i64: 64, 32>}, {transform_indices = @transform_11, window_bounds = array<i64: 1, 16, 32>}]} {
    %c0_i32 = arith.constant 0 : i32
    %0 = arith.cmpi eq, %arg1, %c0_i32 : i32
    %1 = arith.extui %0 : i1 to i32
    %c0_i32_0 = arith.constant 0 : i32
    %2 = arith.cmpi ne, %1, %c0_i32_0 : i32
    scf.if %2 {
      %cst_67 = arith.constant 0.000000e+00 : f32
      %134 = vector.broadcast %cst_67 : f32 to vector<16x64xf32>
      %c0_68 = arith.constant 0 : index
      %c0_69 = arith.constant 0 : index
      %135 = vector.load %arg14[%c0_68, %c0_69] : memref<16x64xf32, #tpu.memory_space<vmem>>, vector<16x64xf32>
      tpu.vector_store %arg14[%c0_68, %c0_69], %134 {strides = array<i32>} : memref<16x64xf32, #tpu.memory_space<vmem>>, vector<16x64xf32>,
      %cst_70 = arith.constant 0.000000e+00 : f32
      %136 = vector.broadcast %cst_70 : f32 to vector<16x64xf32>
      %c0_71 = arith.constant 0 : index
      %c0_72 = arith.constant 0 : index
      %137 = vector.load %arg15[%c0_71, %c0_72] : memref<16x64xf32, #tpu.memory_space<vmem>>, vector<16x64xf32>
      tpu.vector_store %arg15[%c0_71, %c0_72], %136 {strides = array<i32>} : memref<16x64xf32, #tpu.memory_space<vmem>>, vector<16x64xf32>,
    } else {
    }
    %c0 = arith.constant 0 : index
    %c0_1 = arith.constant 0 : index
    %c0_2 = arith.constant 0 : index
    %3 = vector.load %arg2[%c0, %c0_1, %c0_2] : memref<1x16x32xf32, #tpu.memory_space<vmem>>, vector<1x16x32xf32>
    %4 = vector.shape_cast %3 : vector<1x16x32xf32> to vector<16x32xf32>
    %5 = arith.mulf %4, %4 : vector<16x32xf32>
    %cst = arith.constant dense<0.000000e+00> : vector<16xf32>
    %6 = vector.multi_reduction <add>, %5, %cst [1] : vector<16x32xf32> to vector<16xf32>
    %7 = vector.shape_cast %6 : vector<16xf32> to vector<16x1xf32>
    %cst_3 = arith.constant 3.200000e+01 : f32
    %8 = vector.broadcast %cst_3 : f32 to vector<16x1xf32>
    %9 = arith.divf %7, %8 : vector<16x1xf32>
    %cst_4 = arith.constant 9.99999974E-6 : f32
    %10 = vector.broadcast %cst_4 : f32 to vector<16x1xf32>
    %11 = arith.addf %9, %10 : vector<16x1xf32>
    %12 = math.rsqrt %11 : vector<16x1xf32>
    %13 = vector.broadcast %12 : vector<16x1xf32> to vector<16x32xf32>
    %14 = arith.mulf %4, %13 : vector<16x32xf32>
    %c0_5 = arith.constant 0 : index
    %c0_6 = arith.constant 0 : index
    %15 = vector.load %arg3[%c0_5, %c0_6] : memref<1x32xf32, #tpu.memory_space<vmem>>, vector<1x32xf32>
    %16 = vector.shape_cast %15 : vector<1x32xf32> to vector<32xf32>
    %17 = vector.shape_cast %16 : vector<32xf32> to vector<1x32xf32>
    %18 = vector.broadcast %17 : vector<1x32xf32> to vector<16x32xf32>
    %19 = arith.mulf %14, %18 : vector<16x32xf32>
    %20 = arith.truncf %19 : vector<16x32xf32> to vector<16x32xbf16>
    %c0_7 = arith.constant 0 : index
    %c0_8 = arith.constant 0 : index
    %21 = vector.load %arg4[%c0_7, %c0_8] : memref<32x128xbf16, #tpu.memory_space<vmem>>, vector<32x128xbf16>
    %cst_9 = arith.constant dense<0.000000e+00> : vector<16x128xf32>
    %22 = tpu.matmul %20, %21, %cst_9 {dimension_numbers = #tpu.dot_dimension_numbers<[1], [0], [0], [1], [0, 0, 1, 1], [], []>} : vector<16x32xbf16>, vector<32x128xbf16>, vector<16x128xf32> -> vector<16x128xf32>
    %23 = vector.extract_strided_slice %22 {offsets = [0, 0], sizes = [16, 64], strides = [1, 1]} : vector<16x128xf32> to vector<16x64xf32>
    %24 = vector.extract_strided_slice %22 {offsets = [0, 64], sizes = [16, 64], strides = [1, 1]} : vector<16x128xf32> to vector<16x64xf32>
    %c0_10 = arith.constant 0 : index
    %c0_11 = arith.constant 0 : index
    %25 = vector.load %arg14[%c0_10, %c0_11] : memref<16x64xf32, #tpu.memory_space<vmem>>, vector<16x64xf32>
    %26 = tpu.iota {dimensions = array<i32: 0>} : vector<16x1xi32>
    %c3 = arith.constant 3 : index
    %c0_12 = arith.constant 0 : index
    %27 = vector.load %arg5[%c3, %c0_12] : memref<4x64xf32, #tpu.memory_space<vmem>>, vector<1x64xf32>
    %28 = vector.shape_cast %27 : vector<1x64xf32> to vector<64xf32>
    %29 = vector.shape_cast %28 : vector<64xf32> to vector<1x64xf32>
    %30 = vector.broadcast %29 : vector<1x64xf32> to vector<16x64xf32>
    %31 = arith.mulf %23, %30 : vector<16x64xf32>
    %c0_13 = arith.constant 0 : index
    %c0_14 = arith.constant 0 : index
    %32 = vector.load %arg6[%c0_13, %c0_14] : memref<1x64xf32, #tpu.memory_space<vmem>>, vector<1x64xf32>
    %33 = vector.shape_cast %32 : vector<1x64xf32> to vector<64xf32>
    %34 = vector.shape_cast %33 : vector<64xf32> to vector<1x64xf32>
    %35 = vector.broadcast %34 : vector<1x64xf32> to vector<16x64xf32>
    %36 = arith.addf %31, %35 : vector<16x64xf32>
    %c1_i32 = arith.constant 1 : i32
    %37 = tpu.dynamic_rotate %23 by %c1_i32 dim 0 : vector<16x64xf32>, i32 -> vector<16x64xf32>
    %c1_i32_15 = arith.constant 1 : i32
    %38 = tpu.dynamic_rotate %25 by %c1_i32_15 dim 0 : vector<16x64xf32>, i32 -> vector<16x64xf32>
    %c1_i32_16 = arith.constant 1 : i32
    %39 = vector.broadcast %c1_i32_16 : i32 to vector<16x1xi32>
    %40 = arith.cmpi slt, %26, %39 : vector<16x1xi32>
    %41 = vector.shape_cast %40 : vector<16x1xi1> to vector<16x1xi1>
    %42 = vector.broadcast %41 : vector<16x1xi1> to vector<16x64xi1>
    %43 = arith.select %42, %38, %37 : vector<16x64xi1>, vector<16x64xf32>
    %c2 = arith.constant 2 : index
    %c0_17 = arith.constant 0 : index
    %44 = vector.load %arg5[%c2, %c0_17] : memref<4x64xf32, #tpu.memory_space<vmem>>, vector<1x64xf32>
    %45 = vector.shape_cast %44 : vector<1x64xf32> to vector<64xf32>
    %46 = vector.shape_cast %45 : vector<64xf32> to vector<1x64xf32>
    %47 = vector.broadcast %46 : vector<1x64xf32> to vector<16x64xf32>
    %48 = arith.mulf %43, %47 : vector<16x64xf32>
    %49 = arith.addf %36, %48 : vector<16x64xf32>
    %c2_i32 = arith.constant 2 : i32
    %50 = tpu.dynamic_rotate %23 by %c2_i32 dim 0 : vector<16x64xf32>, i32 -> vector<16x64xf32>
    %c2_i32_18 = arith.constant 2 : i32
    %51 = tpu.dynamic_rotate %25 by %c2_i32_18 dim 0 : vector<16x64xf32>, i32 -> vector<16x64xf32>
    %c2_i32_19 = arith.constant 2 : i32
    %52 = vector.broadcast %c2_i32_19 : i32 to vector<16x1xi32>
    %53 = arith.cmpi slt, %26, %52 : vector<16x1xi32>
    %54 = vector.shape_cast %53 : vector<16x1xi1> to vector<16x1xi1>
    %55 = vector.broadcast %54 : vector<16x1xi1> to vector<16x64xi1>
    %56 = arith.select %55, %51, %50 : vector<16x64xi1>, vector<16x64xf32>
    %c1 = arith.constant 1 : index
    %c0_20 = arith.constant 0 : index
    %57 = vector.load %arg5[%c1, %c0_20] : memref<4x64xf32, #tpu.memory_space<vmem>>, vector<1x64xf32>
    %58 = vector.shape_cast %57 : vector<1x64xf32> to vector<64xf32>
    %59 = vector.shape_cast %58 : vector<64xf32> to vector<1x64xf32>
    %60 = vector.broadcast %59 : vector<1x64xf32> to vector<16x64xf32>
    %61 = arith.mulf %56, %60 : vector<16x64xf32>
    %62 = arith.addf %49, %61 : vector<16x64xf32>
    %c3_i32 = arith.constant 3 : i32
    %63 = tpu.dynamic_rotate %23 by %c3_i32 dim 0 : vector<16x64xf32>, i32 -> vector<16x64xf32>
    %c3_i32_21 = arith.constant 3 : i32
    %64 = tpu.dynamic_rotate %25 by %c3_i32_21 dim 0 : vector<16x64xf32>, i32 -> vector<16x64xf32>
    %c3_i32_22 = arith.constant 3 : i32
    %65 = vector.broadcast %c3_i32_22 : i32 to vector<16x1xi32>
    %66 = arith.cmpi slt, %26, %65 : vector<16x1xi32>
    %67 = vector.shape_cast %66 : vector<16x1xi1> to vector<16x1xi1>
    %68 = vector.broadcast %67 : vector<16x1xi1> to vector<16x64xi1>
    %69 = arith.select %68, %64, %63 : vector<16x64xi1>, vector<16x64xf32>
    %c0_23 = arith.constant 0 : index
    %c0_24 = arith.constant 0 : index
    %70 = vector.load %arg5[%c0_23, %c0_24] : memref<4x64xf32, #tpu.memory_space<vmem>>, vector<1x64xf32>
    %71 = vector.shape_cast %70 : vector<1x64xf32> to vector<64xf32>
    %72 = vector.shape_cast %71 : vector<64xf32> to vector<1x64xf32>
    %73 = vector.broadcast %72 : vector<1x64xf32> to vector<16x64xf32>
    %74 = arith.mulf %69, %73 : vector<16x64xf32>
    %75 = arith.addf %62, %74 : vector<16x64xf32>
    %c0_25 = arith.constant 0 : index
    %c0_26 = arith.constant 0 : index
    %76 = vector.load %arg14[%c0_25, %c0_26] : memref<16x64xf32, #tpu.memory_space<vmem>>, vector<16x64xf32>
    tpu.vector_store %arg14[%c0_25, %c0_26], %23 {strides = array<i32>} : memref<16x64xf32, #tpu.memory_space<vmem>>, vector<16x64xf32>,
    %77 = arith.negf %75 : vector<16x64xf32>
    %78 = math.exp %77 : vector<16x64xf32>
    %cst_27 = arith.constant 1.000000e+00 : f32
    %79 = vector.broadcast %cst_27 : f32 to vector<16x64xf32>
    %80 = arith.addf %79, %78 : vector<16x64xf32>
    %81 = arith.divf %79, %80 : vector<16x64xf32>
    %82 = arith.mulf %75, %81 : vector<16x64xf32>
    %83 = arith.truncf %82 : vector<16x64xf32> to vector<16x64xbf16>
    %c0_28 = arith.constant 0 : index
    %c0_29 = arith.constant 0 : index
    %84 = vector.load %arg7[%c0_28, %c0_29] : memref<64x40xbf16, #tpu.memory_space<vmem>>, vector<64x40xbf16>
    %cst_30 = arith.constant dense<0.000000e+00> : vector<16x40xf32>
    %85 = tpu.matmul %83, %84, %cst_30 {dimension_numbers = #tpu.dot_dimension_numbers<[1], [0], [0], [1], [0, 0, 1, 1], [], []>} : vector<16x64xbf16>, vector<64x40xbf16>, vector<16x40xf32> -> vector<16x40xf32>
    %86 = vector.extract_strided_slice %85 {offsets = [0, 0], sizes = [16, 8], strides = [1, 1]} : vector<16x40xf32> to vector<16x8xf32>
    %87 = arith.truncf %86 : vector<16x8xf32> to vector<16x8xbf16>
    %c0_31 = arith.constant 0 : index
    %c0_32 = arith.constant 0 : index
    %88 = vector.load %arg8[%c0_31, %c0_32] : memref<8x64xbf16, #tpu.memory_space<vmem>>, vector<8x64xbf16>
    %cst_33 = arith.constant dense<0.000000e+00> : vector<16x64xf32>
    %89 = tpu.matmul %87, %88, %cst_33 {dimension_numbers = #tpu.dot_dimension_numbers<[1], [0], [0], [1], [0, 0, 1, 1], [], []>} : vector<16x8xbf16>, vector<8x64xbf16>, vector<16x64xf32> -> vector<16x64xf32>
    %c0_34 = arith.constant 0 : index
    %c0_35 = arith.constant 0 : index
    %90 = vector.load %arg9[%c0_34, %c0_35] : memref<1x64xf32, #tpu.memory_space<vmem>>, vector<1x64xf32>
    %91 = vector.shape_cast %90 : vector<1x64xf32> to vector<64xf32>
    %92 = vector.shape_cast %91 : vector<64xf32> to vector<1x64xf32>
    %93 = vector.broadcast %92 : vector<1x64xf32> to vector<16x64xf32>
    %94 = arith.addf %89, %93 : vector<16x64xf32>
    %cst_36 = arith.constant 2.000000e+01 : f32
    %95 = vector.broadcast %cst_36 : f32 to vector<16x64xf32>
    %96 = arith.cmpf ogt, %94, %95 : vector<16x64xf32>
    %cst_37 = arith.constant 2.000000e+01 : f32
    %97 = vector.broadcast %cst_37 : f32 to vector<16x64xf32>
    %98 = arith.minimumf %94, %97 : vector<16x64xf32>
    %99 = math.exp %98 : vector<16x64xf32>
    %100 = math.log1p %99 : vector<16x64xf32>
    %101 = arith.select %96, %94, %100 : vector<16x64xi1>, vector<16x64xf32>
    %c0_38 = arith.constant 0 : index
    %c0_39 = arith.constant 0 : index
    %102 = vector.load %arg16[%c0_38, %c0_39] : memref<16x64xf32, #tpu.memory_space<vmem>>, vector<16x64xf32>
    tpu.vector_store %arg16[%c0_38, %c0_39], %101 {strides = array<i32>} : memref<16x64xf32, #tpu.memory_space<vmem>>, vector<16x64xf32>,
    %c0_40 = arith.constant 0 : index
    %c0_41 = arith.constant 0 : index
    %103 = vector.load %arg17[%c0_40, %c0_41] : memref<16x64xf32, #tpu.memory_space<vmem>>, vector<16x64xf32>
    tpu.vector_store %arg17[%c0_40, %c0_41], %82 {strides = array<i32>} : memref<16x64xf32, #tpu.memory_space<vmem>>, vector<16x64xf32>,
    %104 = vector.extract_strided_slice %85 {offsets = [0, 8], sizes = [16, 16], strides = [1, 1]} : vector<16x40xf32> to vector<16x16xf32>
    %c0_42 = arith.constant 0 : index
    %c0_43 = arith.constant 0 : index
    %105 = vector.load %arg18[%c0_42, %c0_43] : memref<16x16xf32, #tpu.memory_space<vmem>>, vector<16x16xf32>
    tpu.vector_store %arg18[%c0_42, %c0_43], %104 {strides = array<i32>} : memref<16x16xf32, #tpu.memory_space<vmem>>, vector<16x16xf32>,
    %106 = vector.extract_strided_slice %85 {offsets = [0, 24], sizes = [16, 16], strides = [1, 1]} : vector<16x40xf32> to vector<16x16xf32>
    %c0_44 = arith.constant 0 : index
    %c0_45 = arith.constant 0 : index
    %107 = vector.load %arg19[%c0_44, %c0_45] : memref<16x16xf32, #tpu.memory_space<vmem>>, vector<16x16xf32>
    tpu.vector_store %arg19[%c0_44, %c0_45], %106 {strides = array<i32>} : memref<16x16xf32, #tpu.memory_space<vmem>>, vector<16x16xf32>,
    %c0_46 = arith.constant 0 : index
    %c0_47 = arith.constant 0 : index
    %108 = vector.load %arg10[%c0_46, %c0_47] : memref<16x64xf32, #tpu.memory_space<vmem>>, vector<16x64xf32>
    %c0_48 = arith.constant 0 : index
    %c0_49 = arith.constant 0 : index
    %109 = vector.load %arg15[%c0_48, %c0_49] : memref<16x64xf32, #tpu.memory_space<vmem>>, vector<16x64xf32>
    %c0_i32_50 = arith.constant 0 : i32
    %c2_i32_51 = arith.constant 2 : i32
    %110 = arith.addi %c0_i32_50, %c2_i32_51 : i32
    %c1_i32_52 = arith.constant 1 : i32
    %111 = scf.for %arg21 = %c0_i32_50 to %110 step %c1_i32_52 iter_args(%arg22 = %109) -> (vector<16x64xf32>)  : i32 {
      %c8_i32 = arith.constant 8 : i32
      %134 = arith.muli %arg21, %c8_i32 : i32
      %135 = tpu.assume_multiple %134, 8 : i32
      %136 = arith.index_cast %135 : i32 to index
      %c0_67 = arith.constant 0 : index
      %137 = vector.load %arg16[%136, %c0_67] : memref<16x64xf32, #tpu.memory_space<vmem>>, vector<8x64xf32>
      %138 = arith.index_cast %135 : i32 to index
      %c0_68 = arith.constant 0 : index
      %139 = vector.load %arg17[%138, %c0_68] : memref<16x64xf32, #tpu.memory_space<vmem>>, vector<8x64xf32>
      %140 = arith.index_cast %135 : i32 to index
      %c0_69 = arith.constant 0 : index
      %141 = vector.load %arg18[%140, %c0_69] : memref<16x16xf32, #tpu.memory_space<vmem>>, vector<8x16xf32>
      %142 = arith.index_cast %135 : i32 to index
      %c0_70 = arith.constant 0 : index
      %143 = vector.load %arg19[%142, %c0_70] : memref<16x16xf32, #tpu.memory_space<vmem>>, vector<8x16xf32>
      %144 = vector.shape_cast %137 : vector<8x64xf32> to vector<8x1x64xf32>
      %145 = vector.shape_cast %108 : vector<16x64xf32> to vector<1x16x64xf32>
      %146 = vector.broadcast %144 : vector<8x1x64xf32> to vector<8x16x64xf32>
      %147 = vector.broadcast %145 : vector<1x16x64xf32> to vector<8x16x64xf32>
      %148 = arith.mulf %146, %147 : vector<8x16x64xf32>
      %149 = math.exp %148 : vector<8x16x64xf32>
      %150 = arith.mulf %137, %139 : vector<8x64xf32>
      %151 = vector.shape_cast %150 : vector<8x64xf32> to vector<8x1x64xf32>
      %152 = vector.shape_cast %141 : vector<8x16xf32> to vector<8x16x1xf32>
      %153 = vector.broadcast %151 : vector<8x1x64xf32> to vector<8x16x64xf32>
      %154 = vector.broadcast %152 : vector<8x16x1xf32> to vector<8x16x64xf32>
      %155 = arith.mulf %153, %154 : vector<8x16x64xf32>
      %156 = vector.shape_cast %143 : vector<8x16xf32> to vector<8x16x1xf32>
      %157 = vector.extract_strided_slice %149 {offsets = [0, 0, 0], sizes = [1, 16, 64], strides = [1, 1, 1]} : vector<8x16x64xf32> to vector<1x16x64xf32>
      %158 = vector.shape_cast %157 : vector<1x16x64xf32> to vector<16x64xf32>
      %159 = arith.mulf %158, %arg22 : vector<16x64xf32>
      %160 = vector.extract_strided_slice %155 {offsets = [0, 0, 0], sizes = [1, 16, 64], strides = [1, 1, 1]} : vector<8x16x64xf32> to vector<1x16x64xf32>
      %161 = vector.shape_cast %160 : vector<1x16x64xf32> to vector<16x64xf32>
      %162 = arith.addf %159, %161 : vector<16x64xf32>
      %163 = vector.extract_strided_slice %156 {offsets = [0, 0, 0], sizes = [1, 16, 1], strides = [1, 1, 1]} : vector<8x16x1xf32> to vector<1x16x1xf32>
      %164 = vector.shape_cast %163 : vector<1x16x1xf32> to vector<16x1xf32>
      %165 = vector.broadcast %164 : vector<16x1xf32> to vector<16x64xf32>
      %166 = arith.mulf %162, %165 : vector<16x64xf32>
      %cst_71 = arith.constant dense<0.000000e+00> : vector<64xf32>
      %167 = vector.multi_reduction <add>, %166, %cst_71 [0] : vector<16x64xf32> to vector<64xf32>
      %168 = vector.shape_cast %167 : vector<64xf32> to vector<1x64xf32>
      %169 = vector.extract_strided_slice %149 {offsets = [1, 0, 0], sizes = [1, 16, 64], strides = [1, 1, 1]} : vector<8x16x64xf32> to vector<1x16x64xf32>
      %170 = vector.shape_cast %169 : vector<1x16x64xf32> to vector<16x64xf32>
      %171 = arith.mulf %170, %162 : vector<16x64xf32>
      %172 = vector.extract_strided_slice %155 {offsets = [1, 0, 0], sizes = [1, 16, 64], strides = [1, 1, 1]} : vector<8x16x64xf32> to vector<1x16x64xf32>
      %173 = vector.shape_cast %172 : vector<1x16x64xf32> to vector<16x64xf32>
      %174 = arith.addf %171, %173 : vector<16x64xf32>
      %175 = vector.extract_strided_slice %156 {offsets = [1, 0, 0], sizes = [1, 16, 1], strides = [1, 1, 1]} : vector<8x16x1xf32> to vector<1x16x1xf32>
      %176 = vector.shape_cast %175 : vector<1x16x1xf32> to vector<16x1xf32>
      %177 = vector.broadcast %176 : vector<16x1xf32> to vector<16x64xf32>
      %178 = arith.mulf %174, %177 : vector<16x64xf32>
      %cst_72 = arith.constant dense<0.000000e+00> : vector<64xf32>
      %179 = vector.multi_reduction <add>, %178, %cst_72 [0] : vector<16x64xf32> to vector<64xf32>
      %180 = vector.shape_cast %179 : vector<64xf32> to vector<1x64xf32>
      %181 = vector.extract_strided_slice %149 {offsets = [2, 0, 0], sizes = [1, 16, 64], strides = [1, 1, 1]} : vector<8x16x64xf32> to vector<1x16x64xf32>
      %182 = vector.shape_cast %181 : vector<1x16x64xf32> to vector<16x64xf32>
      %183 = arith.mulf %182, %174 : vector<16x64xf32>
      %184 = vector.extract_strided_slice %155 {offsets = [2, 0, 0], sizes = [1, 16, 64], strides = [1, 1, 1]} : vector<8x16x64xf32> to vector<1x16x64xf32>
      %185 = vector.shape_cast %184 : vector<1x16x64xf32> to vector<16x64xf32>
      %186 = arith.addf %183, %185 : vector<16x64xf32>
      %187 = vector.extract_strided_slice %156 {offsets = [2, 0, 0], sizes = [1, 16, 1], strides = [1, 1, 1]} : vector<8x16x1xf32> to vector<1x16x1xf32>
      %188 = vector.shape_cast %187 : vector<1x16x1xf32> to vector<16x1xf32>
      %189 = vector.broadcast %188 : vector<16x1xf32> to vector<16x64xf32>
      %190 = arith.mulf %186, %189 : vector<16x64xf32>
      %cst_73 = arith.constant dense<0.000000e+00> : vector<64xf32>
      %191 = vector.multi_reduction <add>, %190, %cst_73 [0] : vector<16x64xf32> to vector<64xf32>
      %192 = vector.shape_cast %191 : vector<64xf32> to vector<1x64xf32>
      %193 = vector.extract_strided_slice %149 {offsets = [3, 0, 0], sizes = [1, 16, 64], strides = [1, 1, 1]} : vector<8x16x64xf32> to vector<1x16x64xf32>
      %194 = vector.shape_cast %193 : vector<1x16x64xf32> to vector<16x64xf32>
      %195 = arith.mulf %194, %186 : vector<16x64xf32>
      %196 = vector.extract_strided_slice %155 {offsets = [3, 0, 0], sizes = [1, 16, 64], strides = [1, 1, 1]} : vector<8x16x64xf32> to vector<1x16x64xf32>
      %197 = vector.shape_cast %196 : vector<1x16x64xf32> to vector<16x64xf32>
      %198 = arith.addf %195, %197 : vector<16x64xf32>
      %199 = vector.extract_strided_slice %156 {offsets = [3, 0, 0], sizes = [1, 16, 1], strides = [1, 1, 1]} : vector<8x16x1xf32> to vector<1x16x1xf32>
      %200 = vector.shape_cast %199 : vector<1x16x1xf32> to vector<16x1xf32>
      %201 = vector.broadcast %200 : vector<16x1xf32> to vector<16x64xf32>
      %202 = arith.mulf %198, %201 : vector<16x64xf32>
      %cst_74 = arith.constant dense<0.000000e+00> : vector<64xf32>
      %203 = vector.multi_reduction <add>, %202, %cst_74 [0] : vector<16x64xf32> to vector<64xf32>
      %204 = vector.shape_cast %203 : vector<64xf32> to vector<1x64xf32>
      %205 = vector.extract_strided_slice %149 {offsets = [4, 0, 0], sizes = [1, 16, 64], strides = [1, 1, 1]} : vector<8x16x64xf32> to vector<1x16x64xf32>
      %206 = vector.shape_cast %205 : vector<1x16x64xf32> to vector<16x64xf32>
      %207 = arith.mulf %206, %198 : vector<16x64xf32>
      %208 = vector.extract_strided_slice %155 {offsets = [4, 0, 0], sizes = [1, 16, 64], strides = [1, 1, 1]} : vector<8x16x64xf32> to vector<1x16x64xf32>
      %209 = vector.shape_cast %208 : vector<1x16x64xf32> to vector<16x64xf32>
      %210 = arith.addf %207, %209 : vector<16x64xf32>
      %211 = vector.extract_strided_slice %156 {offsets = [4, 0, 0], sizes = [1, 16, 1], strides = [1, 1, 1]} : vector<8x16x1xf32> to vector<1x16x1xf32>
      %212 = vector.shape_cast %211 : vector<1x16x1xf32> to vector<16x1xf32>
      %213 = vector.broadcast %212 : vector<16x1xf32> to vector<16x64xf32>
      %214 = arith.mulf %210, %213 : vector<16x64xf32>
      %cst_75 = arith.constant dense<0.000000e+00> : vector<64xf32>
      %215 = vector.multi_reduction <add>, %214, %cst_75 [0] : vector<16x64xf32> to vector<64xf32>
      %216 = vector.shape_cast %215 : vector<64xf32> to vector<1x64xf32>
      %217 = vector.extract_strided_slice %149 {offsets = [5, 0, 0], sizes = [1, 16, 64], strides = [1, 1, 1]} : vector<8x16x64xf32> to vector<1x16x64xf32>
      %218 = vector.shape_cast %217 : vector<1x16x64xf32> to vector<16x64xf32>
      %219 = arith.mulf %218, %210 : vector<16x64xf32>
      %220 = vector.extract_strided_slice %155 {offsets = [5, 0, 0], sizes = [1, 16, 64], strides = [1, 1, 1]} : vector<8x16x64xf32> to vector<1x16x64xf32>
      %221 = vector.shape_cast %220 : vector<1x16x64xf32> to vector<16x64xf32>
      %222 = arith.addf %219, %221 : vector<16x64xf32>
      %223 = vector.extract_strided_slice %156 {offsets = [5, 0, 0], sizes = [1, 16, 1], strides = [1, 1, 1]} : vector<8x16x1xf32> to vector<1x16x1xf32>
      %224 = vector.shape_cast %223 : vector<1x16x1xf32> to vector<16x1xf32>
      %225 = vector.broadcast %224 : vector<16x1xf32> to vector<16x64xf32>
      %226 = arith.mulf %222, %225 : vector<16x64xf32>
      %cst_76 = arith.constant dense<0.000000e+00> : vector<64xf32>
      %227 = vector.multi_reduction <add>, %226, %cst_76 [0] : vector<16x64xf32> to vector<64xf32>
      %228 = vector.shape_cast %227 : vector<64xf32> to vector<1x64xf32>
      %229 = vector.extract_strided_slice %149 {offsets = [6, 0, 0], sizes = [1, 16, 64], strides = [1, 1, 1]} : vector<8x16x64xf32> to vector<1x16x64xf32>
      %230 = vector.shape_cast %229 : vector<1x16x64xf32> to vector<16x64xf32>
      %231 = arith.mulf %230, %222 : vector<16x64xf32>
      %232 = vector.extract_strided_slice %155 {offsets = [6, 0, 0], sizes = [1, 16, 64], strides = [1, 1, 1]} : vector<8x16x64xf32> to vector<1x16x64xf32>
      %233 = vector.shape_cast %232 : vector<1x16x64xf32> to vector<16x64xf32>
      %234 = arith.addf %231, %233 : vector<16x64xf32>
      %235 = vector.extract_strided_slice %156 {offsets = [6, 0, 0], sizes = [1, 16, 1], strides = [1, 1, 1]} : vector<8x16x1xf32> to vector<1x16x1xf32>
      %236 = vector.shape_cast %235 : vector<1x16x1xf32> to vector<16x1xf32>
      %237 = vector.broadcast %236 : vector<16x1xf32> to vector<16x64xf32>
      %238 = arith.mulf %234, %237 : vector<16x64xf32>
      %cst_77 = arith.constant dense<0.000000e+00> : vector<64xf32>
      %239 = vector.multi_reduction <add>, %238, %cst_77 [0] : vector<16x64xf32> to vector<64xf32>
      %240 = vector.shape_cast %239 : vector<64xf32> to vector<1x64xf32>
      %241 = vector.extract_strided_slice %149 {offsets = [7, 0, 0], sizes = [1, 16, 64], strides = [1, 1, 1]} : vector<8x16x64xf32> to vector<1x16x64xf32>
      %242 = vector.shape_cast %241 : vector<1x16x64xf32> to vector<16x64xf32>
      %243 = arith.mulf %242, %234 : vector<16x64xf32>
      %244 = vector.extract_strided_slice %155 {offsets = [7, 0, 0], sizes = [1, 16, 64], strides = [1, 1, 1]} : vector<8x16x64xf32> to vector<1x16x64xf32>
      %245 = vector.shape_cast %244 : vector<1x16x64xf32> to vector<16x64xf32>
      %246 = arith.addf %243, %245 : vector<16x64xf32>
      %247 = vector.extract_strided_slice %156 {offsets = [7, 0, 0], sizes = [1, 16, 1], strides = [1, 1, 1]} : vector<8x16x1xf32> to vector<1x16x1xf32>
      %248 = vector.shape_cast %247 : vector<1x16x1xf32> to vector<16x1xf32>
      %249 = vector.broadcast %248 : vector<16x1xf32> to vector<16x64xf32>
      %250 = arith.mulf %246, %249 : vector<16x64xf32>
      %cst_78 = arith.constant dense<0.000000e+00> : vector<64xf32>
      %251 = vector.multi_reduction <add>, %250, %cst_78 [0] : vector<16x64xf32> to vector<64xf32>
      %252 = vector.shape_cast %251 : vector<64xf32> to vector<1x64xf32>
      %253 = tpu.concatenate %168, %180, %192, %204, %216, %228, %240, %252 in 0 : vector<1x64xf32>, vector<1x64xf32>, vector<1x64xf32>, vector<1x64xf32>, vector<1x64xf32>, vector<1x64xf32>, vector<1x64xf32>, vector<1x64xf32> -> vector<8x64xf32>
      %254 = arith.index_cast %135 : i32 to index
      %c0_79 = arith.constant 0 : index
      %255 = vector.load %arg20[%254, %c0_79] : memref<16x64xf32, #tpu.memory_space<vmem>>, vector<8x64xf32>
      tpu.vector_store %arg20[%254, %c0_79], %253 {strides = array<i32>} : memref<16x64xf32, #tpu.memory_space<vmem>>, vector<8x64xf32>,
      scf.yield %246 : vector<16x64xf32>
    }
    %c2_i32_53 = arith.constant 2 : i32
    %c0_54 = arith.constant 0 : index
    %c0_55 = arith.constant 0 : index
    %112 = vector.load %arg15[%c0_54, %c0_55] : memref<16x64xf32, #tpu.memory_space<vmem>>, vector<16x64xf32>
    tpu.vector_store %arg15[%c0_54, %c0_55], %111 {strides = array<i32>} : memref<16x64xf32, #tpu.memory_space<vmem>>, vector<16x64xf32>,
    %c0_56 = arith.constant 0 : index
    %c0_57 = arith.constant 0 : index
    %113 = vector.load %arg20[%c0_56, %c0_57] : memref<16x64xf32, #tpu.memory_space<vmem>>, vector<16x64xf32>
    %c0_58 = arith.constant 0 : index
    %c0_59 = arith.constant 0 : index
    %114 = vector.load %arg11[%c0_58, %c0_59] : memref<1x64xf32, #tpu.memory_space<vmem>>, vector<1x64xf32>
    %115 = vector.shape_cast %114 : vector<1x64xf32> to vector<64xf32>
    %116 = vector.shape_cast %115 : vector<64xf32> to vector<1x64xf32>
    %117 = vector.broadcast %116 : vector<1x64xf32> to vector<16x64xf32>
    %118 = arith.mulf %117, %82 : vector<16x64xf32>
    %119 = arith.addf %113, %118 : vector<16x64xf32>
    %120 = arith.negf %24 : vector<16x64xf32>
    %121 = math.exp %120 : vector<16x64xf32>
    %cst_60 = arith.constant 1.000000e+00 : f32
    %122 = vector.broadcast %cst_60 : f32 to vector<16x64xf32>
    %123 = arith.addf %122, %121 : vector<16x64xf32>
    %124 = arith.divf %122, %123 : vector<16x64xf32>
    %125 = arith.mulf %24, %124 : vector<16x64xf32>
    %126 = arith.mulf %119, %125 : vector<16x64xf32>
    %127 = arith.truncf %126 : vector<16x64xf32> to vector<16x64xbf16>
    %c0_61 = arith.constant 0 : index
    %c0_62 = arith.constant 0 : index
    %128 = vector.load %arg12[%c0_61, %c0_62] : memref<64x32xbf16, #tpu.memory_space<vmem>>, vector<64x32xbf16>
    %cst_63 = arith.constant dense<0.000000e+00> : vector<16x32xf32>
    %129 = tpu.matmul %127, %128, %cst_63 {dimension_numbers = #tpu.dot_dimension_numbers<[1], [0], [0], [1], [0, 0, 1, 1], [], []>} : vector<16x64xbf16>, vector<64x32xbf16>, vector<16x32xf32> -> vector<16x32xf32>
    %130 = arith.addf %4, %129 : vector<16x32xf32>
    %c0_64 = arith.constant 0 : index
    %c0_65 = arith.constant 0 : index
    %c0_66 = arith.constant 0 : index
    %131 = vector.load %arg13[%c0_64, %c0_65, %c0_66] : memref<1x16x32xf32, #tpu.memory_space<vmem>>, vector<1x16x32xf32>
    %132 = vector.shape_cast %131 : vector<1x16x32xf32> to vector<16x32xf32>
    %133 = vector.shape_cast %130 : vector<16x32xf32> to vector<1x16x32xf32>
    tpu.vector_store %arg13[%c0_64, %c0_65, %c0_66], %133 {strides = array<i32>} : memref<1x16x32xf32, #tpu.memory_space<vmem>>, vector<1x16x32xf32>,
    return
  }
  func.func @transform_0(%arg0: i32, %arg1: i32) -> (i32, i32, i32) {
    %c0_i32 = arith.constant 0 : i32
    %c0_i32_0 = arith.constant 0 : i32
    return %arg0, %arg1, %c0_i32 : i32, i32, i32
  }
  func.func @transform_1(%arg0: i32, %arg1: i32) -> (i32, i32) {
    %c0_i32 = arith.constant 0 : i32
    %c0_i32_0 = arith.constant 0 : i32
    %c0_i32_1 = arith.constant 0 : i32
    return %c0_i32, %c0_i32_0 : i32, i32
  }
  func.func @transform_2(%arg0: i32, %arg1: i32) -> (i32, i32) {
    %c0_i32 = arith.constant 0 : i32
    %c0_i32_0 = arith.constant 0 : i32
    %c0_i32_1 = arith.constant 0 : i32
    return %c0_i32, %c0_i32_0 : i32, i32
  }
  func.func @transform_3(%arg0: i32, %arg1: i32) -> (i32, i32) {
    %c0_i32 = arith.constant 0 : i32
    %c0_i32_0 = arith.constant 0 : i32
    %c0_i32_1 = arith.constant 0 : i32
    return %c0_i32, %c0_i32_0 : i32, i32
  }
  func.func @transform_4(%arg0: i32, %arg1: i32) -> (i32, i32) {
    %c0_i32 = arith.constant 0 : i32
    %c0_i32_0 = arith.constant 0 : i32
    %c0_i32_1 = arith.constant 0 : i32
    return %c0_i32, %c0_i32_0 : i32, i32
  }
  func.func @transform_5(%arg0: i32, %arg1: i32) -> (i32, i32) {
    %c0_i32 = arith.constant 0 : i32
    %c0_i32_0 = arith.constant 0 : i32
    %c0_i32_1 = arith.constant 0 : i32
    return %c0_i32, %c0_i32_0 : i32, i32
  }
  func.func @transform_6(%arg0: i32, %arg1: i32) -> (i32, i32) {
    %c0_i32 = arith.constant 0 : i32
    %c0_i32_0 = arith.constant 0 : i32
    %c0_i32_1 = arith.constant 0 : i32
    return %c0_i32, %c0_i32_0 : i32, i32
  }
  func.func @transform_7(%arg0: i32, %arg1: i32) -> (i32, i32) {
    %c0_i32 = arith.constant 0 : i32
    %c0_i32_0 = arith.constant 0 : i32
    %c0_i32_1 = arith.constant 0 : i32
    return %c0_i32, %c0_i32_0 : i32, i32
  }
  func.func @transform_8(%arg0: i32, %arg1: i32) -> (i32, i32) {
    %c0_i32 = arith.constant 0 : i32
    %c0_i32_0 = arith.constant 0 : i32
    %c0_i32_1 = arith.constant 0 : i32
    return %c0_i32, %c0_i32_0 : i32, i32
  }
  func.func @transform_9(%arg0: i32, %arg1: i32) -> (i32, i32) {
    %c0_i32 = arith.constant 0 : i32
    %c0_i32_0 = arith.constant 0 : i32
    %c0_i32_1 = arith.constant 0 : i32
    return %c0_i32, %c0_i32_0 : i32, i32
  }
  func.func @transform_10(%arg0: i32, %arg1: i32) -> (i32, i32) {
    %c0_i32 = arith.constant 0 : i32
    %c0_i32_0 = arith.constant 0 : i32
    %c0_i32_1 = arith.constant 0 : i32
    return %c0_i32, %c0_i32_0 : i32, i32
  }
  func.func @transform_11(%arg0: i32, %arg1: i32) -> (i32, i32, i32) {
    %c0_i32 = arith.constant 0 : i32
    %c0_i32_0 = arith.constant 0 : i32
    return %arg0, %arg1, %c0_i32 : i32, i32, i32
  }
}

module attributes {stable_mosaic.version = 11 : i64} {
  func.func @_mamba_layer_kernel(%arg0: i32, %arg1: i32, %arg2: memref<1x16x32xf32, #tpu.memory_space<vmem>>, %arg3: memref<1x32xf32, #tpu.memory_space<vmem>>, %arg4: memref<32x128xbf16, #tpu.memory_space<vmem>>, %arg5: memref<4x64xf32, #tpu.memory_space<vmem>>, %arg6: memref<1x64xf32, #tpu.memory_space<vmem>>, %arg7: memref<64x40xbf16, #tpu.memory_space<vmem>>, %arg8: memref<8x64xbf16, #tpu.memory_space<vmem>>, %arg9: memref<1x64xf32, #tpu.memory_space<vmem>>, %arg10: memref<16x64xf32, #tpu.memory_space<vmem>>, %arg11: memref<1x64xf32, #tpu.memory_space<vmem>>, %arg12: memref<64x32xbf16, #tpu.memory_space<vmem>>, %arg13: memref<1x16x32xf32, #tpu.memory_space<vmem>>, %arg14: memref<16x64xf32, #tpu.memory_space<vmem>>, %arg15: memref<16x64xf32, #tpu.memory_space<vmem>>, %arg16: memref<16x64xf32, #tpu.memory_space<vmem>>, %arg17: memref<16x64xf32, #tpu.memory_space<vmem>>, %arg18: memref<16x16xf32, #tpu.memory_space<vmem>>, %arg19: memref<16x16xf32, #tpu.memory_space<vmem>>, %arg20: memref<16x64xf32, #tpu.memory_space<vmem>>) attributes {dimension_semantics = [#tpu.dimension_semantics<parallel>, #tpu.dimension_semantics<arbitrary>], iteration_bounds = array<i64: 2, 2>, scalar_prefetch = 0 : i64, scratch_operands = 7 : i64, tpu.core_type = #tpu.core_type<tc>, window_params = [{transform_indices = @transform_0, window_bounds = array<i64: 1, 16, 32>}, {pipeline_mode = #tpu.pipeline_mode<synchronous>, transform_indices = @transform_1, window_bounds = array<i64: 1, 32>}, {pipeline_mode = #tpu.pipeline_mode<synchronous>, transform_indices = @transform_2, window_bounds = array<i64: 32, 128>}, {pipeline_mode = #tpu.pipeline_mode<synchronous>, transform_indices = @transform_3, window_bounds = array<i64: 4, 64>}, {pipeline_mode = #tpu.pipeline_mode<synchronous>, transform_indices = @transform_4, window_bounds = array<i64: 1, 64>}, {pipeline_mode = #tpu.pipeline_mode<synchronous>, transform_indices = @transform_5, window_bounds = array<i64: 64, 40>}, {pipeline_mode = #tpu.pipeline_mode<synchronous>, transform_indices = @transform_6, window_bounds = array<i64: 8, 64>}, {pipeline_mode = #tpu.pipeline_mode<synchronous>, transform_indices = @transform_7, window_bounds = array<i64: 1, 64>}, {pipeline_mode = #tpu.pipeline_mode<synchronous>, transform_indices = @transform_8, window_bounds = array<i64: 16, 64>}, {pipeline_mode = #tpu.pipeline_mode<synchronous>, transform_indices = @transform_9, window_bounds = array<i64: 1, 64>}, {pipeline_mode = #tpu.pipeline_mode<synchronous>, transform_indices = @transform_10, window_bounds = array<i64: 64, 32>}, {transform_indices = @transform_11, window_bounds = array<i64: 1, 16, 32>}]} {
    %c0_i32 = arith.constant 0 : i32
    %0 = arith.cmpi eq, %arg1, %c0_i32 : i32
    %1 = arith.extui %0 : i1 to i32
    %c0_i32_0 = arith.constant 0 : i32
    %2 = arith.cmpi ne, %1, %c0_i32_0 : i32
    scf.if %2 {
      %cst_67 = arith.constant 0.000000e+00 : f32
      %134 = vector.broadcast %cst_67 : f32 to vector<16x64xf32>
      %c0_68 = arith.constant 0 : index
      %c0_69 = arith.constant 0 : index
      %135 = vector.load %arg14[%c0_68, %c0_69] : memref<16x64xf32, #tpu.memory_space<vmem>>, vector<16x64xf32>
      tpu.vector_store %arg14[%c0_68, %c0_69], %134 {strides = array<i32>} : memref<16x64xf32, #tpu.memory_space<vmem>>, vector<16x64xf32>,
      %cst_70 = arith.constant 0.000000e+00 : f32
      %136 = vector.broadcast %cst_70 : f32 to vector<16x64xf32>
      %c0_71 = arith.constant 0 : index
      %c0_72 = arith.constant 0 : index
      %137 = vector.load %arg15[%c0_71, %c0_72] : memref<16x64xf32, #tpu.memory_space<vmem>>, vector<16x64xf32>
      tpu.vector_store %arg15[%c0_71, %c0_72], %136 {strides = array<i32>} : memref<16x64xf32, #tpu.memory_space<vmem>>, vector<16x64xf32>,
    } else {
    }
    %c0 = arith.constant 0 : index
    %c0_1 = arith.constant 0 : index
    %c0_2 = arith.constant 0 : index
    %3 = vector.load %arg2[%c0, %c0_1, %c0_2] : memref<1x16x32xf32, #tpu.memory_space<vmem>>, vector<1x16x32xf32>
    %4 = vector.shape_cast %3 : vector<1x16x32xf32> to vector<16x32xf32>
    %5 = arith.mulf %4, %4 : vector<16x32xf32>
    %cst = arith.constant dense<0.000000e+00> : vector<16xf32>
    %6 = vector.multi_reduction <add>, %5, %cst [1] : vector<16x32xf32> to vector<16xf32>
    %7 = vector.shape_cast %6 : vector<16xf32> to vector<16x1xf32>
    %cst_3 = arith.constant 3.200000e+01 : f32
    %8 = vector.broadcast %cst_3 : f32 to vector<16x1xf32>
    %9 = arith.divf %7, %8 : vector<16x1xf32>
    %cst_4 = arith.constant 9.99999974E-6 : f32
    %10 = vector.broadcast %cst_4 : f32 to vector<16x1xf32>
    %11 = arith.addf %9, %10 : vector<16x1xf32>
    %12 = math.rsqrt %11 : vector<16x1xf32>
    %13 = vector.broadcast %12 : vector<16x1xf32> to vector<16x32xf32>
    %14 = arith.mulf %4, %13 : vector<16x32xf32>
    %c0_5 = arith.constant 0 : index
    %c0_6 = arith.constant 0 : index
    %15 = vector.load %arg3[%c0_5, %c0_6] : memref<1x32xf32, #tpu.memory_space<vmem>>, vector<1x32xf32>
    %16 = vector.shape_cast %15 : vector<1x32xf32> to vector<32xf32>
    %17 = vector.shape_cast %16 : vector<32xf32> to vector<1x32xf32>
    %18 = vector.broadcast %17 : vector<1x32xf32> to vector<16x32xf32>
    %19 = arith.mulf %14, %18 : vector<16x32xf32>
    %20 = arith.truncf %19 : vector<16x32xf32> to vector<16x32xbf16>
    %c0_7 = arith.constant 0 : index
    %c0_8 = arith.constant 0 : index
    %21 = vector.load %arg4[%c0_7, %c0_8] : memref<32x128xbf16, #tpu.memory_space<vmem>>, vector<32x128xbf16>
    %cst_9 = arith.constant dense<0.000000e+00> : vector<16x128xf32>
    %22 = tpu.matmul %20, %21, %cst_9 {dimension_numbers = #tpu.dot_dimension_numbers<[1], [0], [0], [1], [0, 0, 1, 1], [], []>} : vector<16x32xbf16>, vector<32x128xbf16>, vector<16x128xf32> -> vector<16x128xf32>
    %23 = vector.extract_strided_slice %22 {offsets = [0, 0], sizes = [16, 64], strides = [1, 1]} : vector<16x128xf32> to vector<16x64xf32>
    %24 = vector.extract_strided_slice %22 {offsets = [0, 64], sizes = [16, 64], strides = [1, 1]} : vector<16x128xf32> to vector<16x64xf32>
    %c0_10 = arith.constant 0 : index
    %c0_11 = arith.constant 0 : index
    %25 = vector.load %arg14[%c0_10, %c0_11] : memref<16x64xf32, #tpu.memory_space<vmem>>, vector<16x64xf32>
    %26 = tpu.iota {dimensions = array<i32: 0>} : vector<16x1xi32>
    %c3 = arith.constant 3 : index
    %c0_12 = arith.constant 0 : index
    %27 = vector.load %arg5[%c3, %c0_12] : memref<4x64xf32, #tpu.memory_space<vmem>>, vector<1x64xf32>
    %28 = vector.shape_cast %27 : vector<1x64xf32> to vector<64xf32>
    %29 = vector.shape_cast %28 : vector<64xf32> to vector<1x64xf32>
    %30 = vector.broadcast %29 : vector<1x64xf32> to vector<16x64xf32>
    %31 = arith.mulf %23, %30 : vector<16x64xf32>
    %c0_13 = arith.constant 0 : index
    %c0_14 = arith.constant 0 : index
    %32 = vector.load %arg6[%c0_13, %c0_14] : memref<1x64xf32, #tpu.memory_space<vmem>>, vector<1x64xf32>
    %33 = vector.shape_cast %32 : vector<1x64xf32> to vector<64xf32>
    %34 = vector.shape_cast %33 : vector<64xf32> to vector<1x64xf32>
    %35 = vector.broadcast %34 : vector<1x64xf32> to vector<16x64xf32>
    %36 = arith.addf %31, %35 : vector<16x64xf32>
    %c1_i32 = arith.constant 1 : i32
    %37 = tpu.dynamic_rotate %23 by %c1_i32 dim 0 : vector<16x64xf32>, i32 -> vector<16x64xf32>
    %c1_i32_15 = arith.constant 1 : i32
    %38 = tpu.dynamic_rotate %25 by %c1_i32_15 dim 0 : vector<16x64xf32>, i32 -> vector<16x64xf32>
    %c1_i32_16 = arith.constant 1 : i32
    %39 = vector.broadcast %c1_i32_16 : i32 to vector<16x1xi32>
    %40 = arith.cmpi slt, %26, %39 : vector<16x1xi32>
    %41 = vector.shape_cast %40 : vector<16x1xi1> to vector<16x1xi1>
    %42 = vector.broadcast %41 : vector<16x1xi1> to vector<16x64xi1>
    %43 = arith.select %42, %38, %37 : vector<16x64xi1>, vector<16x64xf32>
    %c2 = arith.constant 2 : index
    %c0_17 = arith.constant 0 : index
    %44 = vector.load %arg5[%c2, %c0_17] : memref<4x64xf32, #tpu.memory_space<vmem>>, vector<1x64xf32>
    %45 = vector.shape_cast %44 : vector<1x64xf32> to vector<64xf32>
    %46 = vector.shape_cast %45 : vector<64xf32> to vector<1x64xf32>
    %47 = vector.broadcast %46 : vector<1x64xf32> to vector<16x64xf32>
    %48 = arith.mulf %43, %47 : vector<16x64xf32>
    %49 = arith.addf %36, %48 : vector<16x64xf32>
    %c2_i32 = arith.constant 2 : i32
    %50 = tpu.dynamic_rotate %23 by %c2_i32 dim 0 : vector<16x64xf32>, i32 -> vector<16x64xf32>
    %c2_i32_18 = arith.constant 2 : i32
    %51 = tpu.dynamic_rotate %25 by %c2_i32_18 dim 0 : vector<16x64xf32>, i32 -> vector<16x64xf32>
    %c2_i32_19 = arith.constant 2 : i32
    %52 = vector.broadcast %c2_i32_19 : i32 to vector<16x1xi32>
    %53 = arith.cmpi slt, %26, %52 : vector<16x1xi32>
    %54 = vector.shape_cast %53 : vector<16x1xi1> to vector<16x1xi1>
    %55 = vector.broadcast %54 : vector<16x1xi1> to vector<16x64xi1>
    %56 = arith.select %55, %51, %50 : vector<16x64xi1>, vector<16x64xf32>
    %c1 = arith.constant 1 : index
    %c0_20 = arith.constant 0 : index
    %57 = vector.load %arg5[%c1, %c0_20] : memref<4x64xf32, #tpu.memory_space<vmem>>, vector<1x64xf32>
    %58 = vector.shape_cast %57 : vector<1x64xf32> to vector<64xf32>
    %59 = vector.shape_cast %58 : vector<64xf32> to vector<1x64xf32>
    %60 = vector.broadcast %59 : vector<1x64xf32> to vector<16x64xf32>
    %61 = arith.mulf %56, %60 : vector<16x64xf32>
    %62 = arith.addf %49, %61 : vector<16x64xf32>
    %c3_i32 = arith.constant 3 : i32
    %63 = tpu.dynamic_rotate %23 by %c3_i32 dim 0 : vector<16x64xf32>, i32 -> vector<16x64xf32>
    %c3_i32_21 = arith.constant 3 : i32
    %64 = tpu.dynamic_rotate %25 by %c3_i32_21 dim 0 : vector<16x64xf32>, i32 -> vector<16x64xf32>
    %c3_i32_22 = arith.constant 3 : i32
    %65 = vector.broadcast %c3_i32_22 : i32 to vector<16x1xi32>
    %66 = arith.cmpi slt, %26, %65 : vector<16x1xi32>
    %67 = vector.shape_cast %66 : vector<16x1xi1> to vector<16x1xi1>
    %68 = vector.broadcast %67 : vector<16x1xi1> to vector<16x64xi1>
    %69 = arith.select %68, %64, %63 : vector<16x64xi1>, vector<16x64xf32>
    %c0_23 = arith.constant 0 : index
    %c0_24 = arith.constant 0 : index
    %70 = vector.load %arg5[%c0_23, %c0_24] : memref<4x64xf32, #tpu.memory_space<vmem>>, vector<1x64xf32>
    %71 = vector.shape_cast %70 : vector<1x64xf32> to vector<64xf32>
    %72 = vector.shape_cast %71 : vector<64xf32> to vector<1x64xf32>
    %73 = vector.broadcast %72 : vector<1x64xf32> to vector<16x64xf32>
    %74 = arith.mulf %69, %73 : vector<16x64xf32>
    %75 = arith.addf %62, %74 : vector<16x64xf32>
    %c0_25 = arith.constant 0 : index
    %c0_26 = arith.constant 0 : index
    %76 = vector.load %arg14[%c0_25, %c0_26] : memref<16x64xf32, #tpu.memory_space<vmem>>, vector<16x64xf32>
    tpu.vector_store %arg14[%c0_25, %c0_26], %23 {strides = array<i32>} : memref<16x64xf32, #tpu.memory_space<vmem>>, vector<16x64xf32>,
    %77 = arith.negf %75 : vector<16x64xf32>
    %78 = math.exp %77 : vector<16x64xf32>
    %cst_27 = arith.constant 1.000000e+00 : f32
    %79 = vector.broadcast %cst_27 : f32 to vector<16x64xf32>
    %80 = arith.addf %79, %78 : vector<16x64xf32>
    %81 = arith.divf %79, %80 : vector<16x64xf32>
    %82 = arith.mulf %75, %81 : vector<16x64xf32>
    %83 = arith.truncf %82 : vector<16x64xf32> to vector<16x64xbf16>
    %c0_28 = arith.constant 0 : index
    %c0_29 = arith.constant 0 : index
    %84 = vector.load %arg7[%c0_28, %c0_29] : memref<64x40xbf16, #tpu.memory_space<vmem>>, vector<64x40xbf16>
    %cst_30 = arith.constant dense<0.000000e+00> : vector<16x40xf32>
    %85 = tpu.matmul %83, %84, %cst_30 {dimension_numbers = #tpu.dot_dimension_numbers<[1], [0], [0], [1], [0, 0, 1, 1], [], []>} : vector<16x64xbf16>, vector<64x40xbf16>, vector<16x40xf32> -> vector<16x40xf32>
    %86 = vector.extract_strided_slice %85 {offsets = [0, 0], sizes = [16, 8], strides = [1, 1]} : vector<16x40xf32> to vector<16x8xf32>
    %87 = arith.truncf %86 : vector<16x8xf32> to vector<16x8xbf16>
    %c0_31 = arith.constant 0 : index
    %c0_32 = arith.constant 0 : index
    %88 = vector.load %arg8[%c0_31, %c0_32] : memref<8x64xbf16, #tpu.memory_space<vmem>>, vector<8x64xbf16>
    %cst_33 = arith.constant dense<0.000000e+00> : vector<16x64xf32>
    %89 = tpu.matmul %87, %88, %cst_33 {dimension_numbers = #tpu.dot_dimension_numbers<[1], [0], [0], [1], [0, 0, 1, 1], [], []>} : vector<16x8xbf16>, vector<8x64xbf16>, vector<16x64xf32> -> vector<16x64xf32>
    %c0_34 = arith.constant 0 : index
    %c0_35 = arith.constant 0 : index
    %90 = vector.load %arg9[%c0_34, %c0_35] : memref<1x64xf32, #tpu.memory_space<vmem>>, vector<1x64xf32>
    %91 = vector.shape_cast %90 : vector<1x64xf32> to vector<64xf32>
    %92 = vector.shape_cast %91 : vector<64xf32> to vector<1x64xf32>
    %93 = vector.broadcast %92 : vector<1x64xf32> to vector<16x64xf32>
    %94 = arith.addf %89, %93 : vector<16x64xf32>
    %cst_36 = arith.constant 2.000000e+01 : f32
    %95 = vector.broadcast %cst_36 : f32 to vector<16x64xf32>
    %96 = arith.cmpf ogt, %94, %95 : vector<16x64xf32>
    %cst_37 = arith.constant 2.000000e+01 : f32
    %97 = vector.broadcast %cst_37 : f32 to vector<16x64xf32>
    %98 = arith.minimumf %94, %97 : vector<16x64xf32>
    %99 = math.exp %98 : vector<16x64xf32>
    %100 = math.log1p %99 : vector<16x64xf32>
    %101 = arith.select %96, %94, %100 : vector<16x64xi1>, vector<16x64xf32>
    %c0_38 = arith.constant 0 : index
    %c0_39 = arith.constant 0 : index
    %102 = vector.load %arg16[%c0_38, %c0_39] : memref<16x64xf32, #tpu.memory_space<vmem>>, vector<16x64xf32>
    tpu.vector_store %arg16[%c0_38, %c0_39], %101 {strides = array<i32>} : memref<16x64xf32, #tpu.memory_space<vmem>>, vector<16x64xf32>,
    %c0_40 = arith.constant 0 : index
    %c0_41 = arith.constant 0 : index
    %103 = vector.load %arg17[%c0_40, %c0_41] : memref<16x64xf32, #tpu.memory_space<vmem>>, vector<16x64xf32>
    tpu.vector_store %arg17[%c0_40, %c0_41], %82 {strides = array<i32>} : memref<16x64xf32, #tpu.memory_space<vmem>>, vector<16x64xf32>,
    %104 = vector.extract_strided_slice %85 {offsets = [0, 8], sizes = [16, 16], strides = [1, 1]} : vector<16x40xf32> to vector<16x16xf32>
    %c0_42 = arith.constant 0 : index
    %c0_43 = arith.constant 0 : index
    %105 = vector.load %arg18[%c0_42, %c0_43] : memref<16x16xf32, #tpu.memory_space<vmem>>, vector<16x16xf32>
    tpu.vector_store %arg18[%c0_42, %c0_43], %104 {strides = array<i32>} : memref<16x16xf32, #tpu.memory_space<vmem>>, vector<16x16xf32>,
    %106 = vector.extract_strided_slice %85 {offsets = [0, 24], sizes = [16, 16], strides = [1, 1]} : vector<16x40xf32> to vector<16x16xf32>
    %c0_44 = arith.constant 0 : index
    %c0_45 = arith.constant 0 : index
    %107 = vector.load %arg19[%c0_44, %c0_45] : memref<16x16xf32, #tpu.memory_space<vmem>>, vector<16x16xf32>
    tpu.vector_store %arg19[%c0_44, %c0_45], %106 {strides = array<i32>} : memref<16x16xf32, #tpu.memory_space<vmem>>, vector<16x16xf32>,
    %c0_46 = arith.constant 0 : index
    %c0_47 = arith.constant 0 : index
    %108 = vector.load %arg10[%c0_46, %c0_47] : memref<16x64xf32, #tpu.memory_space<vmem>>, vector<16x64xf32>
    %c0_48 = arith.constant 0 : index
    %c0_49 = arith.constant 0 : index
    %109 = vector.load %arg15[%c0_48, %c0_49] : memref<16x64xf32, #tpu.memory_space<vmem>>, vector<16x64xf32>
    %c0_i32_50 = arith.constant 0 : i32
    %c2_i32_51 = arith.constant 2 : i32
    %110 = arith.addi %c0_i32_50, %c2_i32_51 : i32
    %c1_i32_52 = arith.constant 1 : i32
    %111 = scf.for %arg21 = %c0_i32_50 to %110 step %c1_i32_52 iter_args(%arg22 = %109) -> (vector<16x64xf32>)  : i32 {
      %c8_i32 = arith.constant 8 : i32
      %134 = arith.muli %arg21, %c8_i32 : i32
      %135 = tpu.assume_multiple %134, 8 : i32
      %136 = arith.index_cast %135 : i32 to index
      %c0_67 = arith.constant 0 : index
      %137 = vector.load %arg16[%136, %c0_67] : memref<16x64xf32, #tpu.memory_space<vmem>>, vector<8x64xf32>
      %138 = arith.index_cast %135 : i32 to index
      %c0_68 = arith.constant 0 : index
      %139 = vector.load %arg17[%138, %c0_68] : memref<16x64xf32, #tpu.memory_space<vmem>>, vector<8x64xf32>
      %140 = arith.index_cast %135 : i32 to index
      %c0_69 = arith.constant 0 : index
      %141 = vector.load %arg18[%140, %c0_69] : memref<16x16xf32, #tpu.memory_space<vmem>>, vector<8x16xf32>
      %142 = arith.index_cast %135 : i32 to index
      %c0_70 = arith.constant 0 : index
      %143 = vector.load %arg19[%142, %c0_70] : memref<16x16xf32, #tpu.memory_space<vmem>>, vector<8x16xf32>
      %144 = vector.shape_cast %137 : vector<8x64xf32> to vector<8x1x64xf32>
      %145 = vector.shape_cast %108 : vector<16x64xf32> to vector<1x16x64xf32>
      %146 = vector.broadcast %144 : vector<8x1x64xf32> to vector<8x16x64xf32>
      %147 = vector.broadcast %145 : vector<1x16x64xf32> to vector<8x16x64xf32>
      %148 = arith.mulf %146, %147 : vector<8x16x64xf32>
      %149 = math.exp %148 : vector<8x16x64xf32>
      %150 = arith.mulf %137, %139 : vector<8x64xf32>
      %151 = vector.shape_cast %150 : vector<8x64xf32> to vector<8x1x64xf32>
      %152 = vector.shape_cast %141 : vector<8x16xf32> to vector<8x16x1xf32>
      %153 = vector.broadcast %151 : vector<8x1x64xf32> to vector<8x16x64xf32>
      %154 = vector.broadcast %152 : vector<8x16x1xf32> to vector<8x16x64xf32>
      %155 = arith.mulf %153, %154 : vector<8x16x64xf32>
      %156 = vector.shape_cast %143 : vector<8x16xf32> to vector<8x16x1xf32>
      %157 = vector.extract_strided_slice %149 {offsets = [0, 0, 0], sizes = [1, 16, 64], strides = [1, 1, 1]} : vector<8x16x64xf32> to vector<1x16x64xf32>
      %158 = vector.shape_cast %157 : vector<1x16x64xf32> to vector<16x64xf32>
      %159 = arith.mulf %158, %arg22 : vector<16x64xf32>
      %160 = vector.extract_strided_slice %155 {offsets = [0, 0, 0], sizes = [1, 16, 64], strides = [1, 1, 1]} : vector<8x16x64xf32> to vector<1x16x64xf32>
      %161 = vector.shape_cast %160 : vector<1x16x64xf32> to vector<16x64xf32>
      %162 = arith.addf %159, %161 : vector<16x64xf32>
      %163 = vector.extract_strided_slice %156 {offsets = [0, 0, 0], sizes = [1, 16, 1], strides = [1, 1, 1]} : vector<8x16x1xf32> to vector<1x16x1xf32>
      %164 = vector.shape_cast %163 : vector<1x16x1xf32> to vector<16x1xf32>
      %165 = vector.broadcast %164 : vector<16x1xf32> to vector<16x64xf32>
      %166 = arith.mulf %162, %165 : vector<16x64xf32>
      %cst_71 = arith.constant dense<0.000000e+00> : vector<64xf32>
      %167 = vector.multi_reduction <add>, %166, %cst_71 [0] : vector<16x64xf32> to vector<64xf32>
      %168 = vector.shape_cast %167 : vector<64xf32> to vector<1x64xf32>
      %169 = vector.extract_strided_slice %149 {offsets = [1, 0, 0], sizes = [1, 16, 64], strides = [1, 1, 1]} : vector<8x16x64xf32> to vector<1x16x64xf32>
      %170 = vector.shape_cast %169 : vector<1x16x64xf32> to vector<16x64xf32>
      %171 = arith.mulf %170, %162 : vector<16x64xf32>
      %172 = vector.extract_strided_slice %155 {offsets = [1, 0, 0], sizes = [1, 16, 64], strides = [1, 1, 1]} : vector<8x16x64xf32> to vector<1x16x64xf32>
      %173 = vector.shape_cast %172 : vector<1x16x64xf32> to vector<16x64xf32>
      %174 = arith.addf %171, %173 : vector<16x64xf32>
      %175 = vector.extract_strided_slice %156 {offsets = [1, 0, 0], sizes = [1, 16, 1], strides = [1, 1, 1]} : vector<8x16x1xf32> to vector<1x16x1xf32>
      %176 = vector.shape_cast %175 : vector<1x16x1xf32> to vector<16x1xf32>
      %177 = vector.broadcast %176 : vector<16x1xf32> to vector<16x64xf32>
      %178 = arith.mulf %174, %177 : vector<16x64xf32>
      %cst_72 = arith.constant dense<0.000000e+00> : vector<64xf32>
      %179 = vector.multi_reduction <add>, %178, %cst_72 [0] : vector<16x64xf32> to vector<64xf32>
      %180 = vector.shape_cast %179 : vector<64xf32> to vector<1x64xf32>
      %181 = vector.extract_strided_slice %149 {offsets = [2, 0, 0], sizes = [1, 16, 64], strides = [1, 1, 1]} : vector<8x16x64xf32> to vector<1x16x64xf32>
      %182 = vector.shape_cast %181 : vector<1x16x64xf32> to vector<16x64xf32>
      %183 = arith.mulf %182, %174 : vector<16x64xf32>
      %184 = vector.extract_strided_slice %155 {offsets = [2, 0, 0], sizes = [1, 16, 64], strides = [1, 1, 1]} : vector<8x16x64xf32> to vector<1x16x64xf32>
      %185 = vector.shape_cast %184 : vector<1x16x64xf32> to vector<16x64xf32>
      %186 = arith.addf %183, %185 : vector<16x64xf32>
      %187 = vector.extract_strided_slice %156 {offsets = [2, 0, 0], sizes = [1, 16, 1], strides = [1, 1, 1]} : vector<8x16x1xf32> to vector<1x16x1xf32>
      %188 = vector.shape_cast %187 : vector<1x16x1xf32> to vector<16x1xf32>
      %189 = vector.broadcast %188 : vector<16x1xf32> to vector<16x64xf32>
      %190 = arith.mulf %186, %189 : vector<16x64xf32>
      %cst_73 = arith.constant dense<0.000000e+00> : vector<64xf32>
      %191 = vector.multi_reduction <add>, %190, %cst_73 [0] : vector<16x64xf32> to vector<64xf32>
      %192 = vector.shape_cast %191 : vector<64xf32> to vector<1x64xf32>
      %193 = vector.extract_strided_slice %149 {offsets = [3, 0, 0], sizes = [1, 16, 64], strides = [1, 1, 1]} : vector<8x16x64xf32> to vector<1x16x64xf32>
      %194 = vector.shape_cast %193 : vector<1x16x64xf32> to vector<16x64xf32>
      %195 = arith.mulf %194, %186 : vector<16x64xf32>
      %196 = vector.extract_strided_slice %155 {offsets = [3, 0, 0], sizes = [1, 16, 64], strides = [1, 1, 1]} : vector<8x16x64xf32> to vector<1x16x64xf32>
      %197 = vector.shape_cast %196 : vector<1x16x64xf32> to vector<16x64xf32>
      %198 = arith.addf %195, %197 : vector<16x64xf32>
      %199 = vector.extract_strided_slice %156 {offsets = [3, 0, 0], sizes = [1, 16, 1], strides = [1, 1, 1]} : vector<8x16x1xf32> to vector<1x16x1xf32>
      %200 = vector.shape_cast %199 : vector<1x16x1xf32> to vector<16x1xf32>
      %201 = vector.broadcast %200 : vector<16x1xf32> to vector<16x64xf32>
      %202 = arith.mulf %198, %201 : vector<16x64xf32>
      %cst_74 = arith.constant dense<0.000000e+00> : vector<64xf32>
      %203 = vector.multi_reduction <add>, %202, %cst_74 [0] : vector<16x64xf32> to vector<64xf32>
      %204 = vector.shape_cast %203 : vector<64xf32> to vector<1x64xf32>
      %205 = vector.extract_strided_slice %149 {offsets = [4, 0, 0], sizes = [1, 16, 64], strides = [1, 1, 1]} : vector<8x16x64xf32> to vector<1x16x64xf32>
      %206 = vector.shape_cast %205 : vector<1x16x64xf32> to vector<16x64xf32>
      %207 = arith.mulf %206, %198 : vector<16x64xf32>
      %208 = vector.extract_strided_slice %155 {offsets = [4, 0, 0], sizes = [1, 16, 64], strides = [1, 1, 1]} : vector<8x16x64xf32> to vector<1x16x64xf32>
      %209 = vector.shape_cast %208 : vector<1x16x64xf32> to vector<16x64xf32>
      %210 = arith.addf %207, %209 : vector<16x64xf32>
      %211 = vector.extract_strided_slice %156 {offsets = [4, 0, 0], sizes = [1, 16, 1], strides = [1, 1, 1]} : vector<8x16x1xf32> to vector<1x16x1xf32>
      %212 = vector.shape_cast %211 : vector<1x16x1xf32> to vector<16x1xf32>
      %213 = vector.broadcast %212 : vector<16x1xf32> to vector<16x64xf32>
      %214 = arith.mulf %210, %213 : vector<16x64xf32>
      %cst_75 = arith.constant dense<0.000000e+00> : vector<64xf32>
      %215 = vector.multi_reduction <add>, %214, %cst_75 [0] : vector<16x64xf32> to vector<64xf32>
      %216 = vector.shape_cast %215 : vector<64xf32> to vector<1x64xf32>
      %217 = vector.extract_strided_slice %149 {offsets = [5, 0, 0], sizes = [1, 16, 64], strides = [1, 1, 1]} : vector<8x16x64xf32> to vector<1x16x64xf32>
      %218 = vector.shape_cast %217 : vector<1x16x64xf32> to vector<16x64xf32>
      %219 = arith.mulf %218, %210 : vector<16x64xf32>
      %220 = vector.extract_strided_slice %155 {offsets = [5, 0, 0], sizes = [1, 16, 64], strides = [1, 1, 1]} : vector<8x16x64xf32> to vector<1x16x64xf32>
      %221 = vector.shape_cast %220 : vector<1x16x64xf32> to vector<16x64xf32>
      %222 = arith.addf %219, %221 : vector<16x64xf32>
      %223 = vector.extract_strided_slice %156 {offsets = [5, 0, 0], sizes = [1, 16, 1], strides = [1, 1, 1]} : vector<8x16x1xf32> to vector<1x16x1xf32>
      %224 = vector.shape_cast %223 : vector<1x16x1xf32> to vector<16x1xf32>
      %225 = vector.broadcast %224 : vector<16x1xf32> to vector<16x64xf32>
      %226 = arith.mulf %222, %225 : vector<16x64xf32>
      %cst_76 = arith.constant dense<0.000000e+00> : vector<64xf32>
      %227 = vector.multi_reduction <add>, %226, %cst_76 [0] : vector<16x64xf32> to vector<64xf32>
      %228 = vector.shape_cast %227 : vector<64xf32> to vector<1x64xf32>
      %229 = vector.extract_strided_slice %149 {offsets = [6, 0, 0], sizes = [1, 16, 64], strides = [1, 1, 1]} : vector<8x16x64xf32> to vector<1x16x64xf32>
      %230 = vector.shape_cast %229 : vector<1x16x64xf32> to vector<16x64xf32>
      %231 = arith.mulf %230, %222 : vector<16x64xf32>
      %232 = vector.extract_strided_slice %155 {offsets = [6, 0, 0], sizes = [1, 16, 64], strides = [1, 1, 1]} : vector<8x16x64xf32> to vector<1x16x64xf32>
      %233 = vector.shape_cast %232 : vector<1x16x64xf32> to vector<16x64xf32>
      %234 = arith.addf %231, %233 : vector<16x64xf32>
      %235 = vector.extract_strided_slice %156 {offsets = [6, 0, 0], sizes = [1, 16, 1], strides = [1, 1, 1]} : vector<8x16x1xf32> to vector<1x16x1xf32>
      %236 = vector.shape_cast %235 : vector<1x16x1xf32> to vector<16x1xf32>
      %237 = vector.broadcast %236 : vector<16x1xf32> to vector<16x64xf32>
      %238 = arith.mulf %234, %237 : vector<16x64xf32>
      %cst_77 = arith.constant dense<0.000000e+00> : vector<64xf32>
      %239 = vector.multi_reduction <add>, %238, %cst_77 [0] : vector<16x64xf32> to vector<64xf32>
      %240 = vector.shape_cast %239 : vector<64xf32> to vector<1x64xf32>
      %241 = vector.extract_strided_slice %149 {offsets = [7, 0, 0], sizes = [1, 16, 64], strides = [1, 1, 1]} : vector<8x16x64xf32> to vector<1x16x64xf32>
      %242 = vector.shape_cast %241 : vector<1x16x64xf32> to vector<16x64xf32>
      %243 = arith.mulf %242, %234 : vector<16x64xf32>
      %244 = vector.extract_strided_slice %155 {offsets = [7, 0, 0], sizes = [1, 16, 64], strides = [1, 1, 1]} : vector<8x16x64xf32> to vector<1x16x64xf32>
      %245 = vector.shape_cast %244 : vector<1x16x64xf32> to vector<16x64xf32>
      %246 = arith.addf %243, %245 : vector<16x64xf32>
      %247 = vector.extract_strided_slice %156 {offsets = [7, 0, 0], sizes = [1, 16, 1], strides = [1, 1, 1]} : vector<8x16x1xf32> to vector<1x16x1xf32>
      %248 = vector.shape_cast %247 : vector<1x16x1xf32> to vector<16x1xf32>
      %249 = vector.broadcast %248 : vector<16x1xf32> to vector<16x64xf32>
      %250 = arith.mulf %246, %249 : vector<16x64xf32>
      %cst_78 = arith.constant dense<0.000000e+00> : vector<64xf32>
      %251 = vector.multi_reduction <add>, %250, %cst_78 [0] : vector<16x64xf32> to vector<64xf32>
      %252 = vector.shape_cast %251 : vector<64xf32> to vector<1x64xf32>
      %253 = tpu.concatenate %168, %180, %192, %204, %216, %228, %240, %252 in 0 : vector<1x64xf32>, vector<1x64xf32>, vector<1x64xf32>, vector<1x64xf32>, vector<1x64xf32>, vector<1x64xf32>, vector<1x64xf32>, vector<1x64xf32> -> vector<8x64xf32>
      %254 = arith.index_cast %135 : i32 to index
      %c0_79 = arith.constant 0 : index
      %255 = vector.load %arg20[%254, %c0_79] : memref<16x64xf32, #tpu.memory_space<vmem>>, vector<8x64xf32>
      tpu.vector_store %arg20[%254, %c0_79], %253 {strides = array<i32>} : memref<16x64xf32, #tpu.memory_space<vmem>>, vector<8x64xf32>,
      scf.yield %246 : vector<16x64xf32>
    }
    %c2_i32_53 = arith.constant 2 : i32
    %c0_54 = arith.constant 0 : index
    %c0_55 = arith.constant 0 : index
    %112 = vector.load %arg15[%c0_54, %c0_55] : memref<16x64xf32, #tpu.memory_space<vmem>>, vector<16x64xf32>
    tpu.vector_store %arg15[%c0_54, %c0_55], %111 {strides = array<i32>} : memref<16x64xf32, #tpu.memory_space<vmem>>, vector<16x64xf32>,
    %c0_56 = arith.constant 0 : index
    %c0_57 = arith.constant 0 : index
    %113 = vector.load %arg20[%c0_56, %c0_57] : memref<16x64xf32, #tpu.memory_space<vmem>>, vector<16x64xf32>
    %c0_58 = arith.constant 0 : index
    %c0_59 = arith.constant 0 : index
    %114 = vector.load %arg11[%c0_58, %c0_59] : memref<1x64xf32, #tpu.memory_space<vmem>>, vector<1x64xf32>
    %115 = vector.shape_cast %114 : vector<1x64xf32> to vector<64xf32>
    %116 = vector.shape_cast %115 : vector<64xf32> to vector<1x64xf32>
    %117 = vector.broadcast %116 : vector<1x64xf32> to vector<16x64xf32>
    %118 = arith.mulf %117, %82 : vector<16x64xf32>
    %119 = arith.addf %113, %118 : vector<16x64xf32>
    %120 = arith.negf %24 : vector<16x64xf32>
    %121 = math.exp %120 : vector<16x64xf32>
    %cst_60 = arith.constant 1.000000e+00 : f32
    %122 = vector.broadcast %cst_60 : f32 to vector<16x64xf32>
    %123 = arith.addf %122, %121 : vector<16x64xf32>
    %124 = arith.divf %122, %123 : vector<16x64xf32>
    %125 = arith.mulf %24, %124 : vector<16x64xf32>
    %126 = arith.mulf %119, %125 : vector<16x64xf32>
    %127 = arith.truncf %126 : vector<16x64xf32> to vector<16x64xbf16>
    %c0_61 = arith.constant 0 : index
    %c0_62 = arith.constant 0 : index
    %128 = vector.load %arg12[%c0_61, %c0_62] : memref<64x32xbf16, #tpu.memory_space<vmem>>, vector<64x32xbf16>
    %cst_63 = arith.constant dense<0.000000e+00> : vector<16x32xf32>
    %129 = tpu.matmul %127, %128, %cst_63 {dimension_numbers = #tpu.dot_dimension_numbers<[1], [0], [0], [1], [0, 0, 1, 1], [], []>} : vector<16x64xbf16>, vector<64x32xbf16>, vector<16x32xf32> -> vector<16x32xf32>
    %130 = arith.addf %4, %129 : vector<16x32xf32>
    %c0_64 = arith.constant 0 : index
    %c0_65 = arith.constant 0 : index
    %c0_66 = arith.constant 0 : index
    %131 = vector.load %arg13[%c0_64, %c0_65, %c0_66] : memref<1x16x32xf32, #tpu.memory_space<vmem>>, vector<1x16x32xf32>
    %132 = vector.shape_cast %131 : vector<1x16x32xf32> to vector<16x32xf32>
    %133 = vector.shape_cast %130 : vector<16x32xf32> to vector<1x16x32xf32>
    tpu.vector_store %arg13[%c0_64, %c0_65, %c0_66], %133 {strides = array<i32>} : memref<1x16x32xf32, #tpu.memory_space<vmem>>, vector<1x16x32xf32>,
    return
  }
  func.func @transform_0(%arg0: i32, %arg1: i32) -> (i32, i32, i32) {
    %c0_i32 = arith.constant 0 : i32
    %c0_i32_0 = arith.constant 0 : i32
    return %arg0, %arg1, %c0_i32 : i32, i32, i32
  }
  func.func @transform_1(%arg0: i32, %arg1: i32) -> (i32, i32) {
    %c0_i32 = arith.constant 0 : i32
    %c0_i32_0 = arith.constant 0 : i32
    %c0_i32_1 = arith.constant 0 : i32
    return %c0_i32, %c0_i32_0 : i32, i32
  }
  func.func @transform_2(%arg0: i32, %arg1: i32) -> (i32, i32) {
    %c0_i32 = arith.constant 0 : i32
    %c0_i32_0 = arith.constant 0 : i32
    %c0_i32_1 = arith.constant 0 : i32
    return %c0_i32, %c0_i32_0 : i32, i32
  }
  func.func @transform_3(%arg0: i32, %arg1: i32) -> (i32, i32) {
    %c0_i32 = arith.constant 0 : i32
    %c0_i32_0 = arith.constant 0 : i32
    %c0_i32_1 = arith.constant 0 : i32
    return %c0_i32, %c0_i32_0 : i32, i32
  }
  func.func @transform_4(%arg0: i32, %arg1: i32) -> (i32, i32) {
    %c0_i32 = arith.constant 0 : i32
    %c0_i32_0 = arith.constant 0 : i32
    %c0_i32_1 = arith.constant 0 : i32
    return %c0_i32, %c0_i32_0 : i32, i32
  }
  func.func @transform_5(%arg0: i32, %arg1: i32) -> (i32, i32) {
    %c0_i32 = arith.constant 0 : i32
    %c0_i32_0 = arith.constant 0 : i32
    %c0_i32_1 = arith.constant 0 : i32
    return %c0_i32, %c0_i32_0 : i32, i32
  }
  func.func @transform_6(%arg0: i32, %arg1: i32) -> (i32, i32) {
    %c0_i32 = arith.constant 0 : i32
    %c0_i32_0 = arith.constant 0 : i32
    %c0_i32_1 = arith.constant 0 : i32
    return %c0_i32, %c0_i32_0 : i32, i32
  }
  func.func @transform_7(%arg0: i32, %arg1: i32) -> (i32, i32) {
    %c0_i32 = arith.constant 0 : i32
    %c0_i32_0 = arith.constant 0 : i32
    %c0_i32_1 = arith.constant 0 : i32
    return %c0_i32, %c0_i32_0 : i32, i32
  }
  func.func @transform_8(%arg0: i32, %arg1: i32) -> (i32, i32) {
    %c0_i32 = arith.constant 0 : i32
    %c0_i32_0 = arith.constant 0 : i32
    %c0_i32_1 = arith.constant 0 : i32
    return %c0_i32, %c0_i32_0 : i32, i32
  }
  func.func @transform_9(%arg0: i32, %arg1: i32) -> (i32, i32) {
    %c0_i32 = arith.constant 0 : i32
    %c0_i32_0 = arith.constant 0 : i32
    %c0_i32_1 = arith.constant 0 : i32
    return %c0_i32, %c0_i32_0 : i32, i32
  }
  func.func @transform_10(%arg0: i32, %arg1: i32) -> (i32, i32) {
    %c0_i32 = arith.constant 0 : i32
    %c0_i32_0 = arith.constant 0 : i32
    %c0_i32_1 = arith.constant 0 : i32
    return %c0_i32, %c0_i32_0 : i32, i32
  }
  func.func @transform_11(%arg0: i32, %arg1: i32) -> (i32, i32, i32) {
    %c0_i32 = arith.constant 0 : i32
    %c0_i32_0 = arith.constant 0 : i32
    return %arg0, %arg1, %c0_i32 : i32, i32, i32
  }
}

</mosaic_0001>

<llo_original>
// kernel: tpu_custom_call.1
$region0: #{tpu_custom_call.1}
  #allocation0 [shape = 'u32[]', space=smem, size = 0x4, offset = 0x4, fixed_abs, tag = 'smem constant byte address 0x4 - core index']
  #allocation1 [shape = 'u32[144,128]{1,0:T(1,128)}', space=vmem, size = 0x12000, scoped, tag = 'internal scratch']
  #allocation2 [shape = 'f32[16,64]{1,0:T(8,128)}', space=vmem, size = 0x2000, scoped, tag = 'scratch operand']
  #allocation3 [shape = 'f32[16,64]{1,0:T(8,128)}', space=vmem, size = 0x2000, scoped, tag = 'scratch operand']
  #allocation4 [shape = 'f32[16,64]{1,0:T(8,128)}', space=vmem, size = 0x2000, scoped, tag = 'scratch operand']
  #allocation5 [shape = 'f32[16,64]{1,0:T(8,128)}', space=vmem, size = 0x2000, scoped, tag = 'scratch operand']
  #allocation6 [shape = 'f32[16,16]{1,0:T(8,128)}', space=vmem, size = 0x2000, scoped, tag = 'scratch operand']
  #allocation7 [shape = 'f32[16,16]{1,0:T(8,128)}', space=vmem, size = 0x2000, scoped, tag = 'scratch operand']
  #allocation8 [shape = 'f32[16,64]{1,0:T(8,128)}', space=vmem, size = 0x2000, scoped, tag = 'scratch operand']
  %s0 = inlined_call_operand.hbm [shape: f32[2,32,32], index: 0, kind: input, shape index: {}]
  %s1 = inlined_call_operand.hbm [shape: f32[1,32], index: 1, kind: input, shape index: {}]
  %s2 = inlined_call_operand.hbm [shape: bf16[32,128], index: 2, kind: input, shape index: {}]
  %s3 = inlined_call_operand.hbm [shape: f32[4,64], index: 3, kind: input, shape index: {}]
  %s4 = inlined_call_operand.hbm [shape: f32[1,64], index: 4, kind: input, shape index: {}]
  %s5 = inlined_call_operand.hbm [shape: bf16[64,40], index: 5, kind: input, shape index: {}]
  %s6 = inlined_call_operand.hbm [shape: bf16[8,64], index: 6, kind: input, shape index: {}]
  %s7 = inlined_call_operand.hbm [shape: f32[1,64], index: 7, kind: input, shape index: {}]
  %s8 = inlined_call_operand.hbm [shape: f32[16,64], index: 8, kind: input, shape index: {}]
  %s9 = inlined_call_operand.hbm [shape: f32[1,64], index: 9, kind: input, shape index: {}]
  %s10 = inlined_call_operand.hbm [shape: bf16[64,32], index: 10, kind: input, shape index: {}]
  %s11 = inlined_call_operand.hbm [shape: f32[2,32,32], index: 11, kind: output, shape index: {}]
  %s12 = sld [smem:[#allocation0]]
  $region132: #{tpu_custom_call.1} parent=0
    _
  %s14 = ssub.s32 1, %s12
  %s15 = scalar_select 0, %s14, %s12
  $region1: #{tpu_custom_call.1} parent=0
    #allocation9 [shape = 'u8[16384]{0}', space=vmem, size = 0x4000, scoped, tag = 'input window, operand 0']
    #allocation10 [shape = 's32[2]{0}', space=sflag, size = 0x8, scoped, tag = 'scoped memory for tpu_custom_call.1']
    #allocation11 [shape = 's32[2]{0}', space=sflag, size = 0x8, scoped, tag = 'scoped memory for tpu_custom_call.1']
    #allocation12 [shape = 'u8[512]{0}', space=vmem, size = 0x400, scoped, tag = 'input window, operand 1, single buffered']
    #allocation13 [shape = 's32[1]{0}', space=sflag, size = 0x4, scoped, tag = 'scoped memory for tpu_custom_call.1']
    #allocation14 [shape = 'u8[8192]{0}', space=vmem, size = 0x2000, scoped, tag = 'input window, operand 2, single buffered']
    #allocation15 [shape = 'u8[2048]{0}', space=vmem, size = 0x800, scoped, tag = 'input window, operand 3, single buffered']
    #allocation16 [shape = 's32[1]{0}', space=sflag, size = 0x4, scoped, tag = 'scoped memory for tpu_custom_call.1']
    #allocation17 [shape = 'u8[512]{0}', space=vmem, size = 0x400, scoped, tag = 'input window, operand 4, single buffered']
    #allocation18 [shape = 'u8[16384]{0}', space=vmem, size = 0x4000, scoped, tag = 'input window, operand 5, single buffered']
    #allocation19 [shape = 's32[1]{0}', space=sflag, size = 0x4, scoped, tag = 'scoped memory for tpu_custom_call.1']
    #allocation20 [shape = 'u8[2048]{0}', space=vmem, size = 0x800, scoped, tag = 'input window, operand 6, single buffered']
    #allocation21 [shape = 'u8[512]{0}', space=vmem, size = 0x400, scoped, tag = 'input window, operand 7, single buffered']
    #allocation22 [shape = 's32[1]{0}', space=sflag, size = 0x4, scoped, tag = 'scoped memory for tpu_custom_call.1']
    #allocation23 [shape = 'u8[8192]{0}', space=vmem, size = 0x2000, scoped, tag = 'input window, operand 8, single buffered']
    #allocation24 [shape = 'u8[512]{0}', space=vmem, size = 0x400, scoped, tag = 'input window, operand 9, single buffered']
    #allocation25 [shape = 's32[1]{0}', space=sflag, size = 0x4, scoped, tag = 'scoped memory for tpu_custom_call.1']
    #allocation26 [shape = 'u8[16384]{0}', space=vmem, size = 0x4000, scoped, tag = 'input window, operand 10, single buffered']
    #allocation27 [shape = 'u8[16384]{0}', space=vmem, size = 0x4000, scoped, tag = 'output window, operand 0']
    %16 = vsyncpa [#allocation10], 0
    %s17 = scalar_lea.sflag [#allocation10], 1
    %18 = vsyncpa %s17, 0
    %19 = vsyncpa [#allocation13], 0
    %20 = vsyncpa [#allocation16], 0
    %21 = vsyncpa [#allocation19], 0
    %22 = vsyncpa [#allocation22], 0
    %23 = vsyncpa [#allocation25], 0
    %24 = vsyncpa [#allocation11], 0
    %s25 = scalar_lea.sflag [#allocation11], 1
    %26 = vsyncpa %s25, 0
    loop: start=0, step=1, limit=6
    $region2: #{tpu_custom_call.1} parent=1 // loop_pre_header
      _
    $region3: #{tpu_custom_call.1} parent=1 // loop_header
      %s28 = sphi 0, %s32
      %p29 = scmp.ge.s32.totalorder %s28, 6
      %s35 = sphi 0, %s47
      %s36 = sphi 0, %s43
      %s37 = sphi 0, %s35
      %s38 = sphi 0, %s36
      %s39 = sphi 0, %s37
      %s40 = sphi 0, %s38
      %s52 = sphi 0, %s54
      %s55 = sphi 0, %s52
      %s56 = sphi 0, %s55
      %s72 = sphi 0, %s56
      %s76 = sphi 0, %s76
      %s78 = sphi 0, %s76
      %s79 = sphi 0, %s78
      %s93 = sphi 0, %s79
      %s97 = sphi 0, %s97
      %s99 = sphi 0, %s97
      %s100 = sphi 0, %s99
      %s114 = sphi 0, %s100
      %s118 = sphi 0, %s118
      %s120 = sphi 0, %s118
      %s121 = sphi 0, %s120
      %s135 = sphi 0, %s121
      %s139 = sphi 0, %s139
      %s141 = sphi 0, %s139
      %s142 = sphi 0, %s141
      %s156 = sphi 0, %s142
      %s160 = sphi 0, %s160
      %s162 = sphi 0, %s160
      %s163 = sphi 0, %s162
      %s177 = sphi 0, %s163
      %s181 = sphi 0, %s181
      %s183 = sphi 0, %s181
      %s184 = sphi 0, %s183
      %s198 = sphi 0, %s184
      %s202 = sphi 0, %s202
      %s204 = sphi 0, %s202
      %s205 = sphi 0, %s204
      %s219 = sphi 0, %s205
      %s223 = sphi 0, %s223
      %s225 = sphi 0, %s223
      %s226 = sphi 0, %s225
      %s240 = sphi 0, %s226
      %s244 = sphi 0, %s244
      %s246 = sphi 0, %s244
      %s247 = sphi 0, %s246
      %s261 = sphi 0, %s247
      %s265 = sphi 0, %s265
      %s267 = sphi 0, %s265
      %s268 = sphi 0, %s267
      %s282 = sphi 0, %s268
      %s290 = sphi 0, %s292
      %s293 = sphi 0, %s290
      %s294 = sphi 0, %s293
      %s310 = sphi 0, %s294
    $region4: #{tpu_custom_call.1} parent=1 // loop_header_branch
      %31 = sbr.rel (%p29) target = $region8
    $region5: #{tpu_custom_call.1} parent=1 // loop_body
      %s33 = ssub.s32 %s28, 1
      %s34 = ssub.s32 %s28, 2
      %s41 = sadd.s32 1, %s36
      %p42 = scmp.ge.s32.totalorder %s41, 2
      %s43 = scalar_select %p42, 0, %s41
      %s44 = sadd.s32 1, %s35
      %s45 = scalar_select %p42, %s44, %s35
      %p46 = scmp.ge.s32.totalorder %s45, 2
      %s47 = scalar_select %p46, 0, %s45
      %s48 = ssub.s32 %s35, %s47
      %s49 = ssub.s32 %s36, %s43
      %s50 = sor.u32 %s48, %s49
      %p51 = scmp.eq.s32.totalorder %s50, 0
      %s53 = sadd.s32 %s52, 1
      %s54 = scalar_select %p51, %s52, %s53
      %p57 = pneg %p51
      %p58 = scmp.eq.s32.totalorder %s28, 3
      %p59 = por %p57, %p58
      %p60 = scmp.ne.s32.totalorder %s52, %s55
      %p61 = scmp.eq.s32.totalorder %s28, 0
      %p62 = por %p60, %p61
      %p63 = scmp.ne.s32.totalorder %s52, %s55
      %p64 = scmp.eq.s32.totalorder %s33, 3
      %p65 = por %p63, %p64
      %p66 = scmp.ne.s32.totalorder %s55, %s56
      %p67 = scmp.eq.s32.totalorder %s33, 0
      %p68 = por %p66, %p67
      %p69 = scmp.ne.s32.totalorder %s55, %s56
      %p70 = scmp.eq.s32.totalorder %s34, 3
      %p71 = por %p69, %p70
      %p73 = scmp.ne.s32.totalorder %s56, %s72
      %p74 = scmp.eq.s32.totalorder %s34, 0
      %p75 = por %p73, %p74
      %s77 = sadd.s32 %s76, 1
      %p80 = scmp.eq.s32.totalorder %s28, 3
      %p81 = scmp.ne.s32.totalorder %s76, %s78
      %p82 = scmp.eq.s32.totalorder %s28, 0
      %p83 = por %p81, %p82
      %p84 = scmp.ne.s32.totalorder %s76, %s78
      %p85 = scmp.eq.s32.totalorder %s33, 3
      %p86 = por %p84, %p85
      %p87 = scmp.ne.s32.totalorder %s78, %s79
      %p88 = scmp.eq.s32.totalorder %s33, 0
      %p89 = por %p87, %p88
      %p90 = scmp.ne.s32.totalorder %s78, %s79
      %p91 = scmp.eq.s32.totalorder %s34, 3
      %p92 = por %p90, %p91
      %p94 = scmp.ne.s32.totalorder %s79, %s93
      %p95 = scmp.eq.s32.totalorder %s34, 0
      %p96 = por %p94, %p95
      %s98 = sadd.s32 %s97, 1
      %p101 = scmp.eq.s32.totalorder %s28, 3
      %p102 = scmp.ne.s32.totalorder %s97, %s99
      %p103 = scmp.eq.s32.totalorder %s28, 0
      %p104 = por %p102, %p103
      %p105 = scmp.ne.s32.totalorder %s97, %s99
      %p106 = scmp.eq.s32.totalorder %s33, 3
      %p107 = por %p105, %p106
      %p108 = scmp.ne.s32.totalorder %s99, %s100
      %p109 = scmp.eq.s32.totalorder %s33, 0
      %p110 = por %p108, %p109
      %p111 = scmp.ne.s32.totalorder %s99, %s100
      %p112 = scmp.eq.s32.totalorder %s34, 3
      %p113 = por %p111, %p112
      %p115 = scmp.ne.s32.totalorder %s100, %s114
      %p116 = scmp.eq.s32.totalorder %s34, 0
      %p117 = por %p115, %p116
      %s119 = sadd.s32 %s118, 1
      %p122 = scmp.eq.s32.totalorder %s28, 3
      %p123 = scmp.ne.s32.totalorder %s118, %s120
      %p124 = scmp.eq.s32.totalorder %s28, 0
      %p125 = por %p123, %p124
      %p126 = scmp.ne.s32.totalorder %s118, %s120
      %p127 = scmp.eq.s32.totalorder %s33, 3
      %p128 = por %p126, %p127
      %p129 = scmp.ne.s32.totalorder %s120, %s121
      %p130 = scmp.eq.s32.totalorder %s33, 0
      %p131 = por %p129, %p130
      %p132 = scmp.ne.s32.totalorder %s120, %s121
      %p133 = scmp.eq.s32.totalorder %s34, 3
      %p134 = por %p132, %p133
      %p136 = scmp.ne.s32.totalorder %s121, %s135
      %p137 = scmp.eq.s32.totalorder %s34, 0
      %p138 = por %p136, %p137
      %s140 = sadd.s32 %s139, 1
      %p143 = scmp.eq.s32.totalorder %s28, 3
      %p144 = scmp.ne.s32.totalorder %s139, %s141
      %p145 = scmp.eq.s32.totalorder %s28, 0
      %p146 = por %p144, %p145
      %p147 = scmp.ne.s32.totalorder %s139, %s141
      %p148 = scmp.eq.s32.totalorder %s33, 3
      %p149 = por %p147, %p148
      %p150 = scmp.ne.s32.totalorder %s141, %s142
      %p151 = scmp.eq.s32.totalorder %s33, 0
      %p152 = por %p150, %p151
      %p153 = scmp.ne.s32.totalorder %s141, %s142
      %p154 = scmp.eq.s32.totalorder %s34, 3
      %p155 = por %p153, %p154
      %p157 = scmp.ne.s32.totalorder %s142, %s156
      %p158 = scmp.eq.s32.totalorder %s34, 0
      %p159 = por %p157, %p158
      %s161 = sadd.s32 %s160, 1
      %p164 = scmp.eq.s32.totalorder %s28, 3
      %p165 = scmp.ne.s32.totalorder %s160, %s162
      %p166 = scmp.eq.s32.totalorder %s28, 0
      %p167 = por %p165, %p166
      %p168 = scmp.ne.s32.totalorder %s160, %s162
      %p169 = scmp.eq.s32.totalorder %s33, 3
      %p170 = por %p168, %p169
      %p171 = scmp.ne.s32.totalorder %s162, %s163
      %p172 = scmp.eq.s32.totalorder %s33, 0
      %p173 = por %p171, %p172
      %p174 = scmp.ne.s32.totalorder %s162, %s163
      %p175 = scmp.eq.s32.totalorder %s34, 3
      %p176 = por %p174, %p175
      %p178 = scmp.ne.s32.totalorder %s163, %s177
      %p179 = scmp.eq.s32.totalorder %s34, 0
      %p180 = por %p178, %p179
      %s182 = sadd.s32 %s181, 1
      %p185 = scmp.eq.s32.totalorder %s28, 3
      %p186 = scmp.ne.s32.totalorder %s181, %s183
      %p187 = scmp.eq.s32.totalorder %s28, 0
      %p188 = por %p186, %p187
      %p189 = scmp.ne.s32.totalorder %s181, %s183
      %p190 = scmp.eq.s32.totalorder %s33, 3
      %p191 = por %p189, %p190
      %p192 = scmp.ne.s32.totalorder %s183, %s184
      %p193 = scmp.eq.s32.totalorder %s33, 0
      %p194 = por %p192, %p193
      %p195 = scmp.ne.s32.totalorder %s183, %s184
      %p196 = scmp.eq.s32.totalorder %s34, 3
      %p197 = por %p195, %p196
      %p199 = scmp.ne.s32.totalorder %s184, %s198
      %p200 = scmp.eq.s32.totalorder %s34, 0
      %p201 = por %p199, %p200
      %s203 = sadd.s32 %s202, 1
      %p206 = scmp.eq.s32.totalorder %s28, 3
      %p207 = scmp.ne.s32.totalorder %s202, %s204
      %p208 = scmp.eq.s32.totalorder %s28, 0
      %p209 = por %p207, %p208
      %p210 = scmp.ne.s32.totalorder %s202, %s204
      %p211 = scmp.eq.s32.totalorder %s33, 3
      %p212 = por %p210, %p211
      %p213 = scmp.ne.s32.totalorder %s204, %s205
      %p214 = scmp.eq.s32.totalorder %s33, 0
      %p215 = por %p213, %p214
      %p216 = scmp.ne.s32.totalorder %s204, %s205
      %p217 = scmp.eq.s32.totalorder %s34, 3
      %p218 = por %p216, %p217
      %p220 = scmp.ne.s32.totalorder %s205, %s219
      %p221 = scmp.eq.s32.totalorder %s34, 0
      %p222 = por %p220, %p221
      %s224 = sadd.s32 %s223, 1
      %p227 = scmp.eq.s32.totalorder %s28, 3
      %p228 = scmp.ne.s32.totalorder %s223, %s225
      %p229 = scmp.eq.s32.totalorder %s28, 0
      %p230 = por %p228, %p229
      %p231 = scmp.ne.s32.totalorder %s223, %s225
      %p232 = scmp.eq.s32.totalorder %s33, 3
      %p233 = por %p231, %p232
      %p234 = scmp.ne.s32.totalorder %s225, %s226
      %p235 = scmp.eq.s32.totalorder %s33, 0
      %p236 = por %p234, %p235
      %p237 = scmp.ne.s32.totalorder %s225, %s226
      %p238 = scmp.eq.s32.totalorder %s34, 3
      %p239 = por %p237, %p238
      %p241 = scmp.ne.s32.totalorder %s226, %s240
      %p242 = scmp.eq.s32.totalorder %s34, 0
      %p243 = por %p241, %p242
      %s245 = sadd.s32 %s244, 1
      %p248 = scmp.eq.s32.totalorder %s28, 3
      %p249 = scmp.ne.s32.totalorder %s244, %s246
      %p250 = scmp.eq.s32.totalorder %s28, 0
      %p251 = por %p249, %p250
      %p252 = scmp.ne.s32.totalorder %s244, %s246
      %p253 = scmp.eq.s32.totalorder %s33, 3
      %p254 = por %p252, %p253
      %p255 = scmp.ne.s32.totalorder %s246, %s247
      %p256 = scmp.eq.s32.totalorder %s33, 0
      %p257 = por %p255, %p256
      %p258 = scmp.ne.s32.totalorder %s246, %s247
      %p259 = scmp.eq.s32.totalorder %s34, 3
      %p260 = por %p258, %p259
      %p262 = scmp.ne.s32.totalorder %s247, %s261
      %p263 = scmp.eq.s32.totalorder %s34, 0
      %p264 = por %p262, %p263
      %s266 = sadd.s32 %s265, 1
      %p269 = scmp.eq.s32.totalorder %s28, 3
      %p270 = scmp.ne.s32.totalorder %s265, %s267
      %p271 = scmp.eq.s32.totalorder %s28, 0
      %p272 = por %p270, %p271
      %p273 = scmp.ne.s32.totalorder %s265, %s267
      %p274 = scmp.eq.s32.totalorder %s33, 3
      %p275 = por %p273, %p274
      %p276 = scmp.ne.s32.totalorder %s267, %s268
      %p277 = scmp.eq.s32.totalorder %s33, 0
      %p278 = por %p276, %p277
      %p279 = scmp.ne.s32.totalorder %s267, %s268
      %p280 = scmp.eq.s32.totalorder %s34, 3
      %p281 = por %p279, %p280
      %p283 = scmp.ne.s32.totalorder %s268, %s282
      %p284 = scmp.eq.s32.totalorder %s34, 0
      %p285 = por %p283, %p284
      %s286 = ssub.s32 %s35, %s47
      %s287 = ssub.s32 %s36, %s43
      %s288 = sor.u32 %s286, %s287
      %p289 = scmp.eq.s32.totalorder %s288, 0
      %s291 = sadd.s32 %s290, 1
      %s292 = scalar_select %p289, %s290, %s291
      %p295 = pneg %p289
      %p296 = scmp.eq.s32.totalorder %s28, 3
      %p297 = por %p295, %p296
      %p298 = scmp.ne.s32.totalorder %s290, %s293
      %p299 = scmp.eq.s32.totalorder %s28, 0
      %p300 = por %p298, %p299
      %p301 = scmp.ne.s32.totalorder %s290, %s293
      %p302 = scmp.eq.s32.totalorder %s33, 3
      %p303 = por %p301, %p302
      %p304 = scmp.ne.s32.totalorder %s293, %s294
      %p305 = scmp.eq.s32.totalorder %s33, 0
      %p306 = por %p304, %p305
      %p307 = scmp.ne.s32.totalorder %s293, %s294
      %p308 = scmp.eq.s32.totalorder %s34, 3
      %p309 = por %p307, %p308
      %p311 = scmp.ne.s32.totalorder %s294, %s310
      %p312 = scmp.eq.s32.totalorder %s34, 0
      %p313 = por %p311, %p312
      %p314 = scmp.le.s32.totalorder 1, %s28
      %p315 = scmp.lt.s32.totalorder %s28, 5
      %p316 = pnand %p314, %p315
      %p317 = pneg %p316
      // Predicated region
      $region9: #{tpu_custom_call.1} parent=5 // pred_check
        _
      $region10: #{tpu_custom_call.1} parent=5 // pred_check_branch
        %319 = sbr.rel (%p316) target = $region12
      $region11: #{tpu_custom_call.1} parent=5 // pred_region
        %s320 = ssub.s32 %s28, 1
        // Predicated region
        $region13: #{tpu_custom_call.1} parent=11 // pred_check
          %p321 = pneg %p89
        $region14: #{tpu_custom_call.1} parent=11 // pred_check_branch
          %323 = sbr.rel (%p321) target = $region16
        $region15: #{tpu_custom_call.1} parent=11 // pred_region
          %s325 = ssub.s32 16, 16
          %326 = vsyncadd [#allocation13], %s325
          %s328 = sshll.u32 [#allocation12], 4
          %s329 = int_to_ptr.vmem [resolvable:$true] %s328
          %331 = dma.hbm_to_vmem [thread:$0]  %s1, 16, %s329, [#allocation13]
        $region16: #{tpu_custom_call.1} parent=11 // pred_fallthru
          _
        // Predicated region
        $region17: #{tpu_custom_call.1} parent=11 // pred_check
          %p332 = pneg %p110
        $region18: #{tpu_custom_call.1} parent=11 // pred_check_branch
          %334 = sbr.rel (%p332) target = $region20
        $region19: #{tpu_custom_call.1} parent=11 // pred_region
          %s336 = ssub.s32 256, 256
          %337 = vsyncadd [#allocation13], %s336
          %s338 = sshll.u32 [#allocation14], 4
          %s339 = int_to_ptr.vmem [resolvable:$true] %s338
          %344 = dma.hbm_to_vmem [thread:$0]  %s2, 256, %s339, [#allocation13], 64, 64, 4
        $region20: #{tpu_custom_call.1} parent=11 // pred_fallthru
          _
        // Predicated region
        $region21: #{tpu_custom_call.1} parent=11 // pred_check
          %p345 = pneg %p131
        $region22: #{tpu_custom_call.1} parent=11 // pred_check_branch
          %347 = sbr.rel (%p345) target = $region24
        $region23: #{tpu_custom_call.1} parent=11 // pred_region
          %s349 = ssub.s32 64, 64
          %350 = vsyncadd [#allocation16], %s349
          %s352 = sshll.u32 [#allocation15], 4
          %s353 = int_to_ptr.vmem [resolvable:$true] %s352
          %355 = dma.hbm_to_vmem [thread:$0]  %s3, 64, %s353, [#allocation16]
        $region24: #{tpu_custom_call.1} parent=11 // pred_fallthru
          _
        // Predicated region
        $region25: #{tpu_custom_call.1} parent=11 // pred_check
          %p356 = pneg %p152
        $region26: #{tpu_custom_call.1} parent=11 // pred_check_branch
          %358 = sbr.rel (%p356) target = $region28
        $region27: #{tpu_custom_call.1} parent=11 // pred_region
          %s360 = ssub.s32 16, 16
          %361 = vsyncadd [#allocation16], %s360
          %s363 = sshll.u32 [#allocation17], 4
          %s364 = int_to_ptr.vmem [resolvable:$true] %s363
          %366 = dma.hbm_to_vmem [thread:$0]  %s4, 16, %s364, [#allocation16]
        $region28: #{tpu_custom_call.1} parent=11 // pred_fallthru
          _
        // Predicated region
        $region29: #{tpu_custom_call.1} parent=11 // pred_check
          %p367 = pneg %p173
        $region30: #{tpu_custom_call.1} parent=11 // pred_check_branch
          %369 = sbr.rel (%p367) target = $region32
        $region31: #{tpu_custom_call.1} parent=11 // pred_region
          %s371 = ssub.s32 512, 512
          %372 = vsyncadd [#allocation19], %s371
          %s373 = sshll.u32 [#allocation18], 4
          %s374 = int_to_ptr.vmem [resolvable:$true] %s373
          %379 = dma.hbm_to_vmem [thread:$0]  %s5, 512, %s374, [#allocation19], 64, 64, 4
        $region32: #{tpu_custom_call.1} parent=11 // pred_fallthru
          _
        // Predicated region
        $region33: #{tpu_custom_call.1} parent=11 // pred_check
          %p380 = pneg %p194
        $region34: #{tpu_custom_call.1} parent=11 // pred_check_branch
          %382 = sbr.rel (%p380) target = $region36
        $region35: #{tpu_custom_call.1} parent=11 // pred_region
          %s384 = ssub.s32 64, 64
          %385 = vsyncadd [#allocation19], %s384
          %s387 = sshll.u32 [#allocation20], 4
          %s388 = int_to_ptr.vmem [resolvable:$true] %s387
          %390 = dma.hbm_to_vmem [thread:$0]  %s6, 64, %s388, [#allocation19]
        $region36: #{tpu_custom_call.1} parent=11 // pred_fallthru
          _
        // Predicated region
        $region37: #{tpu_custom_call.1} parent=11 // pred_check
          %p391 = pneg %p215
        $region38: #{tpu_custom_call.1} parent=11 // pred_check_branch
          %393 = sbr.rel (%p391) target = $region40
        $region39: #{tpu_custom_call.1} parent=11 // pred_region
          %s395 = ssub.s32 16, 16
          %396 = vsyncadd [#allocation22], %s395
          %s398 = sshll.u32 [#allocation21], 4
          %s399 = int_to_ptr.vmem [resolvable:$true] %s398
          %401 = dma.hbm_to_vmem [thread:$0]  %s7, 16, %s399, [#allocation22]
        $region40: #{tpu_custom_call.1} parent=11 // pred_fallthru
          _
        // Predicated region
        $region41: #{tpu_custom_call.1} parent=11 // pred_check
          %p402 = pneg %p236
        $region42: #{tpu_custom_call.1} parent=11 // pred_check_branch
          %404 = sbr.rel (%p402) target = $region44
        $region43: #{tpu_custom_call.1} parent=11 // pred_region
          %s406 = ssub.s32 256, 256
          %407 = vsyncadd [#allocation22], %s406
          %s408 = sshll.u32 [#allocation23], 4
          %s409 = int_to_ptr.vmem [resolvable:$true] %s408
          %414 = dma.hbm_to_vmem [thread:$0]  %s8, 256, %s409, [#allocation22], 128, 128, 8
        $region44: #{tpu_custom_call.1} parent=11 // pred_fallthru
          _
        // Predicated region
        $region45: #{tpu_custom_call.1} parent=11 // pred_check
          %p415 = pneg %p257
        $region46: #{tpu_custom_call.1} parent=11 // pred_check_branch
          %417 = sbr.rel (%p415) target = $region48
        $region47: #{tpu_custom_call.1} parent=11 // pred_region
          %s419 = ssub.s32 16, 16
          %420 = vsyncadd [#allocation25], %s419
          %s422 = sshll.u32 [#allocation24], 4
          %s423 = int_to_ptr.vmem [resolvable:$true] %s422
          %425 = dma.hbm_to_vmem [thread:$0]  %s9, 16, %s423, [#allocation25]
        $region48: #{tpu_custom_call.1} parent=11 // pred_fallthru
          _
        // Predicated region
        $region49: #{tpu_custom_call.1} parent=11 // pred_check
          %p426 = pneg %p278
        $region50: #{tpu_custom_call.1} parent=11 // pred_check_branch
          %428 = sbr.rel (%p426) target = $region52
        $region51: #{tpu_custom_call.1} parent=11 // pred_region
          %s430 = ssub.s32 512, 512
          %431 = vsyncadd [#allocation25], %s430
          %s432 = sshll.u32 [#allocation26], 4
          %s433 = int_to_ptr.vmem [resolvable:$true] %s432
          %438 = dma.hbm_to_vmem [thread:$0]  %s10, 512, %s433, [#allocation25], 64, 64, 4
        $region52: #{tpu_custom_call.1} parent=11 // pred_fallthru
          _
      $region12: #{tpu_custom_call.1} parent=5 // pred_fallthru
        _
      %p439 = scmp.lt.s32.totalorder %s28, 4
      // Predicated region
      $region53: #{tpu_custom_call.1} parent=5 // pred_check
        %p440 = pneg %p439
      $region54: #{tpu_custom_call.1} parent=5 // pred_check_branch
        %442 = sbr.rel (%p440) target = $region56
      $region55: #{tpu_custom_call.1} parent=5 // pred_region
        // Predicated region
        $region57: #{tpu_custom_call.1} parent=55 // pred_check
          %p443 = pneg %p62
        $region58: #{tpu_custom_call.1} parent=55 // pred_check_branch
          %445 = sbr.rel (%p443) target = $region60
        $region59: #{tpu_custom_call.1} parent=55 // pred_region
          %s446 = sand.u32 %s52, 1
          %s447 = scalar_lea.sflag [#allocation10], %s446
          %s448 = sand.u32 %s52, 1
          %s449 = smul.addr %s448, 16
          %s450 = scalar_lea.vmem [#allocation9], %s449
          %s451 = smul.u32 2, %s36
          %s453 = ssub.s32 256, 256
          %454 = vsyncadd %s447, %s453
          %s455 = smul.addr %s35, 4
          %s456 = sadd.s32 %s451, %s455
          %s457 = smul.addr %s456, 128
          %s458 = scalar_lea.hbm %s0, %s457
          %s459 = sshll.u32 %s450, 4
          %s460 = int_to_ptr.vmem [resolvable:$true] %s459
          %465 = dma.hbm_to_vmem [thread:$0]  %s458, 256, %s460, %s447, 128, 128, 8
        $region60: #{tpu_custom_call.1} parent=55 // pred_fallthru
          _
      $region56: #{tpu_custom_call.1} parent=5 // pred_fallthru
        _
      %p466 = scmp.le.s32.totalorder 1, %s28
      %p467 = scmp.lt.s32.totalorder %s28, 5
      %p468 = pnand %p466, %p467
      %p469 = pneg %p468
      // Predicated region
      $region61: #{tpu_custom_call.1} parent=5 // pred_check
        _
      $region62: #{tpu_custom_call.1} parent=5 // pred_check_branch
        %471 = sbr.rel (%p468) target = $region64
      $region63: #{tpu_custom_call.1} parent=5 // pred_region
        %s472 = ssub.s32 %s28, 1
        %s473 = sand.u32 %s55, 1
        %s474 = scalar_lea.sflag [#allocation10], %s473
        %s475 = sand.u32 %s55, 1
        %s476 = smul.addr %s475, 16
        %s477 = scalar_lea.vmem [#allocation9], %s476
        // Predicated region
        $region65: #{tpu_custom_call.1} parent=63 // pred_check
          %p478 = pneg %p68
        $region66: #{tpu_custom_call.1} parent=63 // pred_check_branch
          %480 = sbr.rel (%p478) target = $region68
        $region67: #{tpu_custom_call.1} parent=63 // pred_region
          %481 = dma.done %s474, 256
        $region68: #{tpu_custom_call.1} parent=63 // pred_fallthru
          _
        // Predicated region
        $region69: #{tpu_custom_call.1} parent=63 // pred_check
          %p482 = pneg %p89
        $region70: #{tpu_custom_call.1} parent=63 // pred_check_branch
          %484 = sbr.rel (%p482) target = $region72
        $region71: #{tpu_custom_call.1} parent=63 // pred_region
          %485 = dma.done [#allocation13], 16
        $region72: #{tpu_custom_call.1} parent=63 // pred_fallthru
          _
        // Predicated region
        $region73: #{tpu_custom_call.1} parent=63 // pred_check
          %p486 = pneg %p110
        $region74: #{tpu_custom_call.1} parent=63 // pred_check_branch
          %488 = sbr.rel (%p486) target = $region76
        $region75: #{tpu_custom_call.1} parent=63 // pred_region
          %489 = dma.done [#allocation13], 256
        $region76: #{tpu_custom_call.1} parent=63 // pred_fallthru
          _
        // Predicated region
        $region77: #{tpu_custom_call.1} parent=63 // pred_check
          %p490 = pneg %p131
        $region78: #{tpu_custom_call.1} parent=63 // pred_check_branch
          %492 = sbr.rel (%p490) target = $region80
        $region79: #{tpu_custom_call.1} parent=63 // pred_region
          %493 = dma.done [#allocation16], 64
        $region80: #{tpu_custom_call.1} parent=63 // pred_fallthru
          _
        // Predicated region
        $region81: #{tpu_custom_call.1} parent=63 // pred_check
          %p494 = pneg %p152
        $region82: #{tpu_custom_call.1} parent=63 // pred_check_branch
          %496 = sbr.rel (%p494) target = $region84
        $region83: #{tpu_custom_call.1} parent=63 // pred_region
          %497 = dma.done [#allocation16], 16
        $region84: #{tpu_custom_call.1} parent=63 // pred_fallthru
          _
        // Predicated region
        $region85: #{tpu_custom_call.1} parent=63 // pred_check
          %p498 = pneg %p173
        $region86: #{tpu_custom_call.1} parent=63 // pred_check_branch
          %500 = sbr.rel (%p498) target = $region88
        $region87: #{tpu_custom_call.1} parent=63 // pred_region
          %501 = dma.done [#allocation19], 512
        $region88: #{tpu_custom_call.1} parent=63 // pred_fallthru
          _
        // Predicated region
        $region89: #{tpu_custom_call.1} parent=63 // pred_check
          %p502 = pneg %p194
        $region90: #{tpu_custom_call.1} parent=63 // pred_check_branch
          %504 = sbr.rel (%p502) target = $region92
        $region91: #{tpu_custom_call.1} parent=63 // pred_region
          %505 = dma.done [#allocation19], 64
        $region92: #{tpu_custom_call.1} parent=63 // pred_fallthru
          _
        // Predicated region
        $region93: #{tpu_custom_call.1} parent=63 // pred_check
          %p506 = pneg %p215
        $region94: #{tpu_custom_call.1} parent=63 // pred_check_branch
          %508 = sbr.rel (%p506) target = $region96
        $region95: #{tpu_custom_call.1} parent=63 // pred_region
          %509 = dma.done [#allocation22], 16
        $region96: #{tpu_custom_call.1} parent=63 // pred_fallthru
          _
        // Predicated region
        $region97: #{tpu_custom_call.1} parent=63 // pred_check
          %p510 = pneg %p236
        $region98: #{tpu_custom_call.1} parent=63 // pred_check_branch
          %512 = sbr.rel (%p510) target = $region100
        $region99: #{tpu_custom_call.1} parent=63 // pred_region
          %513 = dma.done [#allocation22], 256
        $region100: #{tpu_custom_call.1} parent=63 // pred_fallthru
          _
        // Predicated region
        $region101: #{tpu_custom_call.1} parent=63 // pred_check
          %p514 = pneg %p257
        $region102: #{tpu_custom_call.1} parent=63 // pred_check_branch
          %516 = sbr.rel (%p514) target = $region104
        $region103: #{tpu_custom_call.1} parent=63 // pred_region
          %517 = dma.done [#allocation25], 16
        $region104: #{tpu_custom_call.1} parent=63 // pred_fallthru
          _
        // Predicated region
        $region105: #{tpu_custom_call.1} parent=63 // pred_check
          %p518 = pneg %p278
        $region106: #{tpu_custom_call.1} parent=63 // pred_check_branch
          %520 = sbr.rel (%p518) target = $region108
        $region107: #{tpu_custom_call.1} parent=63 // pred_region
          %521 = dma.done [#allocation25], 512
        $region108: #{tpu_custom_call.1} parent=63 // pred_fallthru
          _
        %s522 = sand.u32 %s55, 1
        %s523 = scalar_lea.sflag [#allocation10], %s522
        %s524 = sand.u32 %s55, 1
        %s525 = smul.addr %s524, 16
        %s526 = scalar_lea.vmem [#allocation9], %s525
        %p527 = pneg %p68
        %p528 = pneg %p65
        %p529 = pneg %p89
        %p530 = pneg %p86
        %p531 = pneg %p110
        %p532 = pneg %p107
        %p533 = pneg %p131
        %p534 = pneg %p128
        %p535 = pneg %p152
        %p536 = pneg %p149
        %p537 = pneg %p173
        %p538 = pneg %p170
        %p539 = pneg %p194
        %p540 = pneg %p191
        %p541 = pneg %p215
        %p542 = pneg %p212
        %p543 = pneg %p236
        %p544 = pneg %p233
        %p545 = pneg %p257
        %p546 = pneg %p254
        %p547 = pneg %p278
        %p548 = pneg %p275
        %p549 = pneg %p306
        %p550 = pneg %p303
        %s551 = sand.u32 %s293, 1
        %s552 = scalar_lea.sflag [#allocation11], %s551
        %s553 = sand.u32 %s293, 1
        %s554 = smul.addr %s553, 16
        %s555 = scalar_lea.vmem [#allocation27], %s554
        %s556 = smul.u32 2, %s38
        %s557 = smul.u32 2, %s38
        %p559 = scmp.eq.s32.totalorder %s38, 0
        // Predicated region
        $region109: #{tpu_custom_call.1} parent=63 // pred_check
          %p560 = pneg %p559
        $region110: #{tpu_custom_call.1} parent=63 // pred_check_branch
          %562 = sbr.rel (%p560) target = $region112
        $region111: #{tpu_custom_call.1} parent=63 // pred_region
          %vm563 = vcmask 523264
          %564 = vst.msk [vmem:[#allocation2] sm:$0xff] %vm563, 0.0
          %565 = vst.msk [vmem:[#allocation2 + $0x8] sm:$0xff] %vm563, 0.0
          %566 = vst.msk [vmem:[#allocation3] sm:$0xff] %vm563, 0.0
          %567 = vst.msk [vmem:[#allocation3 + $0x8] sm:$0xff] %vm563, 0.0
        $region112: #{tpu_custom_call.1} parent=63 // pred_fallthru
          _
        %v568 = vld [vmem:[%s477] sm:$0xff]
        %v569 = vld [vmem:[%s477 + $0x8] sm:$0xff]
        %v570 = vmul.f32 %v568, %v568
        %v571 = vmul.f32 %v569, %v569
        %vm572 = vcmask 261120
        %v573 = vsel %vm572, %v570, 0.0
        %574 = vadd.xlane.f32.xlu0 %v573
        %v575 = vpop.xlane.xlu0 %574
        %v576 = vsel %vm572, %v571, 0.0
        %577 = vadd.xlane.f32.xlu0 %v576
        %v578 = vpop.xlane.xlu0 %577
        %v579 = vrcp.pop 32.0
        %v580 = vmul.f32 %v575, %v579
        %v581 = vmul.f32 %v578, %v579
        %v582 = vadd.f32 %v580, 1e-05
        %v583 = vadd.f32 %v581, 1e-05
        %v584 = vrsqrt.pop %v582
        %v585 = vrsqrt.pop %v583
        %v586 = vmul.f32 %v568, %v584
        %v587 = vmul.f32 %v569, %v585
        %v588 = vld [vmem:[#allocation12] sm:$0x1]
        %v590 = vlaneseq
        %v591 = vshrl.u32 %v590, 7
        %v592 = vsub.s32 0, %v591
        %v593 = vrot.slane %v588, %v592
        %v595 = vmul.f32 %v586, %v593
        %v596 = vmul.f32 %v587, %v593
        %v597 = vpack.c.bf16 %v596, %v595
        %v598 = vld [vmem:[#allocation14] sm:$0xf]
        %v599 = vld [vmem:[#allocation14 + $0x4] sm:$0xf]
        %v600 = vld [vmem:[#allocation14 + $0x8] sm:$0xf]
        %v601 = vld [vmem:[#allocation14 + $0xc] sm:$0xf]
        %v606 = vunpack.c.l.b16 %v598
        %v607 = vunpack.c.l.b16 %v599
        %v608 = vunpack.c.l.b16 %v600
        %v609 = vunpack.c.l.b16 %v601
        %v610 = vpack.c.b16 %v607, %v606
        %v611 = vpack.c.b16 %v609, %v608
        %v615 = vsel %vm572, %v597, 0
        %617 = vmatprep.subr.bf16.mxu0 0
        %618 = vmatpush1.bf16.msra.mxu0 %v610
        %619 = vmatprep.subr.bf16.mxu0 0
        %620 = vmatpush1.bf16.msra.mxu0 %v611
        %621 = vmatprep.subr.bf16.mxu0 0
        %622 = vmatpush1.bf16.msra.mxu0 0
        %623 = vmatprep.subr.bf16.mxu0 0
        %624 = vmatpush1.bf16.msra.mxu0 0
        %625 = vmatprep.subr.bf16.mxu0 0
        %626 = vmatpush1.bf16.msra.mxu0 0
        %627 = vmatprep.subr.bf16.mxu0 0
        %628 = vmatpush1.bf16.msra.mxu0 0
        %629 = vmatprep.subr.bf16.mxu0 0
        %630 = vmatpush1.bf16.msra.mxu0 0
        %631 = vmatprep.subr.bf16.mxu0 0
        %632 = vmatpush1.bf16.msra.mxu0 0
        %633 = vmatprep.subr.bf16.mxu0 0
        %634 = vmatpush1.bf16.msra.mxu0 0
        %635 = vmatprep.subr.bf16.mxu0 0
        %636 = vmatpush1.bf16.msra.mxu0 0
        %637 = vmatprep.subr.bf16.mxu0 0
        %638 = vmatpush1.bf16.msra.mxu0 0
        %639 = vmatprep.subr.bf16.mxu0 0
        %640 = vmatpush1.bf16.msra.mxu0 0
        %641 = vmatprep.subr.bf16.mxu0 0
        %642 = vmatpush1.bf16.msra.mxu0 0
        %643 = vmatprep.subr.bf16.mxu0 0
        %644 = vmatpush1.bf16.msra.mxu0 0
        %645 = vmatprep.subr.bf16.mxu0 0
        %646 = vmatpush1.bf16.msra.mxu0 0
        %647 = vmatprep.subr.bf16.mxu0 0
        %648 = vmatpush1.bf16.msra.mxu0 0
        %649 = vmatprep.mubr.bf16.mxu0 0
        %650 = vmatmul.mubr.bf16.gmra.mrb[0].mxu0 %v615
        %v651 = vpop.f32.mrb[0].mxu0
        %v652 = vadd.f32 0.0, %v651
        %v653 = vpop.f32.mrb[0].mxu0
        %v654 = vpop.f32.mrb[0].mxu0
        %v655 = vadd.f32 0.0, %v654
        %v656 = vpop.f32.mrb[0].mxu0
        %657 = vdwg.mxu0
        %v658 = vld [vmem:[#allocation2] sm:$0xff]
        %v659 = vld [vmem:[#allocation2 + $0x8] sm:$0xff]
        %v660 = vlaneseq
        %v661 = vshrl.u32 %v660, 7
        %v662 = vadd.s32 %v661, 8
        %v663 = vld [vmem:[#allocation15 + $0x3] sm:$0x1]
        %v664 = vlaneseq
        %v665 = vshrl.u32 %v664, 7
        %v666 = vsub.s32 0, %v665
        %v667 = vrot.slane %v663, %v666
        %v668 = vmul.f32 %v652, %v667
        %v669 = vmul.f32 %v655, %v667
        %v670 = vld [vmem:[#allocation17] sm:$0x1]
        %v672 = vlaneseq
        %v673 = vshrl.u32 %v672, 7
        %v674 = vsub.s32 0, %v673
        %v675 = vrot.slane %v670, %v674
        %v677 = vadd.f32 %v668, %v675
        %v678 = vadd.f32 %v669, %v675
        %v679 = vrot.slane %v652, 7
        %v680 = vrot.slane %v655, 7
        %vm681 = vcmp.lt.s32.totalorder %v661, 1
        %v682 = vsel %vm681, %v679, %v680
        %v683 = vsel %vm681, %v680, %v679
        %v684 = vrot.slane %v658, 7
        %v685 = vrot.slane %v659, 7
        %v686 = vsel %vm681, %v684, %v685
        %v687 = vsel %vm681, %v685, %v684
        %vm688 = vcmp.lt.s32.totalorder %v662, 1
        %v689 = vsel %vm681, 1, 0
        %v690 = vsel %vm688, 1, 0
        %vm691 = vcmp.eq.s32.totalorder %v689, 1
        %vm692 = vcmp.eq.s32.totalorder %v690, 1
        %v693 = vsel %vm691, %v687, %v683
        %v694 = vsel %vm692, %v686, %v682
        %v695 = vld [vmem:[#allocation15 + $0x2] sm:$0x1]
        %v696 = vlaneseq
        %v697 = vshrl.u32 %v696, 7
        %v698 = vsub.s32 0, %v697
        %v699 = vrot.slane %v695, %v698
        %v700 = vmul.f32 %v693, %v699
        %v701 = vmul.f32 %v694, %v699
        %v702 = vadd.f32 %v677, %v700
        %v703 = vadd.f32 %v678, %v701
        %v704 = vrot.slane %v652, 6
        %v705 = vrot.slane %v655, 6
        %vm706 = vcmp.lt.s32.totalorder %v661, 2
        %v707 = vsel %vm706, %v704, %v705
        %v708 = vsel %vm706, %v705, %v704
        %v709 = vrot.slane %v658, 6
        %v710 = vrot.slane %v659, 6
        %v711 = vsel %vm706, %v709, %v710
        %v712 = vsel %vm706, %v710, %v709
        %vm713 = vcmp.lt.s32.totalorder %v662, 2
        %v714 = vsel %vm706, 1, 0
        %v715 = vsel %vm713, 1, 0
        %vm716 = vcmp.eq.s32.totalorder %v714, 1
        %vm717 = vcmp.eq.s32.totalorder %v715, 1
        %v718 = vsel %vm716, %v712, %v708
        %v719 = vsel %vm717, %v711, %v707
        %v720 = vld [vmem:[#allocation15 + $0x1] sm:$0x1]
        %v721 = vlaneseq
        %v722 = vshrl.u32 %v721, 7
        %v723 = vsub.s32 0, %v722
        %v724 = vrot.slane %v720, %v723
        %v725 = vmul.f32 %v718, %v724
        %v726 = vmul.f32 %v719, %v724
        %v727 = vadd.f32 %v702, %v725
        %v728 = vadd.f32 %v703, %v726
        %v729 = vrot.slane %v652, 5
        %v730 = vrot.slane %v655, 5
        %vm731 = vcmp.lt.s32.totalorder %v661, 3
        %v732 = vsel %vm731, %v729, %v730
        %v733 = vsel %vm731, %v730, %v729
        %v734 = vrot.slane %v658, 5
        %v735 = vrot.slane %v659, 5
        %v736 = vsel %vm731, %v734, %v735
        %v737 = vsel %vm731, %v735, %v734
        %vm738 = vcmp.lt.s32.totalorder %v662, 3
        %v739 = vsel %vm731, 1, 0
        %v740 = vsel %vm738, 1, 0
        %vm741 = vcmp.eq.s32.totalorder %v739, 1
        %vm742 = vcmp.eq.s32.totalorder %v740, 1
        %v743 = vsel %vm741, %v737, %v733
        %v744 = vsel %vm742, %v736, %v732
        %v745 = vld [vmem:[#allocation15] sm:$0x1]
        %v746 = vlaneseq
        %v747 = vshrl.u32 %v746, 7
        %v748 = vsub.s32 0, %v747
        %v749 = vrot.slane %v745, %v748
        %v750 = vmul.f32 %v743, %v749
        %v751 = vmul.f32 %v744, %v749
        %v752 = vadd.f32 %v727, %v750
        %v753 = vadd.f32 %v728, %v751
        %vm754 = vcmask 523264
        %755 = vst.msk [vmem:[#allocation2] sm:$0xff] %vm754, %v652
        %756 = vst.msk [vmem:[#allocation2 + $0x8] sm:$0xff] %vm754, %v655
        %v757 = vxor.u32 %v752, 2147483648
        %v758 = vxor.u32 %v753, 2147483648
        %v759 = vmul.f32 %v757, 1.442695
        %v760 = vpow.pop %v759
        %v761 = vmul.f32 %v758, 1.442695
        %v762 = vpow.pop %v761
        %v763 = vadd.f32 %v760, 1.0
        %v764 = vadd.f32 %v762, 1.0
        %v765 = vrcp.pop %v763
        %v766 = vmul.f32 1.0, %v765
        %v767 = vrcp.pop %v764
        %v768 = vmul.f32 1.0, %v767
        %v769 = vmul.f32 %v752, %v766
        %v770 = vmul.f32 %v753, %v768
        %v771 = vpack.c.bf16 %v770, %v769
        %v772 = vld [vmem:[#allocation18] sm:$0xf]
        %v773 = vld [vmem:[#allocation18 + $0x4] sm:$0xf]
        %v774 = vld [vmem:[#allocation18 + $0x8] sm:$0xf]
        %v775 = vld [vmem:[#allocation18 + $0xc] sm:$0xf]
        %v776 = vld [vmem:[#allocation18 + $0x10] sm:$0xf]
        %v777 = vld [vmem:[#allocation18 + $0x14] sm:$0xf]
        %v778 = vld [vmem:[#allocation18 + $0x18] sm:$0xf]
        %v779 = vld [vmem:[#allocation18 + $0x1c] sm:$0xf]
        %v788 = vunpack.c.l.b16 %v772
        %v789 = vunpack.c.l.b16 %v773
        %v790 = vunpack.c.l.b16 %v774
        %v791 = vunpack.c.l.b16 %v775
        %v792 = vunpack.c.l.b16 %v776
        %v793 = vunpack.c.l.b16 %v777
        %v794 = vunpack.c.l.b16 %v778
        %v795 = vunpack.c.l.b16 %v779
        %v796 = vpack.c.b16 %v789, %v788
        %v797 = vpack.c.b16 %v791, %v790
        %v798 = vpack.c.b16 %v793, %v792
        %v799 = vpack.c.b16 %v795, %v794
        %v805 = vsel %vm754, %v771, 0
        %807 = vmatprep.subr.bf16.mxu0 0
        %808 = vmatpush1.bf16.msra.mxu0 %v796
        %809 = vmatprep.subr.bf16.mxu0 0
        %810 = vmatpush1.bf16.msra.mxu0 %v797
        %811 = vmatprep.subr.bf16.mxu0 0
        %812 = vmatpush1.bf16.msra.mxu0 %v798
        %813 = vmatprep.subr.bf16.mxu0 0
        %814 = vmatpush1.bf16.msra.mxu0 %v799
        %815 = vmatprep.subr.bf16.mxu0 0
        %816 = vmatpush1.bf16.msra.mxu0 0
        %817 = vmatprep.subr.bf16.mxu0 0
        %818 = vmatpush1.bf16.msra.mxu0 0
        %819 = vmatprep.subr.bf16.mxu0 0
        %820 = vmatpush1.bf16.msra.mxu0 0
        %821 = vmatprep.subr.bf16.mxu0 0
        %822 = vmatpush1.bf16.msra.mxu0 0
        %823 = vmatprep.subr.bf16.mxu0 0
        %824 = vmatpush1.bf16.msra.mxu0 0
        %825 = vmatprep.subr.bf16.mxu0 0
        %826 = vmatpush1.bf16.msra.mxu0 0
        %827 = vmatprep.subr.bf16.mxu0 0
        %828 = vmatpush1.bf16.msra.mxu0 0
        %829 = vmatprep.subr.bf16.mxu0 0
        %830 = vmatpush1.bf16.msra.mxu0 0
        %831 = vmatprep.subr.bf16.mxu0 0
        %832 = vmatpush1.bf16.msra.mxu0 0
        %833 = vmatprep.subr.bf16.mxu0 0
        %834 = vmatpush1.bf16.msra.mxu0 0
        %835 = vmatprep.subr.bf16.mxu0 0
        %836 = vmatpush1.bf16.msra.mxu0 0
        %837 = vmatprep.subr.bf16.mxu0 0
        %838 = vmatpush1.bf16.msra.mxu0 0
        %839 = vmatprep.mubr.bf16.mxu0 0
        %840 = vmatmul.mubr.bf16.gmra.mrb[0].mxu0 %v805
        %v841 = vpop.f32.mrb[0].mxu0
        %v842 = vadd.f32 0.0, %v841
        %v843 = vpop.f32.mrb[0].mxu0
        %v844 = vpop.f32.mrb[0].mxu0
        %v845 = vadd.f32 0.0, %v844
        %v846 = vpop.f32.mrb[0].mxu0
        %847 = vdwg.mxu0
        %v848 = vpack.c.bf16 %v845, %v842
        %v849 = vld [vmem:[#allocation20] sm:$0xf]
        %v850 = vld [vmem:[#allocation21] sm:$0x1]
        %v852 = vlaneseq
        %v853 = vshrl.u32 %v852, 7
        %v854 = vsub.s32 0, %v853
        %v855 = vrot.slane %v850, %v854
        %vm857 = vcmask 64512
        %v859 = vsel %vm857, %v848, 0
        %vm861 = vcmask 1043456
        %v863 = vsel %vm861, %v849, 0
        %865 = vmatprep.subr.bf16.mxu0 0
        %866 = vmatpush1.bf16.msra.mxu0 %v863
        %867 = vmatprep.subr.bf16.mxu0 0
        %868 = vmatpush1.bf16.msra.mxu0 0
        %869 = vmatprep.subr.bf16.mxu0 0
        %870 = vmatpush1.bf16.msra.mxu0 0
        %871 = vmatprep.subr.bf16.mxu0 0
        %872 = vmatpush1.bf16.msra.mxu0 0
        %873 = vmatprep.subr.bf16.mxu0 0
        %874 = vmatpush1.bf16.msra.mxu0 0
        %875 = vmatprep.subr.bf16.mxu0 0
        %876 = vmatpush1.bf16.msra.mxu0 0
        %877 = vmatprep.subr.bf16.mxu0 0
        %878 = vmatpush1.bf16.msra.mxu0 0
        %879 = vmatprep.subr.bf16.mxu0 0
        %880 = vmatpush1.bf16.msra.mxu0 0
        %881 = vmatprep.subr.bf16.mxu0 0
        %882 = vmatpush1.bf16.msra.mxu0 0
        %883 = vmatprep.subr.bf16.mxu0 0
        %884 = vmatpush1.bf16.msra.mxu0 0
        %885 = vmatprep.subr.bf16.mxu0 0
        %886 = vmatpush1.bf16.msra.mxu0 0
        %887 = vmatprep.subr.bf16.mxu0 0
        %888 = vmatpush1.bf16.msra.mxu0 0
        %889 = vmatprep.subr.bf16.mxu0 0
        %890 = vmatpush1.bf16.msra.mxu0 0
        %891 = vmatprep.subr.bf16.mxu0 0
        %892 = vmatpush1.bf16.msra.mxu0 0
        %893 = vmatprep.subr.bf16.mxu0 0
        %894 = vmatpush1.bf16.msra.mxu0 0
        %895 = vmatprep.subr.bf16.mxu0 0
        %896 = vmatpush1.bf16.msra.mxu0 0
        %897 = vmatprep.mubr.bf16.mxu0 0
        %898 = vmatmul.mubr.bf16.gmra.mrb[0].mxu0 %v859
        %v899 = vpop.f32.mrb[0].mxu0
        %v900 = vadd.f32 %v855, %v899
        %v901 = vpop.f32.mrb[0].mxu0
        %v902 = vpop.f32.mrb[0].mxu0
        %v903 = vadd.f32 %v855, %v902
        %v904 = vpop.f32.mrb[0].mxu0
        %905 = vdwg.mxu0
        %vm906 = vcmp.gt.f32.partialorder %v900, 20.0
        %vm907 = vcmp.gt.f32.partialorder %v903, 20.0
        %v908 = vmin.f32 %v900, 20.0
        %v909 = vmin.f32 %v903, 20.0
        %v910 = vmul.f32 %v908, 1.442695
        %v911 = vpow.pop %v910
        %v912 = vmul.f32 %v909, 1.442695
        %v913 = vpow.pop %v912
        %v914 = vadd.f32 %v911, 1.0
        %v915 = vlog2.pop %v914
        %v916 = vmul.f32 %v915, 0.6931472
        %v917 = vmul.f32 -0.5, %v911
        %v918 = vadd.f32 %v917, 1.0
        %v919 = vmul.f32 %v918, %v911
        %v920 = vand.u32 2147483647, %v911
        %vm921 = vcmp.lt.f32.partialorder %v920, 0.0004427343
        %v922 = vsel %vm921, %v919, %v916
        %v923 = vadd.f32 %v913, 1.0
        %v924 = vlog2.pop %v923
        %v925 = vmul.f32 %v924, 0.6931472
        %v926 = vmul.f32 -0.5, %v913
        %v927 = vadd.f32 %v926, 1.0
        %v928 = vmul.f32 %v927, %v913
        %v929 = vand.u32 2147483647, %v913
        %vm930 = vcmp.lt.f32.partialorder %v929, 0.0004427343
        %v931 = vsel %vm930, %v928, %v925
        %v932 = vsel %vm906, %v900, %v922
        %v933 = vsel %vm907, %v903, %v931
        %934 = vst.msk [vmem:[#allocation4] sm:$0xff] %vm754, %v932
        %935 = vst.msk [vmem:[#allocation4 + $0x8] sm:$0xff] %vm754, %v933
        %936 = vst.msk [vmem:[#allocation5] sm:$0xff] %vm754, %v769
        %937 = vst.msk [vmem:[#allocation5 + $0x8] sm:$0xff] %vm754, %v770
        %940 = vrot.lane.b32.xlu0 %v842, 120
        %v941 = vpop.permute.xlu0 %940
        %942 = vrot.lane.b32.xlu0 %v845, 120
        %v943 = vpop.permute.xlu0 %942
        %vm946 = vcmask 130048
        %947 = vst.msk [vmem:[#allocation6] sm:$0xff] %vm946, %v941
        %948 = vst.msk [vmem:[#allocation6 + $0x8] sm:$0xff] %vm946, %v943
        %949 = vrot.lane.b32.xlu0 %v842, 104
        %v950 = vpop.permute.xlu0 %949
        %951 = vrot.lane.b32.xlu0 %v845, 104
        %v952 = vpop.permute.xlu0 %951
        %955 = vst.msk [vmem:[#allocation7] sm:$0xff] %vm946, %v950
        %956 = vst.msk [vmem:[#allocation7 + $0x8] sm:$0xff] %vm946, %v952
        %v957 = vld [vmem:[#allocation23] sm:$0xff]
        %v958 = vld [vmem:[#allocation23 + $0x8] sm:$0xff]
        %v959 = vld [vmem:[#allocation3] sm:$0xff]
        %v960 = vld [vmem:[#allocation3 + $0x8] sm:$0xff]
        loop: start=0, step=1, limit=2
        $region113: #{tpu_custom_call.1} parent=63 // loop_pre_header
          _
        $region114: #{tpu_custom_call.1} parent=63 // loop_header
          %s962 = sphi 0, %s966
          %p963 = scmp.ge.s32.totalorder %s962, 2
          %v967 = vphi %v959, %v1506
          %v968 = vphi %v960, %v1507
        $region115: #{tpu_custom_call.1} parent=63 // loop_header_branch
          %965 = sbr.rel (%p963) target = $region119
        $region116: #{tpu_custom_call.1} parent=63 // loop_body
          %s969 = smul.u32 %s962, 8
          %s970 = scalar_lea.vmem [#allocation4], %s969
          %v971 = vld [vmem:[%s970] sm:$0xff]
          %s972 = scalar_lea.vmem [#allocation5], %s969
          %v973 = vld [vmem:[%s972] sm:$0xff]
          %s974 = scalar_lea.vmem [#allocation6], %s969
          %v975 = vld [vmem:[%s974] sm:$0xff]
          %s976 = scalar_lea.vmem [#allocation7], %s969
          %v977 = vld [vmem:[%s976] sm:$0xff]
          %v979 = vcombine.high %v971, %v971
          %v981 = vunpack.c.l.s4 1966171168
          %v982 = vunpack.c.0.s8 %v981
          %v983 = vlaneseq
          %v984 = vshrl.u32 %v983, 7
          %v985 = vsub.s32 %v982, %v984
          %v986 = vrot.slane %v971, %v985
          %v988 = vunpack.c.l.s4 1966171168
          %v989 = vunpack.c.0.s8 %v988
          %v990 = vlaneseq
          %v991 = vshrl.u32 %v990, 7
          %v992 = vsub.s32 %v989, %v991
          %v993 = vrot.slane %v979, %v992
          %v994 = vcombine.high %v986, %v986
          %v995 = vcombine.high %v993, %v993
          %v997 = vunpack.c.l.s4 1966171168
          %v998 = vunpack.c.0.s8 %v997
          %v999 = vlaneseq
          %v1000 = vshrl.u32 %v999, 7
          %v1001 = vsub.s32 %v998, %v1000
          %v1002 = vrot.slane %v986, %v1001
          %v1004 = vunpack.c.l.s4 1966171168
          %v1005 = vunpack.c.0.s8 %v1004
          %v1006 = vlaneseq
          %v1007 = vshrl.u32 %v1006, 7
          %v1008 = vsub.s32 %v1005, %v1007
          %v1009 = vrot.slane %v993, %v1008
          %v1011 = vunpack.c.l.s4 1966171168
          %v1012 = vunpack.c.0.s8 %v1011
          %v1013 = vlaneseq
          %v1014 = vshrl.u32 %v1013, 7
          %v1015 = vsub.s32 %v1012, %v1014
          %v1016 = vrot.slane %v994, %v1015
          %v1018 = vunpack.c.l.s4 1966171168
          %v1019 = vunpack.c.0.s8 %v1018
          %v1020 = vlaneseq
          %v1021 = vshrl.u32 %v1020, 7
          %v1022 = vsub.s32 %v1019, %v1021
          %v1023 = vrot.slane %v995, %v1022
          %v1024 = vcombine.high %v1002, %v1002
          %v1025 = vcombine.high %v1009, %v1009
          %v1026 = vcombine.high %v1016, %v1016
          %v1027 = vcombine.high %v1023, %v1023
          %v1028 = vlaneseq
          %v1029 = vshrl.u32 %v1028, 7
          %v1030 = vsub.s32 0, %v1029
          %v1031 = vrot.slane %v1002, %v1030
          %v1032 = vlaneseq
          %v1033 = vshrl.u32 %v1032, 7
          %v1034 = vsub.s32 0, %v1033
          %v1035 = vrot.slane %v1016, %v1034
          %v1036 = vlaneseq
          %v1037 = vshrl.u32 %v1036, 7
          %v1038 = vsub.s32 0, %v1037
          %v1039 = vrot.slane %v1024, %v1038
          %v1040 = vlaneseq
          %v1041 = vshrl.u32 %v1040, 7
          %v1042 = vsub.s32 0, %v1041
          %v1043 = vrot.slane %v1026, %v1042
          %v1044 = vlaneseq
          %v1045 = vshrl.u32 %v1044, 7
          %v1046 = vsub.s32 0, %v1045
          %v1047 = vrot.slane %v1009, %v1046
          %v1048 = vlaneseq
          %v1049 = vshrl.u32 %v1048, 7
          %v1050 = vsub.s32 0, %v1049
          %v1051 = vrot.slane %v1023, %v1050
          %v1052 = vlaneseq
          %v1053 = vshrl.u32 %v1052, 7
          %v1054 = vsub.s32 0, %v1053
          %v1055 = vrot.slane %v1025, %v1054
          %v1056 = vlaneseq
          %v1057 = vshrl.u32 %v1056, 7
          %v1058 = vsub.s32 0, %v1057
          %v1059 = vrot.slane %v1027, %v1058
          %v1068 = vmul.f32 %v1031, %v957
          %v1069 = vmul.f32 %v1031, %v958
          %v1070 = vmul.f32 %v1035, %v957
          %v1071 = vmul.f32 %v1035, %v958
          %v1072 = vmul.f32 %v1039, %v957
          %v1073 = vmul.f32 %v1039, %v958
          %v1074 = vmul.f32 %v1043, %v957
          %v1075 = vmul.f32 %v1043, %v958
          %v1076 = vmul.f32 %v1047, %v957
          %v1077 = vmul.f32 %v1047, %v958
          %v1078 = vmul.f32 %v1051, %v957
          %v1079 = vmul.f32 %v1051, %v958
          %v1080 = vmul.f32 %v1055, %v957
          %v1081 = vmul.f32 %v1055, %v958
          %v1082 = vmul.f32 %v1059, %v957
          %v1083 = vmul.f32 %v1059, %v958
          %v1084 = vmul.f32 %v1068, 1.442695
          %v1085 = vpow.pop %v1084
          %v1086 = vmul.f32 %v1069, 1.442695
          %v1087 = vpow.pop %v1086
          %v1088 = vmul.f32 %v1070, 1.442695
          %v1089 = vpow.pop %v1088
          %v1090 = vmul.f32 %v1071, 1.442695
          %v1091 = vpow.pop %v1090
          %v1092 = vmul.f32 %v1072, 1.442695
          %v1093 = vpow.pop %v1092
          %v1094 = vmul.f32 %v1073, 1.442695
          %v1095 = vpow.pop %v1094
          %v1096 = vmul.f32 %v1074, 1.442695
          %v1097 = vpow.pop %v1096
          %v1098 = vmul.f32 %v1075, 1.442695
          %v1099 = vpow.pop %v1098
          %v1100 = vmul.f32 %v1076, 1.442695
          %v1101 = vpow.pop %v1100
          %v1102 = vmul.f32 %v1077, 1.442695
          %v1103 = vpow.pop %v1102
          %v1104 = vmul.f32 %v1078, 1.442695
          %v1105 = vpow.pop %v1104
          %v1106 = vmul.f32 %v1079, 1.442695
          %v1107 = vpow.pop %v1106
          %v1108 = vmul.f32 %v1080, 1.442695
          %v1109 = vpow.pop %v1108
          %v1110 = vmul.f32 %v1081, 1.442695
          %v1111 = vpow.pop %v1110
          %v1112 = vmul.f32 %v1082, 1.442695
          %v1113 = vpow.pop %v1112
          %v1114 = vmul.f32 %v1083, 1.442695
          %v1115 = vpow.pop %v1114
          %v1116 = vmul.f32 %v971, %v973
          %v1118 = vcombine.high %v1116, %v1116
          %v1120 = vunpack.c.l.s4 1966171168
          %v1121 = vunpack.c.0.s8 %v1120
          %v1122 = vlaneseq
          %v1123 = vshrl.u32 %v1122, 7
          %v1124 = vsub.s32 %v1121, %v1123
          %v1125 = vrot.slane %v1116, %v1124
          %v1127 = vunpack.c.l.s4 1966171168
          %v1128 = vunpack.c.0.s8 %v1127
          %v1129 = vlaneseq
          %v1130 = vshrl.u32 %v1129, 7
          %v1131 = vsub.s32 %v1128, %v1130
          %v1132 = vrot.slane %v1118, %v1131
          %v1133 = vcombine.high %v1125, %v1125
          %v1134 = vcombine.high %v1132, %v1132
          %v1136 = vunpack.c.l.s4 1966171168
          %v1137 = vunpack.c.0.s8 %v1136
          %v1138 = vlaneseq
          %v1139 = vshrl.u32 %v1138, 7
          %v1140 = vsub.s32 %v1137, %v1139
          %v1141 = vrot.slane %v1125, %v1140
          %v1143 = vunpack.c.l.s4 1966171168
          %v1144 = vunpack.c.0.s8 %v1143
          %v1145 = vlaneseq
          %v1146 = vshrl.u32 %v1145, 7
          %v1147 = vsub.s32 %v1144, %v1146
          %v1148 = vrot.slane %v1132, %v1147
          %v1150 = vunpack.c.l.s4 1966171168
          %v1151 = vunpack.c.0.s8 %v1150
          %v1152 = vlaneseq
          %v1153 = vshrl.u32 %v1152, 7
          %v1154 = vsub.s32 %v1151, %v1153
          %v1155 = vrot.slane %v1133, %v1154
          %v1157 = vunpack.c.l.s4 1966171168
          %v1158 = vunpack.c.0.s8 %v1157
          %v1159 = vlaneseq
          %v1160 = vshrl.u32 %v1159, 7
          %v1161 = vsub.s32 %v1158, %v1160
          %v1162 = vrot.slane %v1134, %v1161
          %v1163 = vcombine.high %v1141, %v1141
          %v1164 = vcombine.high %v1148, %v1148
          %v1165 = vcombine.high %v1155, %v1155
          %v1166 = vcombine.high %v1162, %v1162
          %v1167 = vlaneseq
          %v1168 = vshrl.u32 %v1167, 7
          %v1169 = vsub.s32 0, %v1168
          %v1170 = vrot.slane %v975, %v1169
          %1172 = vbcast.lane.b32.xlu0 %v1170, 256
          %v1173 = vpop.permute.xlu0 %1172
          %s1175 = sor.u32 256, 8
          %1176 = vbcast.lane.b32.xlu0 %v1170, %s1175
          %v1177 = vpop.permute.xlu0 %1176
          %v1178 = vlaneseq
          %v1179 = vshrl.u32 %v1178, 7
          %v1180 = vsub.s32 1, %v1179
          %v1181 = vrot.slane %v975, %v1180
          %1183 = vbcast.lane.b32.xlu0 %v1181, 256
          %v1184 = vpop.permute.xlu0 %1183
          %s1186 = sor.u32 256, 8
          %1187 = vbcast.lane.b32.xlu0 %v1181, %s1186
          %v1188 = vpop.permute.xlu0 %1187
          %v1189 = vlaneseq
          %v1190 = vshrl.u32 %v1189, 7
          %v1191 = vsub.s32 2, %v1190
          %v1192 = vrot.slane %v975, %v1191
          %1194 = vbcast.lane.b32.xlu0 %v1192, 256
          %v1195 = vpop.permute.xlu0 %1194
          %s1197 = sor.u32 256, 8
          %1198 = vbcast.lane.b32.xlu0 %v1192, %s1197
          %v1199 = vpop.permute.xlu0 %1198
          %v1200 = vlaneseq
          %v1201 = vshrl.u32 %v1200, 7
          %v1202 = vsub.s32 3, %v1201
          %v1203 = vrot.slane %v975, %v1202
          %1205 = vbcast.lane.b32.xlu0 %v1203, 256
          %v1206 = vpop.permute.xlu0 %1205
          %s1208 = sor.u32 256, 8
          %1209 = vbcast.lane.b32.xlu0 %v1203, %s1208
          %v1210 = vpop.permute.xlu0 %1209
          %v1211 = vlaneseq
          %v1212 = vshrl.u32 %v1211, 7
          %v1213 = vsub.s32 4, %v1212
          %v1214 = vrot.slane %v975, %v1213
          %1216 = vbcast.lane.b32.xlu0 %v1214, 256
          %v1217 = vpop.permute.xlu0 %1216
          %s1219 = sor.u32 256, 8
          %1220 = vbcast.lane.b32.xlu0 %v1214, %s1219
          %v1221 = vpop.permute.xlu0 %1220
          %v1222 = vlaneseq
          %v1223 = vshrl.u32 %v1222, 7
          %v1224 = vsub.s32 5, %v1223
          %v1225 = vrot.slane %v975, %v1224
          %1227 = vbcast.lane.b32.xlu0 %v1225, 256
          %v1228 = vpop.permute.xlu0 %1227
          %s1230 = sor.u32 256, 8
          %1231 = vbcast.lane.b32.xlu0 %v1225, %s1230
          %v1232 = vpop.permute.xlu0 %1231
          %v1233 = vlaneseq
          %v1234 = vshrl.u32 %v1233, 7
          %v1235 = vsub.s32 6, %v1234
          %v1236 = vrot.slane %v975, %v1235
          %1238 = vbcast.lane.b32.xlu0 %v1236, 256
          %v1239 = vpop.permute.xlu0 %1238
          %s1241 = sor.u32 256, 8
          %1242 = vbcast.lane.b32.xlu0 %v1236, %s1241
          %v1243 = vpop.permute.xlu0 %1242
          %v1244 = vlaneseq
          %v1245 = vshrl.u32 %v1244, 7
          %v1246 = vsub.s32 7, %v1245
          %v1247 = vrot.slane %v975, %v1246
          %1249 = vbcast.lane.b32.xlu0 %v1247, 256
          %v1250 = vpop.permute.xlu0 %1249
          %s1252 = sor.u32 256, 8
          %1253 = vbcast.lane.b32.xlu0 %v1247, %s1252
          %v1254 = vpop.permute.xlu0 %1253
          %v1255 = vlaneseq
          %v1256 = vshrl.u32 %v1255, 7
          %v1257 = vsub.s32 0, %v1256
          %v1258 = vrot.slane %v1141, %v1257
          %v1259 = vlaneseq
          %v1260 = vshrl.u32 %v1259, 7
          %v1261 = vsub.s32 0, %v1260
          %v1262 = vrot.slane %v1155, %v1261
          %v1263 = vlaneseq
          %v1264 = vshrl.u32 %v1263, 7
          %v1265 = vsub.s32 0, %v1264
          %v1266 = vrot.slane %v1163, %v1265
          %v1267 = vlaneseq
          %v1268 = vshrl.u32 %v1267, 7
          %v1269 = vsub.s32 0, %v1268
          %v1270 = vrot.slane %v1165, %v1269
          %v1271 = vlaneseq
          %v1272 = vshrl.u32 %v1271, 7
          %v1273 = vsub.s32 0, %v1272
          %v1274 = vrot.slane %v1148, %v1273
          %v1275 = vlaneseq
          %v1276 = vshrl.u32 %v1275, 7
          %v1277 = vsub.s32 0, %v1276
          %v1278 = vrot.slane %v1162, %v1277
          %v1279 = vlaneseq
          %v1280 = vshrl.u32 %v1279, 7
          %v1281 = vsub.s32 0, %v1280
          %v1282 = vrot.slane %v1164, %v1281
          %v1283 = vlaneseq
          %v1284 = vshrl.u32 %v1283, 7
          %v1285 = vsub.s32 0, %v1284
          %v1286 = vrot.slane %v1166, %v1285
          %v1295 = vmul.f32 %v1258, %v1173
          %v1296 = vmul.f32 %v1258, %v1177
          %v1297 = vmul.f32 %v1262, %v1184
          %v1298 = vmul.f32 %v1262, %v1188
          %v1299 = vmul.f32 %v1266, %v1195
          %v1300 = vmul.f32 %v1266, %v1199
          %v1301 = vmul.f32 %v1270, %v1206
          %v1302 = vmul.f32 %v1270, %v1210
          %v1303 = vmul.f32 %v1274, %v1217
          %v1304 = vmul.f32 %v1274, %v1221
          %v1305 = vmul.f32 %v1278, %v1228
          %v1306 = vmul.f32 %v1278, %v1232
          %v1307 = vmul.f32 %v1282, %v1239
          %v1308 = vmul.f32 %v1282, %v1243
          %v1309 = vmul.f32 %v1286, %v1250
          %v1310 = vmul.f32 %v1286, %v1254
          %v1311 = vlaneseq
          %v1312 = vshrl.u32 %v1311, 7
          %v1313 = vsub.s32 0, %v1312
          %v1314 = vrot.slane %v977, %v1313
          %1316 = vbcast.lane.b32.xlu0 %v1314, 256
          %v1317 = vpop.permute.xlu0 %1316
          %s1319 = sor.u32 256, 8
          %1320 = vbcast.lane.b32.xlu0 %v1314, %s1319
          %v1321 = vpop.permute.xlu0 %1320
          %v1322 = vlaneseq
          %v1323 = vshrl.u32 %v1322, 7
          %v1324 = vsub.s32 1, %v1323
          %v1325 = vrot.slane %v977, %v1324
          %1327 = vbcast.lane.b32.xlu0 %v1325, 256
          %v1328 = vpop.permute.xlu0 %1327
          %s1330 = sor.u32 256, 8
          %1331 = vbcast.lane.b32.xlu0 %v1325, %s1330
          %v1332 = vpop.permute.xlu0 %1331
          %v1333 = vlaneseq
          %v1334 = vshrl.u32 %v1333, 7
          %v1335 = vsub.s32 2, %v1334
          %v1336 = vrot.slane %v977, %v1335
          %1338 = vbcast.lane.b32.xlu0 %v1336, 256
          %v1339 = vpop.permute.xlu0 %1338
          %s1341 = sor.u32 256, 8
          %1342 = vbcast.lane.b32.xlu0 %v1336, %s1341
          %v1343 = vpop.permute.xlu0 %1342
          %v1344 = vlaneseq
          %v1345 = vshrl.u32 %v1344, 7
          %v1346 = vsub.s32 3, %v1345
          %v1347 = vrot.slane %v977, %v1346
          %1349 = vbcast.lane.b32.xlu0 %v1347, 256
          %v1350 = vpop.permute.xlu0 %1349
          %s1352 = sor.u32 256, 8
          %1353 = vbcast.lane.b32.xlu0 %v1347, %s1352
          %v1354 = vpop.permute.xlu0 %1353
          %v1355 = vlaneseq
          %v1356 = vshrl.u32 %v1355, 7
          %v1357 = vsub.s32 4, %v1356
          %v1358 = vrot.slane %v977, %v1357
          %1360 = vbcast.lane.b32.xlu0 %v1358, 256
          %v1361 = vpop.permute.xlu0 %1360
          %s1363 = sor.u32 256, 8
          %1364 = vbcast.lane.b32.xlu0 %v1358, %s1363
          %v1365 = vpop.permute.xlu0 %1364
          %v1366 = vlaneseq
          %v1367 = vshrl.u32 %v1366, 7
          %v1368 = vsub.s32 5, %v1367
          %v1369 = vrot.slane %v977, %v1368
          %1371 = vbcast.lane.b32.xlu0 %v1369, 256
          %v1372 = vpop.permute.xlu0 %1371
          %s1374 = sor.u32 256, 8
          %1375 = vbcast.lane.b32.xlu0 %v1369, %s1374
          %v1376 = vpop.permute.xlu0 %1375
          %v1377 = vlaneseq
          %v1378 = vshrl.u32 %v1377, 7
          %v1379 = vsub.s32 6, %v1378
          %v1380 = vrot.slane %v977, %v1379
          %1382 = vbcast.lane.b32.xlu0 %v1380, 256
          %v1383 = vpop.permute.xlu0 %1382
          %s1385 = sor.u32 256, 8
          %1386 = vbcast.lane.b32.xlu0 %v1380, %s1385
          %v1387 = vpop.permute.xlu0 %1386
          %v1388 = vlaneseq
          %v1389 = vshrl.u32 %v1388, 7
          %v1390 = vsub.s32 7, %v1389
          %v1391 = vrot.slane %v977, %v1390
          %1393 = vbcast.lane.b32.xlu0 %v1391, 256
          %v1394 = vpop.permute.xlu0 %1393
          %s1396 = sor.u32 256, 8
          %1397 = vbcast.lane.b32.xlu0 %v1391, %s1396
          %v1398 = vpop.permute.xlu0 %1397
          %v1399 = vmul.f32 %v1085, %v967
          %v1400 = vmul.f32 %v1087, %v968
          %v1401 = vadd.f32 %v1399, %v1295
          %v1402 = vadd.f32 %v1400, %v1296
          %v1403 = vmul.f32 %v1401, %v1317
          %v1404 = vmul.f32 %v1402, %v1321
          %v1405 = vsel %vm754, %v1403, 0.0
          %v1406 = vsel %vm754, %v1404, 0.0
          %v1407 = vadd.f32 %v1405, %v1406
          %v1408 = vrot.slane %v1407, 4
          %v1409 = vadd.f32 %v1407, %v1408
          %v1410 = vrot.slane %v1409, 2
          %v1411 = vadd.f32 %v1409, %v1410
          %v1412 = vrot.slane %v1411, 1
          %v1413 = vadd.f32 %v1411, %v1412
          %v1414 = vmul.f32 %v1089, %v1401
          %v1415 = vmul.f32 %v1091, %v1402
          %v1416 = vadd.f32 %v1414, %v1297
          %v1417 = vadd.f32 %v1415, %v1298
          %v1418 = vmul.f32 %v1416, %v1328
          %v1419 = vmul.f32 %v1417, %v1332
          %v1420 = vsel %vm754, %v1418, 0.0
          %v1421 = vsel %vm754, %v1419, 0.0
          %v1422 = vadd.f32 %v1420, %v1421
          %v1423 = vrot.slane %v1422, 4
          %v1424 = vadd.f32 %v1422, %v1423
          %v1425 = vrot.slane %v1424, 2
          %v1426 = vadd.f32 %v1424, %v1425
          %v1427 = vrot.slane %v1426, 1
          %v1428 = vadd.f32 %v1426, %v1427
          %v1429 = vmul.f32 %v1093, %v1416
          %v1430 = vmul.f32 %v1095, %v1417
          %v1431 = vadd.f32 %v1429, %v1299
          %v1432 = vadd.f32 %v1430, %v1300
          %v1433 = vmul.f32 %v1431, %v1339
          %v1434 = vmul.f32 %v1432, %v1343
          %v1435 = vsel %vm754, %v1433, 0.0
          %v1436 = vsel %vm754, %v1434, 0.0
          %v1437 = vadd.f32 %v1435, %v1436
          %v1438 = vrot.slane %v1437, 4
          %v1439 = vadd.f32 %v1437, %v1438
          %v1440 = vrot.slane %v1439, 2
          %v1441 = vadd.f32 %v1439, %v1440
          %v1442 = vrot.slane %v1441, 1
          %v1443 = vadd.f32 %v1441, %v1442
          %v1444 = vmul.f32 %v1097, %v1431
          %v1445 = vmul.f32 %v1099, %v1432
          %v1446 = vadd.f32 %v1444, %v1301
          %v1447 = vadd.f32 %v1445, %v1302
          %v1448 = vmul.f32 %v1446, %v1350
          %v1449 = vmul.f32 %v1447, %v1354
          %v1450 = vsel %vm754, %v1448, 0.0
          %v1451 = vsel %vm754, %v1449, 0.0
          %v1452 = vadd.f32 %v1450, %v1451
          %v1453 = vrot.slane %v1452, 4
          %v1454 = vadd.f32 %v1452, %v1453
          %v1455 = vrot.slane %v1454, 2
          %v1456 = vadd.f32 %v1454, %v1455
          %v1457 = vrot.slane %v1456, 1
          %v1458 = vadd.f32 %v1456, %v1457
          %v1459 = vmul.f32 %v1101, %v1446
          %v1460 = vmul.f32 %v1103, %v1447
          %v1461 = vadd.f32 %v1459, %v1303
          %v1462 = vadd.f32 %v1460, %v1304
          %v1463 = vmul.f32 %v1461, %v1361
          %v1464 = vmul.f32 %v1462, %v1365
          %v1465 = vsel %vm754, %v1463, 0.0
          %v1466 = vsel %vm754, %v1464, 0.0
          %v1467 = vadd.f32 %v1465, %v1466
          %v1468 = vrot.slane %v1467, 4
          %v1469 = vadd.f32 %v1467, %v1468
          %v1470 = vrot.slane %v1469, 2
          %v1471 = vadd.f32 %v1469, %v1470
          %v1472 = vrot.slane %v1471, 1
          %v1473 = vadd.f32 %v1471, %v1472
          %v1474 = vmul.f32 %v1105, %v1461
          %v1475 = vmul.f32 %v1107, %v1462
          %v1476 = vadd.f32 %v1474, %v1305
          %v1477 = vadd.f32 %v1475, %v1306
          %v1478 = vmul.f32 %v1476, %v1372
          %v1479 = vmul.f32 %v1477, %v1376
          %v1480 = vsel %vm754, %v1478, 0.0
          %v1481 = vsel %vm754, %v1479, 0.0
          %v1482 = vadd.f32 %v1480, %v1481
          %v1483 = vrot.slane %v1482, 4
          %v1484 = vadd.f32 %v1482, %v1483
          %v1485 = vrot.slane %v1484, 2
          %v1486 = vadd.f32 %v1484, %v1485
          %v1487 = vrot.slane %v1486, 1
          %v1488 = vadd.f32 %v1486, %v1487
          %v1489 = vmul.f32 %v1109, %v1476
          %v1490 = vmul.f32 %v1111, %v1477
          %v1491 = vadd.f32 %v1489, %v1307
          %v1492 = vadd.f32 %v1490, %v1308
          %v1493 = vmul.f32 %v1491, %v1383
          %v1494 = vmul.f32 %v1492, %v1387
          %v1495 = vsel %vm754, %v1493, 0.0
          %v1496 = vsel %vm754, %v1494, 0.0
          %v1497 = vadd.f32 %v1495, %v1496
          %v1498 = vrot.slane %v1497, 4
          %v1499 = vadd.f32 %v1497, %v1498
          %v1500 = vrot.slane %v1499, 2
          %v1501 = vadd.f32 %v1499, %v1500
          %v1502 = vrot.slane %v1501, 1
          %v1503 = vadd.f32 %v1501, %v1502
          %v1504 = vmul.f32 %v1113, %v1491
          %v1505 = vmul.f32 %v1115, %v1492
          %v1506 = vadd.f32 %v1504, %v1309
          %v1507 = vadd.f32 %v1505, %v1310
          %v1508 = vmul.f32 %v1506, %v1394
          %v1509 = vmul.f32 %v1507, %v1398
          %v1510 = vsel %vm754, %v1508, 0.0
          %v1511 = vsel %vm754, %v1509, 0.0
          %v1512 = vadd.f32 %v1510, %v1511
          %v1513 = vrot.slane %v1512, 4
          %v1514 = vadd.f32 %v1512, %v1513
          %v1515 = vrot.slane %v1514, 2
          %v1516 = vadd.f32 %v1514, %v1515
          %v1517 = vrot.slane %v1516, 1
          %v1518 = vadd.f32 %v1516, %v1517
          %vm1519 = vcmask 1040384
          %v1520 = vsel %vm1519, %v1413, %v1428
          %vm1521 = vcmask 1041408
          %v1522 = vsel %vm1521, %v1520, %v1443
          %vm1523 = vcmask 1042432
          %v1524 = vsel %vm1523, %v1522, %v1458
          %v1525 = vsel %vm861, %v1524, %v1473
          %vm1526 = vcmask 1044480
          %v1527 = vsel %vm1526, %v1525, %v1488
          %vm1528 = vcmask 1045504
          %v1529 = vsel %vm1528, %v1527, %v1503
          %vm1530 = vcmask 1046528
          %v1531 = vsel %vm1530, %v1529, %v1518
          %s1532 = scalar_lea.vmem [#allocation8], %s969
          %1533 = vst.msk [vmem:[%s1532] sm:$0xff] %vm754, %v1531
        $region117: #{tpu_custom_call.1} parent=63 // loop_footer
          %s966 = sadd.s32 1, %s962
        $region118: #{tpu_custom_call.1} parent=63 // loop_footer_branch
          %961 = sbr.rel target = $region114
        $region119: #{tpu_custom_call.1} parent=63 // loop_exit
          _
        %1534 = vst.msk [vmem:[#allocation3] sm:$0xff] %vm754, %v967
        %1535 = vst.msk [vmem:[#allocation3 + $0x8] sm:$0xff] %vm754, %v968
        %v1536 = vld [vmem:[#allocation8] sm:$0xff]
        %v1537 = vld [vmem:[#allocation8 + $0x8] sm:$0xff]
        %v1538 = vld [vmem:[#allocation24] sm:$0x1]
        %v1540 = vlaneseq
        %v1541 = vshrl.u32 %v1540, 7
        %v1542 = vsub.s32 0, %v1541
        %v1543 = vrot.slane %v1538, %v1542
        %v1545 = vmul.f32 %v1543, %v769
        %v1546 = vmul.f32 %v1543, %v770
        %v1547 = vadd.f32 %v1536, %v1545
        %v1548 = vadd.f32 %v1537, %v1546
        %v1549 = vxor.u32 %v652, 2147483648
        %v1550 = vxor.u32 %v655, 2147483648
        %v1551 = vmul.f32 %v1549, 1.442695
        %v1552 = vpow.pop %v1551
        %v1553 = vmul.f32 %v1550, 1.442695
        %v1554 = vpow.pop %v1553
        %v1555 = vadd.f32 %v1552, 1.0
        %v1556 = vadd.f32 %v1554, 1.0
        %v1557 = vrcp.pop %v1555
        %v1558 = vmul.f32 1.0, %v1557
        %v1559 = vrcp.pop %v1556
        %v1560 = vmul.f32 1.0, %v1559
        %v1561 = vmul.f32 %v652, %v1558
        %v1562 = vmul.f32 %v655, %v1560
        %1565 = vrot.lane.b32.xlu0 %v1561, 64
        %v1566 = vpop.permute.xlu0 %1565
        %1567 = vrot.lane.b32.xlu0 %v1562, 64
        %v1568 = vpop.permute.xlu0 %1567
        %v1571 = vmul.f32 %v1547, %v1566
        %v1572 = vmul.f32 %v1548, %v1568
        %v1573 = vpack.c.bf16 %v1572, %v1571
        %v1574 = vld [vmem:[#allocation26] sm:$0xf]
        %v1575 = vld [vmem:[#allocation26 + $0x4] sm:$0xf]
        %v1576 = vld [vmem:[#allocation26 + $0x8] sm:$0xf]
        %v1577 = vld [vmem:[#allocation26 + $0xc] sm:$0xf]
        %v1578 = vld [vmem:[#allocation26 + $0x10] sm:$0xf]
        %v1579 = vld [vmem:[#allocation26 + $0x14] sm:$0xf]
        %v1580 = vld [vmem:[#allocation26 + $0x18] sm:$0xf]
        %v1581 = vld [vmem:[#allocation26 + $0x1c] sm:$0xf]
        %v1590 = vunpack.c.l.b16 %v1574
        %v1591 = vunpack.c.l.b16 %v1575
        %v1592 = vunpack.c.l.b16 %v1576
        %v1593 = vunpack.c.l.b16 %v1577
        %v1594 = vunpack.c.l.b16 %v1578
        %v1595 = vunpack.c.l.b16 %v1579
        %v1596 = vunpack.c.l.b16 %v1580
        %v1597 = vunpack.c.l.b16 %v1581
        %v1598 = vpack.c.b16 %v1591, %v1590
        %v1599 = vpack.c.b16 %v1593, %v1592
        %v1600 = vpack.c.b16 %v1595, %v1594
        %v1601 = vpack.c.b16 %v1597, %v1596
        %v1607 = vsel %vm754, %v1573, 0
        %1609 = vmatprep.subr.bf16.mxu0 0
        %1610 = vmatpush1.bf16.msra.mxu0 %v1598
        %1611 = vmatprep.subr.bf16.mxu0 0
        %1612 = vmatpush1.bf16.msra.mxu0 %v1599
        %1613 = vmatprep.subr.bf16.mxu0 0
        %1614 = vmatpush1.bf16.msra.mxu0 %v1600
        %1615 = vmatprep.subr.bf16.mxu0 0
        %1616 = vmatpush1.bf16.msra.mxu0 %v1601
        %1617 = vmatprep.subr.bf16.mxu0 0
        %1618 = vmatpush1.bf16.msra.mxu0 0
        %1619 = vmatprep.subr.bf16.mxu0 0
        %1620 = vmatpush1.bf16.msra.mxu0 0
        %1621 = vmatprep.subr.bf16.mxu0 0
        %1622 = vmatpush1.bf16.msra.mxu0 0
        %1623 = vmatprep.subr.bf16.mxu0 0
        %1624 = vmatpush1.bf16.msra.mxu0 0
        %1625 = vmatprep.subr.bf16.mxu0 0
        %1626 = vmatpush1.bf16.msra.mxu0 0
        %1627 = vmatprep.subr.bf16.mxu0 0
        %1628 = vmatpush1.bf16.msra.mxu0 0
        %1629 = vmatprep.subr.bf16.mxu0 0
        %1630 = vmatpush1.bf16.msra.mxu0 0
        %1631 = vmatprep.subr.bf16.mxu0 0
        %1632 = vmatpush1.bf16.msra.mxu0 0
        %1633 = vmatprep.subr.bf16.mxu0 0
        %1634 = vmatpush1.bf16.msra.mxu0 0
        %1635 = vmatprep.subr.bf16.mxu0 0
        %1636 = vmatpush1.bf16.msra.mxu0 0
        %1637 = vmatprep.subr.bf16.mxu0 0
        %1638 = vmatpush1.bf16.msra.mxu0 0
        %1639 = vmatprep.subr.bf16.mxu0 0
        %1640 = vmatpush1.bf16.msra.mxu0 0
        %1641 = vmatprep.mubr.bf16.mxu0 0
        %1642 = vmatmul.mubr.bf16.gmra.mrb[0].mxu0 %v1607
        %v1643 = vpop.f32.mrb[0].mxu0
        %v1644 = vadd.f32 0.0, %v1643
        %v1645 = vpop.f32.mrb[0].mxu0
        %v1646 = vpop.f32.mrb[0].mxu0
        %v1647 = vadd.f32 0.0, %v1646
        %v1648 = vpop.f32.mrb[0].mxu0
        %1649 = vdwg.mxu0
        %v1650 = vadd.f32 %v568, %v1644
        %v1651 = vadd.f32 %v569, %v1647
        %1652 = vst.msk [vmem:[%s555] sm:$0xff] %vm572, %v1650
        %1653 = vst.msk [vmem:[%s555 + $0x8] sm:$0xff] %vm572, %v1651
        %s1654 = sand.u32 %s293, 1
        %s1655 = scalar_lea.sflag [#allocation11], %s1654
        %s1656 = sand.u32 %s293, 1
        %s1657 = smul.addr %s1656, 16
        %s1658 = scalar_lea.vmem [#allocation27], %s1657
        // Predicated region
        $region120: #{tpu_custom_call.1} parent=63 // pred_check
          %p1659 = pneg %p303
        $region121: #{tpu_custom_call.1} parent=63 // pred_check_branch
          %1661 = sbr.rel (%p1659) target = $region123
        $region122: #{tpu_custom_call.1} parent=63 // pred_region
          %s1662 = smul.u32 2, %s38
          %s1664 = ssub.s32 256, 256
          %1665 = vsyncadd %s1655, %s1664
          %s1666 = smul.addr %s37, 4
          %s1667 = sadd.s32 %s1662, %s1666
          %s1668 = smul.addr %s1667, 128
          %s1669 = scalar_lea.hbm %s11, %s1668
          %s1670 = sshll.u32 %s1658, 4
          %s1671 = int_to_ptr.vmem [resolvable:$true] %s1670
          %1676 = dma.vmem_to_hbm [thread:$0]  %s1671, 256, %s1669, %s1655, 128, 128, 8
        $region123: #{tpu_custom_call.1} parent=63 // pred_fallthru
          _
      $region64: #{tpu_custom_call.1} parent=5 // pred_fallthru
        _
      %p1677 = scmp.le.s32.totalorder 2, %s28
      // Predicated region
      $region124: #{tpu_custom_call.1} parent=5 // pred_check
        %p1678 = pneg %p1677
      $region125: #{tpu_custom_call.1} parent=5 // pred_check_branch
        %1680 = sbr.rel (%p1678) target = $region127
      $region126: #{tpu_custom_call.1} parent=5 // pred_region
        %s1681 = ssub.s32 %s28, 2
        // Predicated region
        $region128: #{tpu_custom_call.1} parent=126 // pred_check
          %p1682 = pneg %p309
        $region129: #{tpu_custom_call.1} parent=126 // pred_check_branch
          %1684 = sbr.rel (%p1682) target = $region131
        $region130: #{tpu_custom_call.1} parent=126 // pred_region
          %s1685 = sand.u32 %s294, 1
          %s1686 = scalar_lea.sflag [#allocation11], %s1685
          %s1687 = sand.u32 %s294, 1
          %s1688 = smul.addr %s1687, 16
          %s1689 = scalar_lea.vmem [#allocation27], %s1688
          %1690 = dma.done %s1686, 256
        $region131: #{tpu_custom_call.1} parent=126 // pred_fallthru
          _
      $region127: #{tpu_custom_call.1} parent=5 // pred_fallthru
        _
    $region6: #{tpu_custom_call.1} parent=1 // loop_footer
      %s32 = sadd.s32 1, %s28
    $region7: #{tpu_custom_call.1} parent=1 // loop_footer_branch
      %27 = sbr.rel target = $region3
    $region8: #{tpu_custom_call.1} parent=1 // loop_exit
      _
    %1691 = vsyncpa [#allocation10], 1
    %s1692 = scalar_lea.sflag [#allocation10], 1
    %1693 = vsyncpa %s1692, 1
    %1694 = vsyncpa [#allocation13], 1
    %1695 = vsyncpa [#allocation16], 1
    %1696 = vsyncpa [#allocation19], 1
    %1697 = vsyncpa [#allocation22], 1
    %1698 = vsyncpa [#allocation25], 1
    %1699 = vsyncpa [#allocation11], 1
    %s1700 = scalar_lea.sflag [#allocation11], 1
    %1701 = vsyncpa %s1700, 1

// kernel: tpu_custom_call.1
$region0: #{tpu_custom_call.1}
  #allocation0 [shape = 'u32[]', space=smem, size = 0x4, offset = 0x4, fixed_abs, tag = 'smem constant byte address 0x4 - core index']
  #allocation1 [shape = 'u32[144,128]{1,0:T(1,128)}', space=vmem, size = 0x12000, scoped, tag = 'internal scratch']
  #allocation2 [shape = 'f32[16,64]{1,0:T(8,128)}', space=vmem, size = 0x2000, scoped, tag = 'scratch operand']
  #allocation3 [shape = 'f32[16,64]{1,0:T(8,128)}', space=vmem, size = 0x2000, scoped, tag = 'scratch operand']
  #allocation4 [shape = 'f32[16,64]{1,0:T(8,128)}', space=vmem, size = 0x2000, scoped, tag = 'scratch operand']
  #allocation5 [shape = 'f32[16,64]{1,0:T(8,128)}', space=vmem, size = 0x2000, scoped, tag = 'scratch operand']
  #allocation6 [shape = 'f32[16,16]{1,0:T(8,128)}', space=vmem, size = 0x2000, scoped, tag = 'scratch operand']
  #allocation7 [shape = 'f32[16,16]{1,0:T(8,128)}', space=vmem, size = 0x2000, scoped, tag = 'scratch operand']
  #allocation8 [shape = 'f32[16,64]{1,0:T(8,128)}', space=vmem, size = 0x2000, scoped, tag = 'scratch operand']
  %s0 = inlined_call_operand.hbm [shape: f32[2,32,32], index: 0, kind: input, shape index: {}]
  %s1 = inlined_call_operand.hbm [shape: f32[1,32], index: 1, kind: input, shape index: {}]
  %s2 = inlined_call_operand.hbm [shape: bf16[32,128], index: 2, kind: input, shape index: {}]
  %s3 = inlined_call_operand.hbm [shape: f32[4,64], index: 3, kind: input, shape index: {}]
  %s4 = inlined_call_operand.hbm [shape: f32[1,64], index: 4, kind: input, shape index: {}]
  %s5 = inlined_call_operand.hbm [shape: bf16[64,40], index: 5, kind: input, shape index: {}]
  %s6 = inlined_call_operand.hbm [shape: bf16[8,64], index: 6, kind: input, shape index: {}]
  %s7 = inlined_call_operand.hbm [shape: f32[1,64], index: 7, kind: input, shape index: {}]
  %s8 = inlined_call_operand.hbm [shape: f32[16,64], index: 8, kind: input, shape index: {}]
  %s9 = inlined_call_operand.hbm [shape: f32[1,64], index: 9, kind: input, shape index: {}]
  %s10 = inlined_call_operand.hbm [shape: bf16[64,32], index: 10, kind: input, shape index: {}]
  %s11 = inlined_call_operand.hbm [shape: f32[2,32,32], index: 11, kind: output, shape index: {}]
  %s12 = sld [smem:[#allocation0]]
  $region132: #{tpu_custom_call.1} parent=0
    _
  %s14 = ssub.s32 1, %s12
  %s15 = scalar_select 0, %s14, %s12
  $region1: #{tpu_custom_call.1} parent=0
    #allocation9 [shape = 'u8[16384]{0}', space=vmem, size = 0x4000, scoped, tag = 'input window, operand 0']
    #allocation10 [shape = 's32[2]{0}', space=sflag, size = 0x8, scoped, tag = 'scoped memory for tpu_custom_call.1']
    #allocation11 [shape = 's32[2]{0}', space=sflag, size = 0x8, scoped, tag = 'scoped memory for tpu_custom_call.1']
    #allocation12 [shape = 'u8[512]{0}', space=vmem, size = 0x400, scoped, tag = 'input window, operand 1, single buffered']
    #allocation13 [shape = 's32[1]{0}', space=sflag, size = 0x4, scoped, tag = 'scoped memory for tpu_custom_call.1']
    #allocation14 [shape = 'u8[8192]{0}', space=vmem, size = 0x2000, scoped, tag = 'input window, operand 2, single buffered']
    #allocation15 [shape = 'u8[2048]{0}', space=vmem, size = 0x800, scoped, tag = 'input window, operand 3, single buffered']
    #allocation16 [shape = 's32[1]{0}', space=sflag, size = 0x4, scoped, tag = 'scoped memory for tpu_custom_call.1']
    #allocation17 [shape = 'u8[512]{0}', space=vmem, size = 0x400, scoped, tag = 'input window, operand 4, single buffered']
    #allocation18 [shape = 'u8[16384]{0}', space=vmem, size = 0x4000, scoped, tag = 'input window, operand 5, single buffered']
    #allocation19 [shape = 's32[1]{0}', space=sflag, size = 0x4, scoped, tag = 'scoped memory for tpu_custom_call.1']
    #allocation20 [shape = 'u8[2048]{0}', space=vmem, size = 0x800, scoped, tag = 'input window, operand 6, single buffered']
    #allocation21 [shape = 'u8[512]{0}', space=vmem, size = 0x400, scoped, tag = 'input window, operand 7, single buffered']
    #allocation22 [shape = 's32[1]{0}', space=sflag, size = 0x4, scoped, tag = 'scoped memory for tpu_custom_call.1']
    #allocation23 [shape = 'u8[8192]{0}', space=vmem, size = 0x2000, scoped, tag = 'input window, operand 8, single buffered']
    #allocation24 [shape = 'u8[512]{0}', space=vmem, size = 0x400, scoped, tag = 'input window, operand 9, single buffered']
    #allocation25 [shape = 's32[1]{0}', space=sflag, size = 0x4, scoped, tag = 'scoped memory for tpu_custom_call.1']
    #allocation26 [shape = 'u8[16384]{0}', space=vmem, size = 0x4000, scoped, tag = 'input window, operand 10, single buffered']
    #allocation27 [shape = 'u8[16384]{0}', space=vmem, size = 0x4000, scoped, tag = 'output window, operand 0']
    %16 = vsyncpa [#allocation10], 0
    %s17 = scalar_lea.sflag [#allocation10], 1
    %18 = vsyncpa %s17, 0
    %19 = vsyncpa [#allocation13], 0
    %20 = vsyncpa [#allocation16], 0
    %21 = vsyncpa [#allocation19], 0
    %22 = vsyncpa [#allocation22], 0
    %23 = vsyncpa [#allocation25], 0
    %24 = vsyncpa [#allocation11], 0
    %s25 = scalar_lea.sflag [#allocation11], 1
    %26 = vsyncpa %s25, 0
    loop: start=0, step=1, limit=6
    $region2: #{tpu_custom_call.1} parent=1 // loop_pre_header
      _
    $region3: #{tpu_custom_call.1} parent=1 // loop_header
      %s28 = sphi 0, %s32
      %p29 = scmp.ge.s32.totalorder %s28, 6
      %s35 = sphi 0, %s47
      %s36 = sphi 0, %s43
      %s37 = sphi 0, %s35
      %s38 = sphi 0, %s36
      %s39 = sphi 0, %s37
      %s40 = sphi 0, %s38
      %s52 = sphi 0, %s54
      %s55 = sphi 0, %s52
      %s56 = sphi 0, %s55
      %s72 = sphi 0, %s56
      %s76 = sphi 0, %s76
      %s78 = sphi 0, %s76
      %s79 = sphi 0, %s78
      %s93 = sphi 0, %s79
      %s97 = sphi 0, %s97
      %s99 = sphi 0, %s97
      %s100 = sphi 0, %s99
      %s114 = sphi 0, %s100
      %s118 = sphi 0, %s118
      %s120 = sphi 0, %s118
      %s121 = sphi 0, %s120
      %s135 = sphi 0, %s121
      %s139 = sphi 0, %s139
      %s141 = sphi 0, %s139
      %s142 = sphi 0, %s141
      %s156 = sphi 0, %s142
      %s160 = sphi 0, %s160
      %s162 = sphi 0, %s160
      %s163 = sphi 0, %s162
      %s177 = sphi 0, %s163
      %s181 = sphi 0, %s181
      %s183 = sphi 0, %s181
      %s184 = sphi 0, %s183
      %s198 = sphi 0, %s184
      %s202 = sphi 0, %s202
      %s204 = sphi 0, %s202
      %s205 = sphi 0, %s204
      %s219 = sphi 0, %s205
      %s223 = sphi 0, %s223
      %s225 = sphi 0, %s223
      %s226 = sphi 0, %s225
      %s240 = sphi 0, %s226
      %s244 = sphi 0, %s244
      %s246 = sphi 0, %s244
      %s247 = sphi 0, %s246
      %s261 = sphi 0, %s247
      %s265 = sphi 0, %s265
      %s267 = sphi 0, %s265
      %s268 = sphi 0, %s267
      %s282 = sphi 0, %s268
      %s290 = sphi 0, %s292
      %s293 = sphi 0, %s290
      %s294 = sphi 0, %s293
      %s310 = sphi 0, %s294
    $region4: #{tpu_custom_call.1} parent=1 // loop_header_branch
      %31 = sbr.rel (%p29) target = $region8
    $region5: #{tpu_custom_call.1} parent=1 // loop_body
      %s33 = ssub.s32 %s28, 1
      %s34 = ssub.s32 %s28, 2
      %s41 = sadd.s32 1, %s36
      %p42 = scmp.ge.s32.totalorder %s41, 2
      %s43 = scalar_select %p42, 0, %s41
      %s44 = sadd.s32 1, %s35
      %s45 = scalar_select %p42, %s44, %s35
      %p46 = scmp.ge.s32.totalorder %s45, 2
      %s47 = scalar_select %p46, 0, %s45
      %s48 = ssub.s32 %s35, %s47
      %s49 = ssub.s32 %s36, %s43
      %s50 = sor.u32 %s48, %s49
      %p51 = scmp.eq.s32.totalorder %s50, 0
      %s53 = sadd.s32 %s52, 1
      %s54 = scalar_select %p51, %s52, %s53
      %p57 = pneg %p51
      %p58 = scmp.eq.s32.totalorder %s28, 3
      %p59 = por %p57, %p58
      %p60 = scmp.ne.s32.totalorder %s52, %s55
      %p61 = scmp.eq.s32.totalorder %s28, 0
      %p62 = por %p60, %p61
      %p63 = scmp.ne.s32.totalorder %s52, %s55
      %p64 = scmp.eq.s32.totalorder %s33, 3
      %p65 = por %p63, %p64
      %p66 = scmp.ne.s32.totalorder %s55, %s56
      %p67 = scmp.eq.s32.totalorder %s33, 0
      %p68 = por %p66, %p67
      %p69 = scmp.ne.s32.totalorder %s55, %s56
      %p70 = scmp.eq.s32.totalorder %s34, 3
      %p71 = por %p69, %p70
      %p73 = scmp.ne.s32.totalorder %s56, %s72
      %p74 = scmp.eq.s32.totalorder %s34, 0
      %p75 = por %p73, %p74
      %s77 = sadd.s32 %s76, 1
      %p80 = scmp.eq.s32.totalorder %s28, 3
      %p81 = scmp.ne.s32.totalorder %s76, %s78
      %p82 = scmp.eq.s32.totalorder %s28, 0
      %p83 = por %p81, %p82
      %p84 = scmp.ne.s32.totalorder %s76, %s78
      %p85 = scmp.eq.s32.totalorder %s33, 3
      %p86 = por %p84, %p85
      %p87 = scmp.ne.s32.totalorder %s78, %s79
      %p88 = scmp.eq.s32.totalorder %s33, 0
      %p89 = por %p87, %p88
      %p90 = scmp.ne.s32.totalorder %s78, %s79
      %p91 = scmp.eq.s32.totalorder %s34, 3
      %p92 = por %p90, %p91
      %p94 = scmp.ne.s32.totalorder %s79, %s93
      %p95 = scmp.eq.s32.totalorder %s34, 0
      %p96 = por %p94, %p95
      %s98 = sadd.s32 %s97, 1
      %p101 = scmp.eq.s32.totalorder %s28, 3
      %p102 = scmp.ne.s32.totalorder %s97, %s99
      %p103 = scmp.eq.s32.totalorder %s28, 0
      %p104 = por %p102, %p103
      %p105 = scmp.ne.s32.totalorder %s97, %s99
      %p106 = scmp.eq.s32.totalorder %s33, 3
      %p107 = por %p105, %p106
      %p108 = scmp.ne.s32.totalorder %s99, %s100
      %p109 = scmp.eq.s32.totalorder %s33, 0
      %p110 = por %p108, %p109
      %p111 = scmp.ne.s32.totalorder %s99, %s100
      %p112 = scmp.eq.s32.totalorder %s34, 3
      %p113 = por %p111, %p112
      %p115 = scmp.ne.s32.totalorder %s100, %s114
      %p116 = scmp.eq.s32.totalorder %s34, 0
      %p117 = por %p115, %p116
      %s119 = sadd.s32 %s118, 1
      %p122 = scmp.eq.s32.totalorder %s28, 3
      %p123 = scmp.ne.s32.totalorder %s118, %s120
      %p124 = scmp.eq.s32.totalorder %s28, 0
      %p125 = por %p123, %p124
      %p126 = scmp.ne.s32.totalorder %s118, %s120
      %p127 = scmp.eq.s32.totalorder %s33, 3
      %p128 = por %p126, %p127
      %p129 = scmp.ne.s32.totalorder %s120, %s121
      %p130 = scmp.eq.s32.totalorder %s33, 0
      %p131 = por %p129, %p130
      %p132 = scmp.ne.s32.totalorder %s120, %s121
      %p133 = scmp.eq.s32.totalorder %s34, 3
      %p134 = por %p132, %p133
      %p136 = scmp.ne.s32.totalorder %s121, %s135
      %p137 = scmp.eq.s32.totalorder %s34, 0
      %p138 = por %p136, %p137
      %s140 = sadd.s32 %s139, 1
      %p143 = scmp.eq.s32.totalorder %s28, 3
      %p144 = scmp.ne.s32.totalorder %s139, %s141
      %p145 = scmp.eq.s32.totalorder %s28, 0
      %p146 = por %p144, %p145
      %p147 = scmp.ne.s32.totalorder %s139, %s141
      %p148 = scmp.eq.s32.totalorder %s33, 3
      %p149 = por %p147, %p148
      %p150 = scmp.ne.s32.totalorder %s141, %s142
      %p151 = scmp.eq.s32.totalorder %s33, 0
      %p152 = por %p150, %p151
      %p153 = scmp.ne.s32.totalorder %s141, %s142
      %p154 = scmp.eq.s32.totalorder %s34, 3
      %p155 = por %p153, %p154
      %p157 = scmp.ne.s32.totalorder %s142, %s156
      %p158 = scmp.eq.s32.totalorder %s34, 0
      %p159 = por %p157, %p158
      %s161 = sadd.s32 %s160, 1
      %p164 = scmp.eq.s32.totalorder %s28, 3
      %p165 = scmp.ne.s32.totalorder %s160, %s162
      %p166 = scmp.eq.s32.totalorder %s28, 0
      %p167 = por %p165, %p166
      %p168 = scmp.ne.s32.totalorder %s160, %s162
      %p169 = scmp.eq.s32.totalorder %s33, 3
      %p170 = por %p168, %p169
      %p171 = scmp.ne.s32.totalorder %s162, %s163
      %p172 = scmp.eq.s32.totalorder %s33, 0
      %p173 = por %p171, %p172
      %p174 = scmp.ne.s32.totalorder %s162, %s163
      %p175 = scmp.eq.s32.totalorder %s34, 3
      %p176 = por %p174, %p175
      %p178 = scmp.ne.s32.totalorder %s163, %s177
      %p179 = scmp.eq.s32.totalorder %s34, 0
      %p180 = por %p178, %p179
      %s182 = sadd.s32 %s181, 1
      %p185 = scmp.eq.s32.totalorder %s28, 3
      %p186 = scmp.ne.s32.totalorder %s181, %s183
      %p187 = scmp.eq.s32.totalorder %s28, 0
      %p188 = por %p186, %p187
      %p189 = scmp.ne.s32.totalorder %s181, %s183
      %p190 = scmp.eq.s32.totalorder %s33, 3
      %p191 = por %p189, %p190
      %p192 = scmp.ne.s32.totalorder %s183, %s184
      %p193 = scmp.eq.s32.totalorder %s33, 0
      %p194 = por %p192, %p193
      %p195 = scmp.ne.s32.totalorder %s183, %s184
      %p196 = scmp.eq.s32.totalorder %s34, 3
      %p197 = por %p195, %p196
      %p199 = scmp.ne.s32.totalorder %s184, %s198
      %p200 = scmp.eq.s32.totalorder %s34, 0
      %p201 = por %p199, %p200
      %s203 = sadd.s32 %s202, 1
      %p206 = scmp.eq.s32.totalorder %s28, 3
      %p207 = scmp.ne.s32.totalorder %s202, %s204
      %p208 = scmp.eq.s32.totalorder %s28, 0
      %p209 = por %p207, %p208
      %p210 = scmp.ne.s32.totalorder %s202, %s204
      %p211 = scmp.eq.s32.totalorder %s33, 3
      %p212 = por %p210, %p211
      %p213 = scmp.ne.s32.totalorder %s204, %s205
      %p214 = scmp.eq.s32.totalorder %s33, 0
      %p215 = por %p213, %p214
      %p216 = scmp.ne.s32.totalorder %s204, %s205
      %p217 = scmp.eq.s32.totalorder %s34, 3
      %p218 = por %p216, %p217
      %p220 = scmp.ne.s32.totalorder %s205, %s219
      %p221 = scmp.eq.s32.totalorder %s34, 0
      %p222 = por %p220, %p221
      %s224 = sadd.s32 %s223, 1
      %p227 = scmp.eq.s32.totalorder %s28, 3
      %p228 = scmp.ne.s32.totalorder %s223, %s225
      %p229 = scmp.eq.s32.totalorder %s28, 0
      %p230 = por %p228, %p229
      %p231 = scmp.ne.s32.totalorder %s223, %s225
      %p232 = scmp.eq.s32.totalorder %s33, 3
      %p233 = por %p231, %p232
      %p234 = scmp.ne.s32.totalorder %s225, %s226
      %p235 = scmp.eq.s32.totalorder %s33, 0
      %p236 = por %p234, %p235
      %p237 = scmp.ne.s32.totalorder %s225, %s226
      %p238 = scmp.eq.s32.totalorder %s34, 3
      %p239 = por %p237, %p238
      %p241 = scmp.ne.s32.totalorder %s226, %s240
      %p242 = scmp.eq.s32.totalorder %s34, 0
      %p243 = por %p241, %p242
      %s245 = sadd.s32 %s244, 1
      %p248 = scmp.eq.s32.totalorder %s28, 3
      %p249 = scmp.ne.s32.totalorder %s244, %s246
      %p250 = scmp.eq.s32.totalorder %s28, 0
      %p251 = por %p249, %p250
      %p252 = scmp.ne.s32.totalorder %s244, %s246
      %p253 = scmp.eq.s32.totalorder %s33, 3
      %p254 = por %p252, %p253
      %p255 = scmp.ne.s32.totalorder %s246, %s247
      %p256 = scmp.eq.s32.totalorder %s33, 0
      %p257 = por %p255, %p256
      %p258 = scmp.ne.s32.totalorder %s246, %s247
      %p259 = scmp.eq.s32.totalorder %s34, 3
      %p260 = por %p258, %p259
      %p262 = scmp.ne.s32.totalorder %s247, %s261
      %p263 = scmp.eq.s32.totalorder %s34, 0
      %p264 = por %p262, %p263
      %s266 = sadd.s32 %s265, 1
      %p269 = scmp.eq.s32.totalorder %s28, 3
      %p270 = scmp.ne.s32.totalorder %s265, %s267
      %p271 = scmp.eq.s32.totalorder %s28, 0
      %p272 = por %p270, %p271
      %p273 = scmp.ne.s32.totalorder %s265, %s267
      %p274 = scmp.eq.s32.totalorder %s33, 3
      %p275 = por %p273, %p274
      %p276 = scmp.ne.s32.totalorder %s267, %s268
      %p277 = scmp.eq.s32.totalorder %s33, 0
      %p278 = por %p276, %p277
      %p279 = scmp.ne.s32.totalorder %s267, %s268
      %p280 = scmp.eq.s32.totalorder %s34, 3
      %p281 = por %p279, %p280
      %p283 = scmp.ne.s32.totalorder %s268, %s282
      %p284 = scmp.eq.s32.totalorder %s34, 0
      %p285 = por %p283, %p284
      %s286 = ssub.s32 %s35, %s47
      %s287 = ssub.s32 %s36, %s43
      %s288 = sor.u32 %s286, %s287
      %p289 = scmp.eq.s32.totalorder %s288, 0
      %s291 = sadd.s32 %s290, 1
      %s292 = scalar_select %p289, %s290, %s291
      %p295 = pneg %p289
      %p296 = scmp.eq.s32.totalorder %s28, 3
      %p297 = por %p295, %p296
      %p298 = scmp.ne.s32.totalorder %s290, %s293
      %p299 = scmp.eq.s32.totalorder %s28, 0
      %p300 = por %p298, %p299
      %p301 = scmp.ne.s32.totalorder %s290, %s293
      %p302 = scmp.eq.s32.totalorder %s33, 3
      %p303 = por %p301, %p302
      %p304 = scmp.ne.s32.totalorder %s293, %s294
      %p305 = scmp.eq.s32.totalorder %s33, 0
      %p306 = por %p304, %p305
      %p307 = scmp.ne.s32.totalorder %s293, %s294
      %p308 = scmp.eq.s32.totalorder %s34, 3
      %p309 = por %p307, %p308
      %p311 = scmp.ne.s32.totalorder %s294, %s310
      %p312 = scmp.eq.s32.totalorder %s34, 0
      %p313 = por %p311, %p312
      %p314 = scmp.le.s32.totalorder 1, %s28
      %p315 = scmp.lt.s32.totalorder %s28, 5
      %p316 = pnand %p314, %p315
      %p317 = pneg %p316
      // Predicated region
      $region9: #{tpu_custom_call.1} parent=5 // pred_check
        _
      $region10: #{tpu_custom_call.1} parent=5 // pred_check_branch
        %319 = sbr.rel (%p316) target = $region12
      $region11: #{tpu_custom_call.1} parent=5 // pred_region
        %s320 = ssub.s32 %s28, 1
        // Predicated region
        $region13: #{tpu_custom_call.1} parent=11 // pred_check
          %p321 = pneg %p89
        $region14: #{tpu_custom_call.1} parent=11 // pred_check_branch
          %323 = sbr.rel (%p321) target = $region16
        $region15: #{tpu_custom_call.1} parent=11 // pred_region
          %s325 = ssub.s32 16, 16
          %326 = vsyncadd [#allocation13], %s325
          %s328 = sshll.u32 [#allocation12], 4
          %s329 = int_to_ptr.vmem [resolvable:$true] %s328
          %331 = dma.hbm_to_vmem [thread:$0]  %s1, 16, %s329, [#allocation13]
        $region16: #{tpu_custom_call.1} parent=11 // pred_fallthru
          _
        // Predicated region
        $region17: #{tpu_custom_call.1} parent=11 // pred_check
          %p332 = pneg %p110
        $region18: #{tpu_custom_call.1} parent=11 // pred_check_branch
          %334 = sbr.rel (%p332) target = $region20
        $region19: #{tpu_custom_call.1} parent=11 // pred_region
          %s336 = ssub.s32 256, 256
          %337 = vsyncadd [#allocation13], %s336
          %s338 = sshll.u32 [#allocation14], 4
          %s339 = int_to_ptr.vmem [resolvable:$true] %s338
          %344 = dma.hbm_to_vmem [thread:$0]  %s2, 256, %s339, [#allocation13], 64, 64, 4
        $region20: #{tpu_custom_call.1} parent=11 // pred_fallthru
          _
        // Predicated region
        $region21: #{tpu_custom_call.1} parent=11 // pred_check
          %p345 = pneg %p131
        $region22: #{tpu_custom_call.1} parent=11 // pred_check_branch
          %347 = sbr.rel (%p345) target = $region24
        $region23: #{tpu_custom_call.1} parent=11 // pred_region
          %s349 = ssub.s32 64, 64
          %350 = vsyncadd [#allocation16], %s349
          %s352 = sshll.u32 [#allocation15], 4
          %s353 = int_to_ptr.vmem [resolvable:$true] %s352
          %355 = dma.hbm_to_vmem [thread:$0]  %s3, 64, %s353, [#allocation16]
        $region24: #{tpu_custom_call.1} parent=11 // pred_fallthru
          _
        // Predicated region
        $region25: #{tpu_custom_call.1} parent=11 // pred_check
          %p356 = pneg %p152
        $region26: #{tpu_custom_call.1} parent=11 // pred_check_branch
          %358 = sbr.rel (%p356) target = $region28
        $region27: #{tpu_custom_call.1} parent=11 // pred_region
          %s360 = ssub.s32 16, 16
          %361 = vsyncadd [#allocation16], %s360
          %s363 = sshll.u32 [#allocation17], 4
          %s364 = int_to_ptr.vmem [resolvable:$true] %s363
          %366 = dma.hbm_to_vmem [thread:$0]  %s4, 16, %s364, [#allocation16]
        $region28: #{tpu_custom_call.1} parent=11 // pred_fallthru
          _
        // Predicated region
        $region29: #{tpu_custom_call.1} parent=11 // pred_check
          %p367 = pneg %p173
        $region30: #{tpu_custom_call.1} parent=11 // pred_check_branch
          %369 = sbr.rel (%p367) target = $region32
        $region31: #{tpu_custom_call.1} parent=11 // pred_region
          %s371 = ssub.s32 512, 512
          %372 = vsyncadd [#allocation19], %s371
          %s373 = sshll.u32 [#allocation18], 4
          %s374 = int_to_ptr.vmem [resolvable:$true] %s373
          %379 = dma.hbm_to_vmem [thread:$0]  %s5, 512, %s374, [#allocation19], 64, 64, 4
        $region32: #{tpu_custom_call.1} parent=11 // pred_fallthru
          _
        // Predicated region
        $region33: #{tpu_custom_call.1} parent=11 // pred_check
          %p380 = pneg %p194
        $region34: #{tpu_custom_call.1} parent=11 // pred_check_branch
          %382 = sbr.rel (%p380) target = $region36
        $region35: #{tpu_custom_call.1} parent=11 // pred_region
          %s384 = ssub.s32 64, 64
          %385 = vsyncadd [#allocation19], %s384
          %s387 = sshll.u32 [#allocation20], 4
          %s388 = int_to_ptr.vmem [resolvable:$true] %s387
          %390 = dma.hbm_to_vmem [thread:$0]  %s6, 64, %s388, [#allocation19]
        $region36: #{tpu_custom_call.1} parent=11 // pred_fallthru
          _
        // Predicated region
        $region37: #{tpu_custom_call.1} parent=11 // pred_check
          %p391 = pneg %p215
        $region38: #{tpu_custom_call.1} parent=11 // pred_check_branch
          %393 = sbr.rel (%p391) target = $region40
        $region39: #{tpu_custom_call.1} parent=11 // pred_region
          %s395 = ssub.s32 16, 16
          %396 = vsyncadd [#allocation22], %s395
          %s398 = sshll.u32 [#allocation21], 4
          %s399 = int_to_ptr.vmem [resolvable:$true] %s398
          %401 = dma.hbm_to_vmem [thread:$0]  %s7, 16, %s399, [#allocation22]
        $region40: #{tpu_custom_call.1} parent=11 // pred_fallthru
          _
        // Predicated region
        $region41: #{tpu_custom_call.1} parent=11 // pred_check
          %p402 = pneg %p236
        $region42: #{tpu_custom_call.1} parent=11 // pred_check_branch
          %404 = sbr.rel (%p402) target = $region44
        $region43: #{tpu_custom_call.1} parent=11 // pred_region
          %s406 = ssub.s32 256, 256
          %407 = vsyncadd [#allocation22], %s406
          %s408 = sshll.u32 [#allocation23], 4
          %s409 = int_to_ptr.vmem [resolvable:$true] %s408
          %414 = dma.hbm_to_vmem [thread:$0]  %s8, 256, %s409, [#allocation22], 128, 128, 8
        $region44: #{tpu_custom_call.1} parent=11 // pred_fallthru
          _
        // Predicated region
        $region45: #{tpu_custom_call.1} parent=11 // pred_check
          %p415 = pneg %p257
        $region46: #{tpu_custom_call.1} parent=11 // pred_check_branch
          %417 = sbr.rel (%p415) target = $region48
        $region47: #{tpu_custom_call.1} parent=11 // pred_region
          %s419 = ssub.s32 16, 16
          %420 = vsyncadd [#allocation25], %s419
          %s422 = sshll.u32 [#allocation24], 4
          %s423 = int_to_ptr.vmem [resolvable:$true] %s422
          %425 = dma.hbm_to_vmem [thread:$0]  %s9, 16, %s423, [#allocation25]
        $region48: #{tpu_custom_call.1} parent=11 // pred_fallthru
          _
        // Predicated region
        $region49: #{tpu_custom_call.1} parent=11 // pred_check
          %p426 = pneg %p278
        $region50: #{tpu_custom_call.1} parent=11 // pred_check_branch
          %428 = sbr.rel (%p426) target = $region52
        $region51: #{tpu_custom_call.1} parent=11 // pred_region
          %s430 = ssub.s32 512, 512
          %431 = vsyncadd [#allocation25], %s430
          %s432 = sshll.u32 [#allocation26], 4
          %s433 = int_to_ptr.vmem [resolvable:$true] %s432
          %438 = dma.hbm_to_vmem [thread:$0]  %s10, 512, %s433, [#allocation25], 64, 64, 4
        $region52: #{tpu_custom_call.1} parent=11 // pred_fallthru
          _
      $region12: #{tpu_custom_call.1} parent=5 // pred_fallthru
        _
      %p439 = scmp.lt.s32.totalorder %s28, 4
      // Predicated region
      $region53: #{tpu_custom_call.1} parent=5 // pred_check
        %p440 = pneg %p439
      $region54: #{tpu_custom_call.1} parent=5 // pred_check_branch
        %442 = sbr.rel (%p440) target = $region56
      $region55: #{tpu_custom_call.1} parent=5 // pred_region
        // Predicated region
        $region57: #{tpu_custom_call.1} parent=55 // pred_check
          %p443 = pneg %p62
        $region58: #{tpu_custom_call.1} parent=55 // pred_check_branch
          %445 = sbr.rel (%p443) target = $region60
        $region59: #{tpu_custom_call.1} parent=55 // pred_region
          %s446 = sand.u32 %s52, 1
          %s447 = scalar_lea.sflag [#allocation10], %s446
          %s448 = sand.u32 %s52, 1
          %s449 = smul.addr %s448, 16
          %s450 = scalar_lea.vmem [#allocation9], %s449
          %s451 = smul.u32 2, %s36
          %s453 = ssub.s32 256, 256
          %454 = vsyncadd %s447, %s453
          %s455 = smul.addr %s35, 4
          %s456 = sadd.s32 %s451, %s455
          %s457 = smul.addr %s456, 128
          %s458 = scalar_lea.hbm %s0, %s457
          %s459 = sshll.u32 %s450, 4
          %s460 = int_to_ptr.vmem [resolvable:$true] %s459
          %465 = dma.hbm_to_vmem [thread:$0]  %s458, 256, %s460, %s447, 128, 128, 8
        $region60: #{tpu_custom_call.1} parent=55 // pred_fallthru
          _
      $region56: #{tpu_custom_call.1} parent=5 // pred_fallthru
        _
      %p466 = scmp.le.s32.totalorder 1, %s28
      %p467 = scmp.lt.s32.totalorder %s28, 5
      %p468 = pnand %p466, %p467
      %p469 = pneg %p468
      // Predicated region
      $region61: #{tpu_custom_call.1} parent=5 // pred_check
        _
      $region62: #{tpu_custom_call.1} parent=5 // pred_check_branch
        %471 = sbr.rel (%p468) target = $region64
      $region63: #{tpu_custom_call.1} parent=5 // pred_region
        %s472 = ssub.s32 %s28, 1
        %s473 = sand.u32 %s55, 1
        %s474 = scalar_lea.sflag [#allocation10], %s473
        %s475 = sand.u32 %s55, 1
        %s476 = smul.addr %s475, 16
        %s477 = scalar_lea.vmem [#allocation9], %s476
        // Predicated region
        $region65: #{tpu_custom_call.1} parent=63 // pred_check
          %p478 = pneg %p68
        $region66: #{tpu_custom_call.1} parent=63 // pred_check_branch
          %480 = sbr.rel (%p478) target = $region68
        $region67: #{tpu_custom_call.1} parent=63 // pred_region
          %481 = dma.done %s474, 256
        $region68: #{tpu_custom_call.1} parent=63 // pred_fallthru
          _
        // Predicated region
        $region69: #{tpu_custom_call.1} parent=63 // pred_check
          %p482 = pneg %p89
        $region70: #{tpu_custom_call.1} parent=63 // pred_check_branch
          %484 = sbr.rel (%p482) target = $region72
        $region71: #{tpu_custom_call.1} parent=63 // pred_region
          %485 = dma.done [#allocation13], 16
        $region72: #{tpu_custom_call.1} parent=63 // pred_fallthru
          _
        // Predicated region
        $region73: #{tpu_custom_call.1} parent=63 // pred_check
          %p486 = pneg %p110
        $region74: #{tpu_custom_call.1} parent=63 // pred_check_branch
          %488 = sbr.rel (%p486) target = $region76
        $region75: #{tpu_custom_call.1} parent=63 // pred_region
          %489 = dma.done [#allocation13], 256
        $region76: #{tpu_custom_call.1} parent=63 // pred_fallthru
          _
        // Predicated region
        $region77: #{tpu_custom_call.1} parent=63 // pred_check
          %p490 = pneg %p131
        $region78: #{tpu_custom_call.1} parent=63 // pred_check_branch
          %492 = sbr.rel (%p490) target = $region80
        $region79: #{tpu_custom_call.1} parent=63 // pred_region
          %493 = dma.done [#allocation16], 64
        $region80: #{tpu_custom_call.1} parent=63 // pred_fallthru
          _
        // Predicated region
        $region81: #{tpu_custom_call.1} parent=63 // pred_check
          %p494 = pneg %p152
        $region82: #{tpu_custom_call.1} parent=63 // pred_check_branch
          %496 = sbr.rel (%p494) target = $region84
        $region83: #{tpu_custom_call.1} parent=63 // pred_region
          %497 = dma.done [#allocation16], 16
        $region84: #{tpu_custom_call.1} parent=63 // pred_fallthru
          _
        // Predicated region
        $region85: #{tpu_custom_call.1} parent=63 // pred_check
          %p498 = pneg %p173
        $region86: #{tpu_custom_call.1} parent=63 // pred_check_branch
          %500 = sbr.rel (%p498) target = $region88
        $region87: #{tpu_custom_call.1} parent=63 // pred_region
          %501 = dma.done [#allocation19], 512
        $region88: #{tpu_custom_call.1} parent=63 // pred_fallthru
          _
        // Predicated region
        $region89: #{tpu_custom_call.1} parent=63 // pred_check
          %p502 = pneg %p194
        $region90: #{tpu_custom_call.1} parent=63 // pred_check_branch
          %504 = sbr.rel (%p502) target = $region92
        $region91: #{tpu_custom_call.1} parent=63 // pred_region
          %505 = dma.done [#allocation19], 64
        $region92: #{tpu_custom_call.1} parent=63 // pred_fallthru
          _
        // Predicated region
        $region93: #{tpu_custom_call.1} parent=63 // pred_check
          %p506 = pneg %p215
        $region94: #{tpu_custom_call.1} parent=63 // pred_check_branch
          %508 = sbr.rel (%p506) target = $region96
        $region95: #{tpu_custom_call.1} parent=63 // pred_region
          %509 = dma.done [#allocation22], 16
        $region96: #{tpu_custom_call.1} parent=63 // pred_fallthru
          _
        // Predicated region
        $region97: #{tpu_custom_call.1} parent=63 // pred_check
          %p510 = pneg %p236
        $region98: #{tpu_custom_call.1} parent=63 // pred_check_branch
          %512 = sbr.rel (%p510) target = $region100
        $region99: #{tpu_custom_call.1} parent=63 // pred_region
          %513 = dma.done [#allocation22], 256
        $region100: #{tpu_custom_call.1} parent=63 // pred_fallthru
          _
        // Predicated region
        $region101: #{tpu_custom_call.1} parent=63 // pred_check
          %p514 = pneg %p257
        $region102: #{tpu_custom_call.1} parent=63 // pred_check_branch
          %516 = sbr.rel (%p514) target = $region104
        $region103: #{tpu_custom_call.1} parent=63 // pred_region
          %517 = dma.done [#allocation25], 16
        $region104: #{tpu_custom_call.1} parent=63 // pred_fallthru
          _
        // Predicated region
        $region105: #{tpu_custom_call.1} parent=63 // pred_check
          %p518 = pneg %p278
        $region106: #{tpu_custom_call.1} parent=63 // pred_check_branch
          %520 = sbr.rel (%p518) target = $region108
        $region107: #{tpu_custom_call.1} parent=63 // pred_region
          %521 = dma.done [#allocation25], 512
        $region108: #{tpu_custom_call.1} parent=63 // pred_fallthru
          _
        %s522 = sand.u32 %s55, 1
        %s523 = scalar_lea.sflag [#allocation10], %s522
        %s524 = sand.u32 %s55, 1
        %s525 = smul.addr %s524, 16
        %s526 = scalar_lea.vmem [#allocation9], %s525
        %p527 = pneg %p68
        %p528 = pneg %p65
        %p529 = pneg %p89
        %p530 = pneg %p86
        %p531 = pneg %p110
        %p532 = pneg %p107
        %p533 = pneg %p131
        %p534 = pneg %p128
        %p535 = pneg %p152
        %p536 = pneg %p149
        %p537 = pneg %p173
        %p538 = pneg %p170
        %p539 = pneg %p194
        %p540 = pneg %p191
        %p541 = pneg %p215
        %p542 = pneg %p212
        %p543 = pneg %p236
        %p544 = pneg %p233
        %p545 = pneg %p257
        %p546 = pneg %p254
        %p547 = pneg %p278
        %p548 = pneg %p275
        %p549 = pneg %p306
        %p550 = pneg %p303
        %s551 = sand.u32 %s293, 1
        %s552 = scalar_lea.sflag [#allocation11], %s551
        %s553 = sand.u32 %s293, 1
        %s554 = smul.addr %s553, 16
        %s555 = scalar_lea.vmem [#allocation27], %s554
        %s556 = smul.u32 2, %s38
        %s557 = smul.u32 2, %s38
        %p559 = scmp.eq.s32.totalorder %s38, 0
        // Predicated region
        $region109: #{tpu_custom_call.1} parent=63 // pred_check
          %p560 = pneg %p559
        $region110: #{tpu_custom_call.1} parent=63 // pred_check_branch
          %562 = sbr.rel (%p560) target = $region112
        $region111: #{tpu_custom_call.1} parent=63 // pred_region
          %vm563 = vcmask 523264
          %564 = vst.msk [vmem:[#allocation2] sm:$0xff] %vm563, 0.0
          %565 = vst.msk [vmem:[#allocation2 + $0x8] sm:$0xff] %vm563, 0.0
          %566 = vst.msk [vmem:[#allocation3] sm:$0xff] %vm563, 0.0
          %567 = vst.msk [vmem:[#allocation3 + $0x8] sm:$0xff] %vm563, 0.0
        $region112: #{tpu_custom_call.1} parent=63 // pred_fallthru
          _
        %v568 = vld [vmem:[%s477] sm:$0xff]
        %v569 = vld [vmem:[%s477 + $0x8] sm:$0xff]
        %v570 = vmul.f32 %v568, %v568
        %v571 = vmul.f32 %v569, %v569
        %vm572 = vcmask 261120
        %v573 = vsel %vm572, %v570, 0.0
        %574 = vadd.xlane.f32.xlu0 %v573
        %v575 = vpop.xlane.xlu0 %574
        %v576 = vsel %vm572, %v571, 0.0
        %577 = vadd.xlane.f32.xlu0 %v576
        %v578 = vpop.xlane.xlu0 %577
        %v579 = vrcp.pop 32.0
        %v580 = vmul.f32 %v575, %v579
        %v581 = vmul.f32 %v578, %v579
        %v582 = vadd.f32 %v580, 1e-05
        %v583 = vadd.f32 %v581, 1e-05
        %v584 = vrsqrt.pop %v582
        %v585 = vrsqrt.pop %v583
        %v586 = vmul.f32 %v568, %v584
        %v587 = vmul.f32 %v569, %v585
        %v588 = vld [vmem:[#allocation12] sm:$0x1]
        %v590 = vlaneseq
        %v591 = vshrl.u32 %v590, 7
        %v592 = vsub.s32 0, %v591
        %v593 = vrot.slane %v588, %v592
        %v595 = vmul.f32 %v586, %v593
        %v596 = vmul.f32 %v587, %v593
        %v597 = vpack.c.bf16 %v596, %v595
        %v598 = vld [vmem:[#allocation14] sm:$0xf]
        %v599 = vld [vmem:[#allocation14 + $0x4] sm:$0xf]
        %v600 = vld [vmem:[#allocation14 + $0x8] sm:$0xf]
        %v601 = vld [vmem:[#allocation14 + $0xc] sm:$0xf]
        %v606 = vunpack.c.l.b16 %v598
        %v607 = vunpack.c.l.b16 %v599
        %v608 = vunpack.c.l.b16 %v600
        %v609 = vunpack.c.l.b16 %v601
        %v610 = vpack.c.b16 %v607, %v606
        %v611 = vpack.c.b16 %v609, %v608
        %v615 = vsel %vm572, %v597, 0
        %617 = vmatprep.subr.bf16.mxu0 0
        %618 = vmatpush1.bf16.msra.mxu0 %v610
        %619 = vmatprep.subr.bf16.mxu0 0
        %620 = vmatpush1.bf16.msra.mxu0 %v611
        %621 = vmatprep.subr.bf16.mxu0 0
        %622 = vmatpush1.bf16.msra.mxu0 0
        %623 = vmatprep.subr.bf16.mxu0 0
        %624 = vmatpush1.bf16.msra.mxu0 0
        %625 = vmatprep.subr.bf16.mxu0 0
        %626 = vmatpush1.bf16.msra.mxu0 0
        %627 = vmatprep.subr.bf16.mxu0 0
        %628 = vmatpush1.bf16.msra.mxu0 0
        %629 = vmatprep.subr.bf16.mxu0 0
        %630 = vmatpush1.bf16.msra.mxu0 0
        %631 = vmatprep.subr.bf16.mxu0 0
        %632 = vmatpush1.bf16.msra.mxu0 0
        %633 = vmatprep.subr.bf16.mxu0 0
        %634 = vmatpush1.bf16.msra.mxu0 0
        %635 = vmatprep.subr.bf16.mxu0 0
        %636 = vmatpush1.bf16.msra.mxu0 0
        %637 = vmatprep.subr.bf16.mxu0 0
        %638 = vmatpush1.bf16.msra.mxu0 0
        %639 = vmatprep.subr.bf16.mxu0 0
        %640 = vmatpush1.bf16.msra.mxu0 0
        %641 = vmatprep.subr.bf16.mxu0 0
        %642 = vmatpush1.bf16.msra.mxu0 0
        %643 = vmatprep.subr.bf16.mxu0 0
        %644 = vmatpush1.bf16.msra.mxu0 0
        %645 = vmatprep.subr.bf16.mxu0 0
        %646 = vmatpush1.bf16.msra.mxu0 0
        %647 = vmatprep.subr.bf16.mxu0 0
        %648 = vmatpush1.bf16.msra.mxu0 0
        %649 = vmatprep.mubr.bf16.mxu0 0
        %650 = vmatmul.mubr.bf16.gmra.mrb[0].mxu0 %v615
        %v651 = vpop.f32.mrb[0].mxu0
        %v652 = vadd.f32 0.0, %v651
        %v653 = vpop.f32.mrb[0].mxu0
        %v654 = vpop.f32.mrb[0].mxu0
        %v655 = vadd.f32 0.0, %v654
        %v656 = vpop.f32.mrb[0].mxu0
        %657 = vdwg.mxu0
        %v658 = vld [vmem:[#allocation2] sm:$0xff]
        %v659 = vld [vmem:[#allocation2 + $0x8] sm:$0xff]
        %v660 = vlaneseq
        %v661 = vshrl.u32 %v660, 7
        %v662 = vadd.s32 %v661, 8
        %v663 = vld [vmem:[#allocation15 + $0x3] sm:$0x1]
        %v664 = vlaneseq
        %v665 = vshrl.u32 %v664, 7
        %v666 = vsub.s32 0, %v665
        %v667 = vrot.slane %v663, %v666
        %v668 = vmul.f32 %v652, %v667
        %v669 = vmul.f32 %v655, %v667
        %v670 = vld [vmem:[#allocation17] sm:$0x1]
        %v672 = vlaneseq
        %v673 = vshrl.u32 %v672, 7
        %v674 = vsub.s32 0, %v673
        %v675 = vrot.slane %v670, %v674
        %v677 = vadd.f32 %v668, %v675
        %v678 = vadd.f32 %v669, %v675
        %v679 = vrot.slane %v652, 7
        %v680 = vrot.slane %v655, 7
        %vm681 = vcmp.lt.s32.totalorder %v661, 1
        %v682 = vsel %vm681, %v679, %v680
        %v683 = vsel %vm681, %v680, %v679
        %v684 = vrot.slane %v658, 7
        %v685 = vrot.slane %v659, 7
        %v686 = vsel %vm681, %v684, %v685
        %v687 = vsel %vm681, %v685, %v684
        %vm688 = vcmp.lt.s32.totalorder %v662, 1
        %v689 = vsel %vm681, 1, 0
        %v690 = vsel %vm688, 1, 0
        %vm691 = vcmp.eq.s32.totalorder %v689, 1
        %vm692 = vcmp.eq.s32.totalorder %v690, 1
        %v693 = vsel %vm691, %v687, %v683
        %v694 = vsel %vm692, %v686, %v682
        %v695 = vld [vmem:[#allocation15 + $0x2] sm:$0x1]
        %v696 = vlaneseq
        %v697 = vshrl.u32 %v696, 7
        %v698 = vsub.s32 0, %v697
        %v699 = vrot.slane %v695, %v698
        %v700 = vmul.f32 %v693, %v699
        %v701 = vmul.f32 %v694, %v699
        %v702 = vadd.f32 %v677, %v700
        %v703 = vadd.f32 %v678, %v701
        %v704 = vrot.slane %v652, 6
        %v705 = vrot.slane %v655, 6
        %vm706 = vcmp.lt.s32.totalorder %v661, 2
        %v707 = vsel %vm706, %v704, %v705
        %v708 = vsel %vm706, %v705, %v704
        %v709 = vrot.slane %v658, 6
        %v710 = vrot.slane %v659, 6
        %v711 = vsel %vm706, %v709, %v710
        %v712 = vsel %vm706, %v710, %v709
        %vm713 = vcmp.lt.s32.totalorder %v662, 2
        %v714 = vsel %vm706, 1, 0
        %v715 = vsel %vm713, 1, 0
        %vm716 = vcmp.eq.s32.totalorder %v714, 1
        %vm717 = vcmp.eq.s32.totalorder %v715, 1
        %v718 = vsel %vm716, %v712, %v708
        %v719 = vsel %vm717, %v711, %v707
        %v720 = vld [vmem:[#allocation15 + $0x1] sm:$0x1]
        %v721 = vlaneseq
        %v722 = vshrl.u32 %v721, 7
        %v723 = vsub.s32 0, %v722
        %v724 = vrot.slane %v720, %v723
        %v725 = vmul.f32 %v718, %v724
        %v726 = vmul.f32 %v719, %v724
        %v727 = vadd.f32 %v702, %v725
        %v728 = vadd.f32 %v703, %v726
        %v729 = vrot.slane %v652, 5
        %v730 = vrot.slane %v655, 5
        %vm731 = vcmp.lt.s32.totalorder %v661, 3
        %v732 = vsel %vm731, %v729, %v730
        %v733 = vsel %vm731, %v730, %v729
        %v734 = vrot.slane %v658, 5
        %v735 = vrot.slane %v659, 5
        %v736 = vsel %vm731, %v734, %v735
        %v737 = vsel %vm731, %v735, %v734
        %vm738 = vcmp.lt.s32.totalorder %v662, 3
        %v739 = vsel %vm731, 1, 0
        %v740 = vsel %vm738, 1, 0
        %vm741 = vcmp.eq.s32.totalorder %v739, 1
        %vm742 = vcmp.eq.s32.totalorder %v740, 1
        %v743 = vsel %vm741, %v737, %v733
        %v744 = vsel %vm742, %v736, %v732
        %v745 = vld [vmem:[#allocation15] sm:$0x1]
        %v746 = vlaneseq
        %v747 = vshrl.u32 %v746, 7
        %v748 = vsub.s32 0, %v747
        %v749 = vrot.slane %v745, %v748
        %v750 = vmul.f32 %v743, %v749
        %v751 = vmul.f32 %v744, %v749
        %v752 = vadd.f32 %v727, %v750
        %v753 = vadd.f32 %v728, %v751
        %vm754 = vcmask 523264
        %755 = vst.msk [vmem:[#allocation2] sm:$0xff] %vm754, %v652
        %756 = vst.msk [vmem:[#allocation2 + $0x8] sm:$0xff] %vm754, %v655
        %v757 = vxor.u32 %v752, 2147483648
        %v758 = vxor.u32 %v753, 2147483648
        %v759 = vmul.f32 %v757, 1.442695
        %v760 = vpow.pop %v759
        %v761 = vmul.f32 %v758, 1.442695
        %v762 = vpow.pop %v761
        %v763 = vadd.f32 %v760, 1.0
        %v764 = vadd.f32 %v762, 1.0
        %v765 = vrcp.pop %v763
        %v766 = vmul.f32 1.0, %v765
        %v767 = vrcp.pop %v764
        %v768 = vmul.f32 1.0, %v767
        %v769 = vmul.f32 %v752, %v766
        %v770 = vmul.f32 %v753, %v768
        %v771 = vpack.c.bf16 %v770, %v769
        %v772 = vld [vmem:[#allocation18] sm:$0xf]
        %v773 = vld [vmem:[#allocation18 + $0x4] sm:$0xf]
        %v774 = vld [vmem:[#allocation18 + $0x8] sm:$0xf]
        %v775 = vld [vmem:[#allocation18 + $0xc] sm:$0xf]
        %v776 = vld [vmem:[#allocation18 + $0x10] sm:$0xf]
        %v777 = vld [vmem:[#allocation18 + $0x14] sm:$0xf]
        %v778 = vld [vmem:[#allocation18 + $0x18] sm:$0xf]
        %v779 = vld [vmem:[#allocation18 + $0x1c] sm:$0xf]
        %v788 = vunpack.c.l.b16 %v772
        %v789 = vunpack.c.l.b16 %v773
        %v790 = vunpack.c.l.b16 %v774
        %v791 = vunpack.c.l.b16 %v775
        %v792 = vunpack.c.l.b16 %v776
        %v793 = vunpack.c.l.b16 %v777
        %v794 = vunpack.c.l.b16 %v778
        %v795 = vunpack.c.l.b16 %v779
        %v796 = vpack.c.b16 %v789, %v788
        %v797 = vpack.c.b16 %v791, %v790
        %v798 = vpack.c.b16 %v793, %v792
        %v799 = vpack.c.b16 %v795, %v794
        %v805 = vsel %vm754, %v771, 0
        %807 = vmatprep.subr.bf16.mxu0 0
        %808 = vmatpush1.bf16.msra.mxu0 %v796
        %809 = vmatprep.subr.bf16.mxu0 0
        %810 = vmatpush1.bf16.msra.mxu0 %v797
        %811 = vmatprep.subr.bf16.mxu0 0
        %812 = vmatpush1.bf16.msra.mxu0 %v798
        %813 = vmatprep.subr.bf16.mxu0 0
        %814 = vmatpush1.bf16.msra.mxu0 %v799
        %815 = vmatprep.subr.bf16.mxu0 0
        %816 = vmatpush1.bf16.msra.mxu0 0
        %817 = vmatprep.subr.bf16.mxu0 0
        %818 = vmatpush1.bf16.msra.mxu0 0
        %819 = vmatprep.subr.bf16.mxu0 0
        %820 = vmatpush1.bf16.msra.mxu0 0
        %821 = vmatprep.subr.bf16.mxu0 0
        %822 = vmatpush1.bf16.msra.mxu0 0
        %823 = vmatprep.subr.bf16.mxu0 0
        %824 = vmatpush1.bf16.msra.mxu0 0
        %825 = vmatprep.subr.bf16.mxu0 0
        %826 = vmatpush1.bf16.msra.mxu0 0
        %827 = vmatprep.subr.bf16.mxu0 0
        %828 = vmatpush1.bf16.msra.mxu0 0
        %829 = vmatprep.subr.bf16.mxu0 0
        %830 = vmatpush1.bf16.msra.mxu0 0
        %831 = vmatprep.subr.bf16.mxu0 0
        %832 = vmatpush1.bf16.msra.mxu0 0
        %833 = vmatprep.subr.bf16.mxu0 0
        %834 = vmatpush1.bf16.msra.mxu0 0
        %835 = vmatprep.subr.bf16.mxu0 0
        %836 = vmatpush1.bf16.msra.mxu0 0
        %837 = vmatprep.subr.bf16.mxu0 0
        %838 = vmatpush1.bf16.msra.mxu0 0
        %839 = vmatprep.mubr.bf16.mxu0 0
        %840 = vmatmul.mubr.bf16.gmra.mrb[0].mxu0 %v805
        %v841 = vpop.f32.mrb[0].mxu0
        %v842 = vadd.f32 0.0, %v841
        %v843 = vpop.f32.mrb[0].mxu0
        %v844 = vpop.f32.mrb[0].mxu0
        %v845 = vadd.f32 0.0, %v844
        %v846 = vpop.f32.mrb[0].mxu0
        %847 = vdwg.mxu0
        %v848 = vpack.c.bf16 %v845, %v842
        %v849 = vld [vmem:[#allocation20] sm:$0xf]
        %v850 = vld [vmem:[#allocation21] sm:$0x1]
        %v852 = vlaneseq
        %v853 = vshrl.u32 %v852, 7
        %v854 = vsub.s32 0, %v853
        %v855 = vrot.slane %v850, %v854
        %vm857 = vcmask 64512
        %v859 = vsel %vm857, %v848, 0
        %vm861 = vcmask 1043456
        %v863 = vsel %vm861, %v849, 0
        %865 = vmatprep.subr.bf16.mxu0 0
        %866 = vmatpush1.bf16.msra.mxu0 %v863
        %867 = vmatprep.subr.bf16.mxu0 0
        %868 = vmatpush1.bf16.msra.mxu0 0
        %869 = vmatprep.subr.bf16.mxu0 0
        %870 = vmatpush1.bf16.msra.mxu0 0
        %871 = vmatprep.subr.bf16.mxu0 0
        %872 = vmatpush1.bf16.msra.mxu0 0
        %873 = vmatprep.subr.bf16.mxu0 0
        %874 = vmatpush1.bf16.msra.mxu0 0
        %875 = vmatprep.subr.bf16.mxu0 0
        %876 = vmatpush1.bf16.msra.mxu0 0
        %877 = vmatprep.subr.bf16.mxu0 0
        %878 = vmatpush1.bf16.msra.mxu0 0
        %879 = vmatprep.subr.bf16.mxu0 0
        %880 = vmatpush1.bf16.msra.mxu0 0
        %881 = vmatprep.subr.bf16.mxu0 0
        %882 = vmatpush1.bf16.msra.mxu0 0
        %883 = vmatprep.subr.bf16.mxu0 0
        %884 = vmatpush1.bf16.msra.mxu0 0
        %885 = vmatprep.subr.bf16.mxu0 0
        %886 = vmatpush1.bf16.msra.mxu0 0
        %887 = vmatprep.subr.bf16.mxu0 0
        %888 = vmatpush1.bf16.msra.mxu0 0
        %889 = vmatprep.subr.bf16.mxu0 0
        %890 = vmatpush1.bf16.msra.mxu0 0
        %891 = vmatprep.subr.bf16.mxu0 0
        %892 = vmatpush1.bf16.msra.mxu0 0
        %893 = vmatprep.subr.bf16.mxu0 0
        %894 = vmatpush1.bf16.msra.mxu0 0
        %895 = vmatprep.subr.bf16.mxu0 0
        %896 = vmatpush1.bf16.msra.mxu0 0
        %897 = vmatprep.mubr.bf16.mxu0 0
        %898 = vmatmul.mubr.bf16.gmra.mrb[0].mxu0 %v859
        %v899 = vpop.f32.mrb[0].mxu0
        %v900 = vadd.f32 %v855, %v899
        %v901 = vpop.f32.mrb[0].mxu0
        %v902 = vpop.f32.mrb[0].mxu0
        %v903 = vadd.f32 %v855, %v902
        %v904 = vpop.f32.mrb[0].mxu0
        %905 = vdwg.mxu0
        %vm906 = vcmp.gt.f32.partialorder %v900, 20.0
        %vm907 = vcmp.gt.f32.partialorder %v903, 20.0
        %v908 = vmin.f32 %v900, 20.0
        %v909 = vmin.f32 %v903, 20.0
        %v910 = vmul.f32 %v908, 1.442695
        %v911 = vpow.pop %v910
        %v912 = vmul.f32 %v909, 1.442695
        %v913 = vpow.pop %v912
        %v914 = vadd.f32 %v911, 1.0
        %v915 = vlog2.pop %v914
        %v916 = vmul.f32 %v915, 0.6931472
        %v917 = vmul.f32 -0.5, %v911
        %v918 = vadd.f32 %v917, 1.0
        %v919 = vmul.f32 %v918, %v911
        %v920 = vand.u32 2147483647, %v911
        %vm921 = vcmp.lt.f32.partialorder %v920, 0.0004427343
        %v922 = vsel %vm921, %v919, %v916
        %v923 = vadd.f32 %v913, 1.0
        %v924 = vlog2.pop %v923
        %v925 = vmul.f32 %v924, 0.6931472
        %v926 = vmul.f32 -0.5, %v913
        %v927 = vadd.f32 %v926, 1.0
        %v928 = vmul.f32 %v927, %v913
        %v929 = vand.u32 2147483647, %v913
        %vm930 = vcmp.lt.f32.partialorder %v929, 0.0004427343
        %v931 = vsel %vm930, %v928, %v925
        %v932 = vsel %vm906, %v900, %v922
        %v933 = vsel %vm907, %v903, %v931
        %934 = vst.msk [vmem:[#allocation4] sm:$0xff] %vm754, %v932
        %935 = vst.msk [vmem:[#allocation4 + $0x8] sm:$0xff] %vm754, %v933
        %936 = vst.msk [vmem:[#allocation5] sm:$0xff] %vm754, %v769
        %937 = vst.msk [vmem:[#allocation5 + $0x8] sm:$0xff] %vm754, %v770
        %940 = vrot.lane.b32.xlu0 %v842, 120
        %v941 = vpop.permute.xlu0 %940
        %942 = vrot.lane.b32.xlu0 %v845, 120
        %v943 = vpop.permute.xlu0 %942
        %vm946 = vcmask 130048
        %947 = vst.msk [vmem:[#allocation6] sm:$0xff] %vm946, %v941
        %948 = vst.msk [vmem:[#allocation6 + $0x8] sm:$0xff] %vm946, %v943
        %949 = vrot.lane.b32.xlu0 %v842, 104
        %v950 = vpop.permute.xlu0 %949
        %951 = vrot.lane.b32.xlu0 %v845, 104
        %v952 = vpop.permute.xlu0 %951
        %955 = vst.msk [vmem:[#allocation7] sm:$0xff] %vm946, %v950
        %956 = vst.msk [vmem:[#allocation7 + $0x8] sm:$0xff] %vm946, %v952
        %v957 = vld [vmem:[#allocation23] sm:$0xff]
        %v958 = vld [vmem:[#allocation23 + $0x8] sm:$0xff]
        %v959 = vld [vmem:[#allocation3] sm:$0xff]
        %v960 = vld [vmem:[#allocation3 + $0x8] sm:$0xff]
        loop: start=0, step=1, limit=2
        $region113: #{tpu_custom_call.1} parent=63 // loop_pre_header
          _
        $region114: #{tpu_custom_call.1} parent=63 // loop_header
          %s962 = sphi 0, %s966
          %p963 = scmp.ge.s32.totalorder %s962, 2
          %v967 = vphi %v959, %v1506
          %v968 = vphi %v960, %v1507
        $region115: #{tpu_custom_call.1} parent=63 // loop_header_branch
          %965 = sbr.rel (%p963) target = $region119
        $region116: #{tpu_custom_call.1} parent=63 // loop_body
          %s969 = smul.u32 %s962, 8
          %s970 = scalar_lea.vmem [#allocation4], %s969
          %v971 = vld [vmem:[%s970] sm:$0xff]
          %s972 = scalar_lea.vmem [#allocation5], %s969
          %v973 = vld [vmem:[%s972] sm:$0xff]
          %s974 = scalar_lea.vmem [#allocation6], %s969
          %v975 = vld [vmem:[%s974] sm:$0xff]
          %s976 = scalar_lea.vmem [#allocation7], %s969
          %v977 = vld [vmem:[%s976] sm:$0xff]
          %v979 = vcombine.high %v971, %v971
          %v981 = vunpack.c.l.s4 1966171168
          %v982 = vunpack.c.0.s8 %v981
          %v983 = vlaneseq
          %v984 = vshrl.u32 %v983, 7
          %v985 = vsub.s32 %v982, %v984
          %v986 = vrot.slane %v971, %v985
          %v988 = vunpack.c.l.s4 1966171168
          %v989 = vunpack.c.0.s8 %v988
          %v990 = vlaneseq
          %v991 = vshrl.u32 %v990, 7
          %v992 = vsub.s32 %v989, %v991
          %v993 = vrot.slane %v979, %v992
          %v994 = vcombine.high %v986, %v986
          %v995 = vcombine.high %v993, %v993
          %v997 = vunpack.c.l.s4 1966171168
          %v998 = vunpack.c.0.s8 %v997
          %v999 = vlaneseq
          %v1000 = vshrl.u32 %v999, 7
          %v1001 = vsub.s32 %v998, %v1000
          %v1002 = vrot.slane %v986, %v1001
          %v1004 = vunpack.c.l.s4 1966171168
          %v1005 = vunpack.c.0.s8 %v1004
          %v1006 = vlaneseq
          %v1007 = vshrl.u32 %v1006, 7
          %v1008 = vsub.s32 %v1005, %v1007
          %v1009 = vrot.slane %v993, %v1008
          %v1011 = vunpack.c.l.s4 1966171168
          %v1012 = vunpack.c.0.s8 %v1011
          %v1013 = vlaneseq
          %v1014 = vshrl.u32 %v1013, 7
          %v1015 = vsub.s32 %v1012, %v1014
          %v1016 = vrot.slane %v994, %v1015
          %v1018 = vunpack.c.l.s4 1966171168
          %v1019 = vunpack.c.0.s8 %v1018
          %v1020 = vlaneseq
          %v1021 = vshrl.u32 %v1020, 7
          %v1022 = vsub.s32 %v1019, %v1021
          %v1023 = vrot.slane %v995, %v1022
          %v1024 = vcombine.high %v1002, %v1002
          %v1025 = vcombine.high %v1009, %v1009
          %v1026 = vcombine.high %v1016, %v1016
          %v1027 = vcombine.high %v1023, %v1023
          %v1028 = vlaneseq
          %v1029 = vshrl.u32 %v1028, 7
          %v1030 = vsub.s32 0, %v1029
          %v1031 = vrot.slane %v1002, %v1030
          %v1032 = vlaneseq
          %v1033 = vshrl.u32 %v1032, 7
          %v1034 = vsub.s32 0, %v1033
          %v1035 = vrot.slane %v1016, %v1034
          %v1036 = vlaneseq
          %v1037 = vshrl.u32 %v1036, 7
          %v1038 = vsub.s32 0, %v1037
          %v1039 = vrot.slane %v1024, %v1038
          %v1040 = vlaneseq
          %v1041 = vshrl.u32 %v1040, 7
          %v1042 = vsub.s32 0, %v1041
          %v1043 = vrot.slane %v1026, %v1042
          %v1044 = vlaneseq
          %v1045 = vshrl.u32 %v1044, 7
          %v1046 = vsub.s32 0, %v1045
          %v1047 = vrot.slane %v1009, %v1046
          %v1048 = vlaneseq
          %v1049 = vshrl.u32 %v1048, 7
          %v1050 = vsub.s32 0, %v1049
          %v1051 = vrot.slane %v1023, %v1050
          %v1052 = vlaneseq
          %v1053 = vshrl.u32 %v1052, 7
          %v1054 = vsub.s32 0, %v1053
          %v1055 = vrot.slane %v1025, %v1054
          %v1056 = vlaneseq
          %v1057 = vshrl.u32 %v1056, 7
          %v1058 = vsub.s32 0, %v1057
          %v1059 = vrot.slane %v1027, %v1058
          %v1068 = vmul.f32 %v1031, %v957
          %v1069 = vmul.f32 %v1031, %v958
          %v1070 = vmul.f32 %v1035, %v957
          %v1071 = vmul.f32 %v1035, %v958
          %v1072 = vmul.f32 %v1039, %v957
          %v1073 = vmul.f32 %v1039, %v958
          %v1074 = vmul.f32 %v1043, %v957
          %v1075 = vmul.f32 %v1043, %v958
          %v1076 = vmul.f32 %v1047, %v957
          %v1077 = vmul.f32 %v1047, %v958
          %v1078 = vmul.f32 %v1051, %v957
          %v1079 = vmul.f32 %v1051, %v958
          %v1080 = vmul.f32 %v1055, %v957
          %v1081 = vmul.f32 %v1055, %v958
          %v1082 = vmul.f32 %v1059, %v957
          %v1083 = vmul.f32 %v1059, %v958
          %v1084 = vmul.f32 %v1068, 1.442695
          %v1085 = vpow.pop %v1084
          %v1086 = vmul.f32 %v1069, 1.442695
          %v1087 = vpow.pop %v1086
          %v1088 = vmul.f32 %v1070, 1.442695
          %v1089 = vpow.pop %v1088
          %v1090 = vmul.f32 %v1071, 1.442695
          %v1091 = vpow.pop %v1090
          %v1092 = vmul.f32 %v1072, 1.442695
          %v1093 = vpow.pop %v1092
          %v1094 = vmul.f32 %v1073, 1.442695
          %v1095 = vpow.pop %v1094
          %v1096 = vmul.f32 %v1074, 1.442695
          %v1097 = vpow.pop %v1096
          %v1098 = vmul.f32 %v1075, 1.442695
          %v1099 = vpow.pop %v1098
          %v1100 = vmul.f32 %v1076, 1.442695
          %v1101 = vpow.pop %v1100
          %v1102 = vmul.f32 %v1077, 1.442695
          %v1103 = vpow.pop %v1102
          %v1104 = vmul.f32 %v1078, 1.442695
          %v1105 = vpow.pop %v1104
          %v1106 = vmul.f32 %v1079, 1.442695
          %v1107 = vpow.pop %v1106
          %v1108 = vmul.f32 %v1080, 1.442695
          %v1109 = vpow.pop %v1108
          %v1110 = vmul.f32 %v1081, 1.442695
          %v1111 = vpow.pop %v1110
          %v1112 = vmul.f32 %v1082, 1.442695
          %v1113 = vpow.pop %v1112
          %v1114 = vmul.f32 %v1083, 1.442695
          %v1115 = vpow.pop %v1114
          %v1116 = vmul.f32 %v971, %v973
          %v1118 = vcombine.high %v1116, %v1116
          %v1120 = vunpack.c.l.s4 1966171168
          %v1121 = vunpack.c.0.s8 %v1120
          %v1122 = vlaneseq
          %v1123 = vshrl.u32 %v1122, 7
          %v1124 = vsub.s32 %v1121, %v1123
          %v1125 = vrot.slane %v1116, %v1124
          %v1127 = vunpack.c.l.s4 1966171168
          %v1128 = vunpack.c.0.s8 %v1127
          %v1129 = vlaneseq
          %v1130 = vshrl.u32 %v1129, 7
          %v1131 = vsub.s32 %v1128, %v1130
          %v1132 = vrot.slane %v1118, %v1131
          %v1133 = vcombine.high %v1125, %v1125
          %v1134 = vcombine.high %v1132, %v1132
          %v1136 = vunpack.c.l.s4 1966171168
          %v1137 = vunpack.c.0.s8 %v1136
          %v1138 = vlaneseq
          %v1139 = vshrl.u32 %v1138, 7
          %v1140 = vsub.s32 %v1137, %v1139
          %v1141 = vrot.slane %v1125, %v1140
          %v1143 = vunpack.c.l.s4 1966171168
          %v1144 = vunpack.c.0.s8 %v1143
          %v1145 = vlaneseq
          %v1146 = vshrl.u32 %v1145, 7
          %v1147 = vsub.s32 %v1144, %v1146
          %v1148 = vrot.slane %v1132, %v1147
          %v1150 = vunpack.c.l.s4 1966171168
          %v1151 = vunpack.c.0.s8 %v1150
          %v1152 = vlaneseq
          %v1153 = vshrl.u32 %v1152, 7
          %v1154 = vsub.s32 %v1151, %v1153
          %v1155 = vrot.slane %v1133, %v1154
          %v1157 = vunpack.c.l.s4 1966171168
          %v1158 = vunpack.c.0.s8 %v1157
          %v1159 = vlaneseq
          %v1160 = vshrl.u32 %v1159, 7
          %v1161 = vsub.s32 %v1158, %v1160
          %v1162 = vrot.slane %v1134, %v1161
          %v1163 = vcombine.high %v1141, %v1141
          %v1164 = vcombine.high %v1148, %v1148
          %v1165 = vcombine.high %v1155, %v1155
          %v1166 = vcombine.high %v1162, %v1162
          %v1167 = vlaneseq
          %v1168 = vshrl.u32 %v1167, 7
          %v1169 = vsub.s32 0, %v1168
          %v1170 = vrot.slane %v975, %v1169
          %1172 = vbcast.lane.b32.xlu0 %v1170, 256
          %v1173 = vpop.permute.xlu0 %1172
          %s1175 = sor.u32 256, 8
          %1176 = vbcast.lane.b32.xlu0 %v1170, %s1175
          %v1177 = vpop.permute.xlu0 %1176
          %v1178 = vlaneseq
          %v1179 = vshrl.u32 %v1178, 7
          %v1180 = vsub.s32 1, %v1179
          %v1181 = vrot.slane %v975, %v1180
          %1183 = vbcast.lane.b32.xlu0 %v1181, 256
          %v1184 = vpop.permute.xlu0 %1183
          %s1186 = sor.u32 256, 8
          %1187 = vbcast.lane.b32.xlu0 %v1181, %s1186
          %v1188 = vpop.permute.xlu0 %1187
          %v1189 = vlaneseq
          %v1190 = vshrl.u32 %v1189, 7
          %v1191 = vsub.s32 2, %v1190
          %v1192 = vrot.slane %v975, %v1191
          %1194 = vbcast.lane.b32.xlu0 %v1192, 256
          %v1195 = vpop.permute.xlu0 %1194
          %s1197 = sor.u32 256, 8
          %1198 = vbcast.lane.b32.xlu0 %v1192, %s1197
          %v1199 = vpop.permute.xlu0 %1198
          %v1200 = vlaneseq
          %v1201 = vshrl.u32 %v1200, 7
          %v1202 = vsub.s32 3, %v1201
          %v1203 = vrot.slane %v975, %v1202
          %1205 = vbcast.lane.b32.xlu0 %v1203, 256
          %v1206 = vpop.permute.xlu0 %1205
          %s1208 = sor.u32 256, 8
          %1209 = vbcast.lane.b32.xlu0 %v1203, %s1208
          %v1210 = vpop.permute.xlu0 %1209
          %v1211 = vlaneseq
          %v1212 = vshrl.u32 %v1211, 7
          %v1213 = vsub.s32 4, %v1212
          %v1214 = vrot.slane %v975, %v1213
          %1216 = vbcast.lane.b32.xlu0 %v1214, 256
          %v1217 = vpop.permute.xlu0 %1216
          %s1219 = sor.u32 256, 8
          %1220 = vbcast.lane.b32.xlu0 %v1214, %s1219
          %v1221 = vpop.permute.xlu0 %1220
          %v1222 = vlaneseq
          %v1223 = vshrl.u32 %v1222, 7
          %v1224 = vsub.s32 5, %v1223
          %v1225 = vrot.slane %v975, %v1224
          %1227 = vbcast.lane.b32.xlu0 %v1225, 256
          %v1228 = vpop.permute.xlu0 %1227
          %s1230 = sor.u32 256, 8
          %1231 = vbcast.lane.b32.xlu0 %v1225, %s1230
          %v1232 = vpop.permute.xlu0 %1231
          %v1233 = vlaneseq
          %v1234 = vshrl.u32 %v1233, 7
          %v1235 = vsub.s32 6, %v1234
          %v1236 = vrot.slane %v975, %v1235
          %1238 = vbcast.lane.b32.xlu0 %v1236, 256
          %v1239 = vpop.permute.xlu0 %1238
          %s1241 = sor.u32 256, 8
          %1242 = vbcast.lane.b32.xlu0 %v1236, %s1241
          %v1243 = vpop.permute.xlu0 %1242
          %v1244 = vlaneseq
          %v1245 = vshrl.u32 %v1244, 7
          %v1246 = vsub.s32 7, %v1245
          %v1247 = vrot.slane %v975, %v1246
          %1249 = vbcast.lane.b32.xlu0 %v1247, 256
          %v1250 = vpop.permute.xlu0 %1249
          %s1252 = sor.u32 256, 8
          %1253 = vbcast.lane.b32.xlu0 %v1247, %s1252
          %v1254 = vpop.permute.xlu0 %1253
          %v1255 = vlaneseq
          %v1256 = vshrl.u32 %v1255, 7
          %v1257 = vsub.s32 0, %v1256
          %v1258 = vrot.slane %v1141, %v1257
          %v1259 = vlaneseq
          %v1260 = vshrl.u32 %v1259, 7
          %v1261 = vsub.s32 0, %v1260
          %v1262 = vrot.slane %v1155, %v1261
          %v1263 = vlaneseq
          %v1264 = vshrl.u32 %v1263, 7
          %v1265 = vsub.s32 0, %v1264
          %v1266 = vrot.slane %v1163, %v1265
          %v1267 = vlaneseq
          %v1268 = vshrl.u32 %v1267, 7
          %v1269 = vsub.s32 0, %v1268
          %v1270 = vrot.slane %v1165, %v1269
          %v1271 = vlaneseq
          %v1272 = vshrl.u32 %v1271, 7
          %v1273 = vsub.s32 0, %v1272
          %v1274 = vrot.slane %v1148, %v1273
          %v1275 = vlaneseq
          %v1276 = vshrl.u32 %v1275, 7
          %v1277 = vsub.s32 0, %v1276
          %v1278 = vrot.slane %v1162, %v1277
          %v1279 = vlaneseq
          %v1280 = vshrl.u32 %v1279, 7
          %v1281 = vsub.s32 0, %v1280
          %v1282 = vrot.slane %v1164, %v1281
          %v1283 = vlaneseq
          %v1284 = vshrl.u32 %v1283, 7
          %v1285 = vsub.s32 0, %v1284
          %v1286 = vrot.slane %v1166, %v1285
          %v1295 = vmul.f32 %v1258, %v1173
          %v1296 = vmul.f32 %v1258, %v1177
          %v1297 = vmul.f32 %v1262, %v1184
          %v1298 = vmul.f32 %v1262, %v1188
          %v1299 = vmul.f32 %v1266, %v1195
          %v1300 = vmul.f32 %v1266, %v1199
          %v1301 = vmul.f32 %v1270, %v1206
          %v1302 = vmul.f32 %v1270, %v1210
          %v1303 = vmul.f32 %v1274, %v1217
          %v1304 = vmul.f32 %v1274, %v1221
          %v1305 = vmul.f32 %v1278, %v1228
          %v1306 = vmul.f32 %v1278, %v1232
          %v1307 = vmul.f32 %v1282, %v1239
          %v1308 = vmul.f32 %v1282, %v1243
          %v1309 = vmul.f32 %v1286, %v1250
          %v1310 = vmul.f32 %v1286, %v1254
          %v1311 = vlaneseq
          %v1312 = vshrl.u32 %v1311, 7
          %v1313 = vsub.s32 0, %v1312
          %v1314 = vrot.slane %v977, %v1313
          %1316 = vbcast.lane.b32.xlu0 %v1314, 256
          %v1317 = vpop.permute.xlu0 %1316
          %s1319 = sor.u32 256, 8
          %1320 = vbcast.lane.b32.xlu0 %v1314, %s1319
          %v1321 = vpop.permute.xlu0 %1320
          %v1322 = vlaneseq
          %v1323 = vshrl.u32 %v1322, 7
          %v1324 = vsub.s32 1, %v1323
          %v1325 = vrot.slane %v977, %v1324
          %1327 = vbcast.lane.b32.xlu0 %v1325, 256
          %v1328 = vpop.permute.xlu0 %1327
          %s1330 = sor.u32 256, 8
          %1331 = vbcast.lane.b32.xlu0 %v1325, %s1330
          %v1332 = vpop.permute.xlu0 %1331
          %v1333 = vlaneseq
          %v1334 = vshrl.u32 %v1333, 7
          %v1335 = vsub.s32 2, %v1334
          %v1336 = vrot.slane %v977, %v1335
          %1338 = vbcast.lane.b32.xlu0 %v1336, 256
          %v1339 = vpop.permute.xlu0 %1338
          %s1341 = sor.u32 256, 8
          %1342 = vbcast.lane.b32.xlu0 %v1336, %s1341
          %v1343 = vpop.permute.xlu0 %1342
          %v1344 = vlaneseq
          %v1345 = vshrl.u32 %v1344, 7
          %v1346 = vsub.s32 3, %v1345
          %v1347 = vrot.slane %v977, %v1346
          %1349 = vbcast.lane.b32.xlu0 %v1347, 256
          %v1350 = vpop.permute.xlu0 %1349
          %s1352 = sor.u32 256, 8
          %1353 = vbcast.lane.b32.xlu0 %v1347, %s1352
          %v1354 = vpop.permute.xlu0 %1353
          %v1355 = vlaneseq
          %v1356 = vshrl.u32 %v1355, 7
          %v1357 = vsub.s32 4, %v1356
          %v1358 = vrot.slane %v977, %v1357
          %1360 = vbcast.lane.b32.xlu0 %v1358, 256
          %v1361 = vpop.permute.xlu0 %1360
          %s1363 = sor.u32 256, 8
          %1364 = vbcast.lane.b32.xlu0 %v1358, %s1363
          %v1365 = vpop.permute.xlu0 %1364
          %v1366 = vlaneseq
          %v1367 = vshrl.u32 %v1366, 7
          %v1368 = vsub.s32 5, %v1367
          %v1369 = vrot.slane %v977, %v1368
          %1371 = vbcast.lane.b32.xlu0 %v1369, 256
          %v1372 = vpop.permute.xlu0 %1371
          %s1374 = sor.u32 256, 8
          %1375 = vbcast.lane.b32.xlu0 %v1369, %s1374
          %v1376 = vpop.permute.xlu0 %1375
          %v1377 = vlaneseq
          %v1378 = vshrl.u32 %v1377, 7
          %v1379 = vsub.s32 6, %v1378
          %v1380 = vrot.slane %v977, %v1379
          %1382 = vbcast.lane.b32.xlu0 %v1380, 256
          %v1383 = vpop.permute.xlu0 %1382
          %s1385 = sor.u32 256, 8
          %1386 = vbcast.lane.b32.xlu0 %v1380, %s1385
          %v1387 = vpop.permute.xlu0 %1386
          %v1388 = vlaneseq
          %v1389 = vshrl.u32 %v1388, 7
          %v1390 = vsub.s32 7, %v1389
          %v1391 = vrot.slane %v977, %v1390
          %1393 = vbcast.lane.b32.xlu0 %v1391, 256
          %v1394 = vpop.permute.xlu0 %1393
          %s1396 = sor.u32 256, 8
          %1397 = vbcast.lane.b32.xlu0 %v1391, %s1396
          %v1398 = vpop.permute.xlu0 %1397
          %v1399 = vmul.f32 %v1085, %v967
          %v1400 = vmul.f32 %v1087, %v968
          %v1401 = vadd.f32 %v1399, %v1295
          %v1402 = vadd.f32 %v1400, %v1296
          %v1403 = vmul.f32 %v1401, %v1317
          %v1404 = vmul.f32 %v1402, %v1321
          %v1405 = vsel %vm754, %v1403, 0.0
          %v1406 = vsel %vm754, %v1404, 0.0
          %v1407 = vadd.f32 %v1405, %v1406
          %v1408 = vrot.slane %v1407, 4
          %v1409 = vadd.f32 %v1407, %v1408
          %v1410 = vrot.slane %v1409, 2
          %v1411 = vadd.f32 %v1409, %v1410
          %v1412 = vrot.slane %v1411, 1
          %v1413 = vadd.f32 %v1411, %v1412
          %v1414 = vmul.f32 %v1089, %v1401
          %v1415 = vmul.f32 %v1091, %v1402
          %v1416 = vadd.f32 %v1414, %v1297
          %v1417 = vadd.f32 %v1415, %v1298
          %v1418 = vmul.f32 %v1416, %v1328
          %v1419 = vmul.f32 %v1417, %v1332
          %v1420 = vsel %vm754, %v1418, 0.0
          %v1421 = vsel %vm754, %v1419, 0.0
          %v1422 = vadd.f32 %v1420, %v1421
          %v1423 = vrot.slane %v1422, 4
          %v1424 = vadd.f32 %v1422, %v1423
          %v1425 = vrot.slane %v1424, 2
          %v1426 = vadd.f32 %v1424, %v1425
          %v1427 = vrot.slane %v1426, 1
          %v1428 = vadd.f32 %v1426, %v1427
          %v1429 = vmul.f32 %v1093, %v1416
          %v1430 = vmul.f32 %v1095, %v1417
          %v1431 = vadd.f32 %v1429, %v1299
          %v1432 = vadd.f32 %v1430, %v1300
          %v1433 = vmul.f32 %v1431, %v1339
          %v1434 = vmul.f32 %v1432, %v1343
          %v1435 = vsel %vm754, %v1433, 0.0
          %v1436 = vsel %vm754, %v1434, 0.0
          %v1437 = vadd.f32 %v1435, %v1436
          %v1438 = vrot.slane %v1437, 4
          %v1439 = vadd.f32 %v1437, %v1438
          %v1440 = vrot.slane %v1439, 2
          %v1441 = vadd.f32 %v1439, %v1440
          %v1442 = vrot.slane %v1441, 1
          %v1443 = vadd.f32 %v1441, %v1442
          %v1444 = vmul.f32 %v1097, %v1431
          %v1445 = vmul.f32 %v1099, %v1432
          %v1446 = vadd.f32 %v1444, %v1301
          %v1447 = vadd.f32 %v1445, %v1302
          %v1448 = vmul.f32 %v1446, %v1350
          %v1449 = vmul.f32 %v1447, %v1354
          %v1450 = vsel %vm754, %v1448, 0.0
          %v1451 = vsel %vm754, %v1449, 0.0
          %v1452 = vadd.f32 %v1450, %v1451
          %v1453 = vrot.slane %v1452, 4
          %v1454 = vadd.f32 %v1452, %v1453
          %v1455 = vrot.slane %v1454, 2
          %v1456 = vadd.f32 %v1454, %v1455
          %v1457 = vrot.slane %v1456, 1
          %v1458 = vadd.f32 %v1456, %v1457
          %v1459 = vmul.f32 %v1101, %v1446
          %v1460 = vmul.f32 %v1103, %v1447
          %v1461 = vadd.f32 %v1459, %v1303
          %v1462 = vadd.f32 %v1460, %v1304
          %v1463 = vmul.f32 %v1461, %v1361
          %v1464 = vmul.f32 %v1462, %v1365
          %v1465 = vsel %vm754, %v1463, 0.0
          %v1466 = vsel %vm754, %v1464, 0.0
          %v1467 = vadd.f32 %v1465, %v1466
          %v1468 = vrot.slane %v1467, 4
          %v1469 = vadd.f32 %v1467, %v1468
          %v1470 = vrot.slane %v1469, 2
          %v1471 = vadd.f32 %v1469, %v1470
          %v1472 = vrot.slane %v1471, 1
          %v1473 = vadd.f32 %v1471, %v1472
          %v1474 = vmul.f32 %v1105, %v1461
          %v1475 = vmul.f32 %v1107, %v1462
          %v1476 = vadd.f32 %v1474, %v1305
          %v1477 = vadd.f32 %v1475, %v1306
          %v1478 = vmul.f32 %v1476, %v1372
          %v1479 = vmul.f32 %v1477, %v1376
          %v1480 = vsel %vm754, %v1478, 0.0
          %v1481 = vsel %vm754, %v1479, 0.0
          %v1482 = vadd.f32 %v1480, %v1481
          %v1483 = vrot.slane %v1482, 4
          %v1484 = vadd.f32 %v1482, %v1483
          %v1485 = vrot.slane %v1484, 2
          %v1486 = vadd.f32 %v1484, %v1485
          %v1487 = vrot.slane %v1486, 1
          %v1488 = vadd.f32 %v1486, %v1487
          %v1489 = vmul.f32 %v1109, %v1476
          %v1490 = vmul.f32 %v1111, %v1477
          %v1491 = vadd.f32 %v1489, %v1307
          %v1492 = vadd.f32 %v1490, %v1308
          %v1493 = vmul.f32 %v1491, %v1383
          %v1494 = vmul.f32 %v1492, %v1387
          %v1495 = vsel %vm754, %v1493, 0.0
          %v1496 = vsel %vm754, %v1494, 0.0
          %v1497 = vadd.f32 %v1495, %v1496
          %v1498 = vrot.slane %v1497, 4
          %v1499 = vadd.f32 %v1497, %v1498
          %v1500 = vrot.slane %v1499, 2
          %v1501 = vadd.f32 %v1499, %v1500
          %v1502 = vrot.slane %v1501, 1
          %v1503 = vadd.f32 %v1501, %v1502
          %v1504 = vmul.f32 %v1113, %v1491
          %v1505 = vmul.f32 %v1115, %v1492
          %v1506 = vadd.f32 %v1504, %v1309
          %v1507 = vadd.f32 %v1505, %v1310
          %v1508 = vmul.f32 %v1506, %v1394
          %v1509 = vmul.f32 %v1507, %v1398
          %v1510 = vsel %vm754, %v1508, 0.0
          %v1511 = vsel %vm754, %v1509, 0.0
          %v1512 = vadd.f32 %v1510, %v1511
          %v1513 = vrot.slane %v1512, 4
          %v1514 = vadd.f32 %v1512, %v1513
          %v1515 = vrot.slane %v1514, 2
          %v1516 = vadd.f32 %v1514, %v1515
          %v1517 = vrot.slane %v1516, 1
          %v1518 = vadd.f32 %v1516, %v1517
          %vm1519 = vcmask 1040384
          %v1520 = vsel %vm1519, %v1413, %v1428
          %vm1521 = vcmask 1041408
          %v1522 = vsel %vm1521, %v1520, %v1443
          %vm1523 = vcmask 1042432
          %v1524 = vsel %vm1523, %v1522, %v1458
          %v1525 = vsel %vm861, %v1524, %v1473
          %vm1526 = vcmask 1044480
          %v1527 = vsel %vm1526, %v1525, %v1488
          %vm1528 = vcmask 1045504
          %v1529 = vsel %vm1528, %v1527, %v1503
          %vm1530 = vcmask 1046528
          %v1531 = vsel %vm1530, %v1529, %v1518
          %s1532 = scalar_lea.vmem [#allocation8], %s969
          %1533 = vst.msk [vmem:[%s1532] sm:$0xff] %vm754, %v1531
        $region117: #{tpu_custom_call.1} parent=63 // loop_footer
          %s966 = sadd.s32 1, %s962
        $region118: #{tpu_custom_call.1} parent=63 // loop_footer_branch
          %961 = sbr.rel target = $region114
        $region119: #{tpu_custom_call.1} parent=63 // loop_exit
          _
        %1534 = vst.msk [vmem:[#allocation3] sm:$0xff] %vm754, %v967
        %1535 = vst.msk [vmem:[#allocation3 + $0x8] sm:$0xff] %vm754, %v968
        %v1536 = vld [vmem:[#allocation8] sm:$0xff]
        %v1537 = vld [vmem:[#allocation8 + $0x8] sm:$0xff]
        %v1538 = vld [vmem:[#allocation24] sm:$0x1]
        %v1540 = vlaneseq
        %v1541 = vshrl.u32 %v1540, 7
        %v1542 = vsub.s32 0, %v1541
        %v1543 = vrot.slane %v1538, %v1542
        %v1545 = vmul.f32 %v1543, %v769
        %v1546 = vmul.f32 %v1543, %v770
        %v1547 = vadd.f32 %v1536, %v1545
        %v1548 = vadd.f32 %v1537, %v1546
        %v1549 = vxor.u32 %v652, 2147483648
        %v1550 = vxor.u32 %v655, 2147483648
        %v1551 = vmul.f32 %v1549, 1.442695
        %v1552 = vpow.pop %v1551
        %v1553 = vmul.f32 %v1550, 1.442695
        %v1554 = vpow.pop %v1553
        %v1555 = vadd.f32 %v1552, 1.0
        %v1556 = vadd.f32 %v1554, 1.0
        %v1557 = vrcp.pop %v1555
        %v1558 = vmul.f32 1.0, %v1557
        %v1559 = vrcp.pop %v1556
        %v1560 = vmul.f32 1.0, %v1559
        %v1561 = vmul.f32 %v652, %v1558
        %v1562 = vmul.f32 %v655, %v1560
        %1565 = vrot.lane.b32.xlu0 %v1561, 64
        %v1566 = vpop.permute.xlu0 %1565
        %1567 = vrot.lane.b32.xlu0 %v1562, 64
        %v1568 = vpop.permute.xlu0 %1567
        %v1571 = vmul.f32 %v1547, %v1566
        %v1572 = vmul.f32 %v1548, %v1568
        %v1573 = vpack.c.bf16 %v1572, %v1571
        %v1574 = vld [vmem:[#allocation26] sm:$0xf]
        %v1575 = vld [vmem:[#allocation26 + $0x4] sm:$0xf]
        %v1576 = vld [vmem:[#allocation26 + $0x8] sm:$0xf]
        %v1577 = vld [vmem:[#allocation26 + $0xc] sm:$0xf]
        %v1578 = vld [vmem:[#allocation26 + $0x10] sm:$0xf]
        %v1579 = vld [vmem:[#allocation26 + $0x14] sm:$0xf]
        %v1580 = vld [vmem:[#allocation26 + $0x18] sm:$0xf]
        %v1581 = vld [vmem:[#allocation26 + $0x1c] sm:$0xf]
        %v1590 = vunpack.c.l.b16 %v1574
        %v1591 = vunpack.c.l.b16 %v1575
        %v1592 = vunpack.c.l.b16 %v1576
        %v1593 = vunpack.c.l.b16 %v1577
        %v1594 = vunpack.c.l.b16 %v1578
        %v1595 = vunpack.c.l.b16 %v1579
        %v1596 = vunpack.c.l.b16 %v1580
        %v1597 = vunpack.c.l.b16 %v1581
        %v1598 = vpack.c.b16 %v1591, %v1590
        %v1599 = vpack.c.b16 %v1593, %v1592
        %v1600 = vpack.c.b16 %v1595, %v1594
        %v1601 = vpack.c.b16 %v1597, %v1596
        %v1607 = vsel %vm754, %v1573, 0
        %1609 = vmatprep.subr.bf16.mxu0 0
        %1610 = vmatpush1.bf16.msra.mxu0 %v1598
        %1611 = vmatprep.subr.bf16.mxu0 0
        %1612 = vmatpush1.bf16.msra.mxu0 %v1599
        %1613 = vmatprep.subr.bf16.mxu0 0
        %1614 = vmatpush1.bf16.msra.mxu0 %v1600
        %1615 = vmatprep.subr.bf16.mxu0 0
        %1616 = vmatpush1.bf16.msra.mxu0 %v1601
        %1617 = vmatprep.subr.bf16.mxu0 0
        %1618 = vmatpush1.bf16.msra.mxu0 0
        %1619 = vmatprep.subr.bf16.mxu0 0
        %1620 = vmatpush1.bf16.msra.mxu0 0
        %1621 = vmatprep.subr.bf16.mxu0 0
        %1622 = vmatpush1.bf16.msra.mxu0 0
        %1623 = vmatprep.subr.bf16.mxu0 0
        %1624 = vmatpush1.bf16.msra.mxu0 0
        %1625 = vmatprep.subr.bf16.mxu0 0
        %1626 = vmatpush1.bf16.msra.mxu0 0
        %1627 = vmatprep.subr.bf16.mxu0 0
        %1628 = vmatpush1.bf16.msra.mxu0 0
        %1629 = vmatprep.subr.bf16.mxu0 0
        %1630 = vmatpush1.bf16.msra.mxu0 0
        %1631 = vmatprep.subr.bf16.mxu0 0
        %1632 = vmatpush1.bf16.msra.mxu0 0
        %1633 = vmatprep.subr.bf16.mxu0 0
        %1634 = vmatpush1.bf16.msra.mxu0 0
        %1635 = vmatprep.subr.bf16.mxu0 0
        %1636 = vmatpush1.bf16.msra.mxu0 0
        %1637 = vmatprep.subr.bf16.mxu0 0
        %1638 = vmatpush1.bf16.msra.mxu0 0
        %1639 = vmatprep.subr.bf16.mxu0 0
        %1640 = vmatpush1.bf16.msra.mxu0 0
        %1641 = vmatprep.mubr.bf16.mxu0 0
        %1642 = vmatmul.mubr.bf16.gmra.mrb[0].mxu0 %v1607
        %v1643 = vpop.f32.mrb[0].mxu0
        %v1644 = vadd.f32 0.0, %v1643
        %v1645 = vpop.f32.mrb[0].mxu0
        %v1646 = vpop.f32.mrb[0].mxu0
        %v1647 = vadd.f32 0.0, %v1646
        %v1648 = vpop.f32.mrb[0].mxu0
        %1649 = vdwg.mxu0
        %v1650 = vadd.f32 %v568, %v1644
        %v1651 = vadd.f32 %v569, %v1647
        %1652 = vst.msk [vmem:[%s555] sm:$0xff] %vm572, %v1650
        %1653 = vst.msk [vmem:[%s555 + $0x8] sm:$0xff] %vm572, %v1651
        %s1654 = sand.u32 %s293, 1
        %s1655 = scalar_lea.sflag [#allocation11], %s1654
        %s1656 = sand.u32 %s293, 1
        %s1657 = smul.addr %s1656, 16
        %s1658 = scalar_lea.vmem [#allocation27], %s1657
        // Predicated region
        $region120: #{tpu_custom_call.1} parent=63 // pred_check
          %p1659 = pneg %p303
        $region121: #{tpu_custom_call.1} parent=63 // pred_check_branch
          %1661 = sbr.rel (%p1659) target = $region123
        $region122: #{tpu_custom_call.1} parent=63 // pred_region
          %s1662 = smul.u32 2, %s38
          %s1664 = ssub.s32 256, 256
          %1665 = vsyncadd %s1655, %s1664
          %s1666 = smul.addr %s37, 4
          %s1667 = sadd.s32 %s1662, %s1666
          %s1668 = smul.addr %s1667, 128
          %s1669 = scalar_lea.hbm %s11, %s1668
          %s1670 = sshll.u32 %s1658, 4
          %s1671 = int_to_ptr.vmem [resolvable:$true] %s1670
          %1676 = dma.vmem_to_hbm [thread:$0]  %s1671, 256, %s1669, %s1655, 128, 128, 8
        $region123: #{tpu_custom_call.1} parent=63 // pred_fallthru
          _
      $region64: #{tpu_custom_call.1} parent=5 // pred_fallthru
        _
      %p1677 = scmp.le.s32.totalorder 2, %s28
      // Predicated region
      $region124: #{tpu_custom_call.1} parent=5 // pred_check
        %p1678 = pneg %p1677
      $region125: #{tpu_custom_call.1} parent=5 // pred_check_branch
        %1680 = sbr.rel (%p1678) target = $region127
      $region126: #{tpu_custom_call.1} parent=5 // pred_region
        %s1681 = ssub.s32 %s28, 2
        // Predicated region
        $region128: #{tpu_custom_call.1} parent=126 // pred_check
          %p1682 = pneg %p309
        $region129: #{tpu_custom_call.1} parent=126 // pred_check_branch
          %1684 = sbr.rel (%p1682) target = $region131
        $region130: #{tpu_custom_call.1} parent=126 // pred_region
          %s1685 = sand.u32 %s294, 1
          %s1686 = scalar_lea.sflag [#allocation11], %s1685
          %s1687 = sand.u32 %s294, 1
          %s1688 = smul.addr %s1687, 16
          %s1689 = scalar_lea.vmem [#allocation27], %s1688
          %1690 = dma.done %s1686, 256
        $region131: #{tpu_custom_call.1} parent=126 // pred_fallthru
          _
      $region127: #{tpu_custom_call.1} parent=5 // pred_fallthru
        _
    $region6: #{tpu_custom_call.1} parent=1 // loop_footer
      %s32 = sadd.s32 1, %s28
    $region7: #{tpu_custom_call.1} parent=1 // loop_footer_branch
      %27 = sbr.rel target = $region3
    $region8: #{tpu_custom_call.1} parent=1 // loop_exit
      _
    %1691 = vsyncpa [#allocation10], 1
    %s1692 = scalar_lea.sflag [#allocation10], 1
    %1693 = vsyncpa %s1692, 1
    %1694 = vsyncpa [#allocation13], 1
    %1695 = vsyncpa [#allocation16], 1
    %1696 = vsyncpa [#allocation19], 1
    %1697 = vsyncpa [#allocation22], 1
    %1698 = vsyncpa [#allocation25], 1
    %1699 = vsyncpa [#allocation11], 1
    %s1700 = scalar_lea.sflag [#allocation11], 1
    %1701 = vsyncpa %s1700, 1

</llo_original>
